<compile_context>
chip_gen: v6e
topology: v6e:2x2x1
jax: 0.10.0
libtpu: 0.0.40
codegen_flags: <defaults>
</compile_context>

<pallas_src>
import functools

import numpy as np
import jax
import jax.numpy as jnp
from jax.experimental import pallas as pl
from jax.experimental.pallas import tpu as pltpu

_BN_EPS = 1e-5


# -----------------------------------------------------------------------------
# Host-side constant builders (prep time only, never inside the kernel).
# Activation layout everywhere: 2-D (NB*H, W*C) — rows = stacked image rows,
# lanes = interleaved (x, channel).
# -----------------------------------------------------------------------------
def _band_matrices(w, W, dil):
    """Fold the 3 x-taps + x zero-padding + Cin->Cout into (3, W*Cin, W*Cout)."""
    Cin, Cout = int(w.shape[2]), int(w.shape[3])
    sel = np.zeros((3, W, W), np.float32)              # [kx, x_in, x_out]
    for kx in range(3):
        off = (kx - 1) * dil
        for xo in range(W):
            xi = xo + off
            if 0 <= xi < W:
                sel[kx, xi, xo] = 1.0
    m = jnp.einsum("kio,ykcd->yicod", jnp.asarray(sel), w)   # (3,W,Cin,W,Cout)
    return m.reshape(3, W * Cin, W * Cout)


def _pool_matrices(H, W, C):
    """AvgPool2d(2,2,ceil_mode=True) as a row matrix (Ho,H) and lane matrix."""
    Ho, Wo = -(-H // 2), -(-W // 2)
    R = np.zeros((Ho, H), np.float32)
    for o in range(Ho):
        rows = [r for r in (2 * o, 2 * o + 1) if r < H]
        for r in rows:
            R[o, r] = 1.0 / len(rows)
    L = np.zeros((W * C, Wo * C), np.float32)
    for o in range(Wo):
        cols = [x for x in (2 * o, 2 * o + 1) if x < W]
        for x in cols:
            for c in range(C):
                L[x * C + c, o * C + c] = 1.0 / len(cols)
    return jnp.asarray(R), jnp.asarray(L), Ho, Wo


def _upsample_matrices(Hi, Wi, Ho, Wo, C):
    """F.interpolate(bilinear, align_corners=False) as row + lane matrices."""
    def axis(n_in, n_out):
        U = np.zeros((n_out, n_in), np.float32)
        scale = n_in / n_out
        for o in range(n_out):
            s = max((o + 0.5) * scale - 0.5, 0.0)
            i0 = min(int(np.floor(s)), n_in - 1)
            i1 = min(i0 + 1, n_in - 1)
            f = s - i0
            U[o, i0] += 1.0 - f
            U[o, i1] += f
        return U
    UH = axis(Hi, Ho)                                   # (Ho, Hi)
    uw = axis(Wi, Wo)                                   # (Wo, Wi)
    UW = np.zeros((Wi * C, Wo * C), np.float32)
    for o in range(Wo):
        for i in range(Wi):
            if uw[o, i] != 0.0:
                for c in range(C):
                    UW[i * C + c, o * C + c] = uw[o, i]
    return jnp.asarray(UH), jnp.asarray(UW)


# -----------------------------------------------------------------------------
# Deterministic synthetic parameters (inference-mode BN folded into scale/bias).
# -----------------------------------------------------------------------------
def _init_rebnconv_params(key, cin, cout):
    k = jax.random.split(key, 6)
    w = (0.2 * jax.random.normal(k[0], (3, 3, cin, cout))).astype(jnp.float32)
    b_conv = (0.1 * jax.random.normal(k[1], (cout,))).astype(jnp.float32)
    gamma = (1.0 + 0.1 * jax.random.normal(k[2], (cout,))).astype(jnp.float32)
    beta = (0.1 * jax.random.normal(k[3], (cout,))).astype(jnp.float32)
    mean = (0.1 * jax.random.normal(k[4], (cout,))).astype(jnp.float32)
    var = (1.0 + 0.1 * jnp.abs(jax.random.normal(k[5], (cout,)))).astype(jnp.float32)
    scale = gamma / jnp.sqrt(var + _BN_EPS)
    bias = beta + (b_conv - mean) * scale
    return w, scale, bias


def init_rsu5_params(key, in_ch, mid_ch, out_ch):
    layers = [
        ("in", in_ch, out_ch), ("c1", out_ch, mid_ch),
        ("c2", mid_ch, mid_ch), ("c3", mid_ch, mid_ch),
        ("c4", mid_ch, mid_ch), ("c5", mid_ch, mid_ch),
        ("c4d", 2 * mid_ch, mid_ch), ("c3d", 2 * mid_ch, mid_ch),
        ("c2d", 2 * mid_ch, mid_ch), ("c1d", 2 * mid_ch, out_ch),
    ]
    params = {}
    for i, (name, ci, co) in enumerate(layers):
        params[name] = _init_rebnconv_params(jax.random.fold_in(key, i), ci, co)
    # NOTE: RSU5.__init__ builds self.fc (FC) but forward never uses it -> omitted.
    return params


def prepare_rsu5_consts(params, H, W, n_per_block=1):
    """Bake weights/BN/pool/upsample into the few constants the kernel reads."""
    mid = int(params["c1"][0].shape[3])
    H0, W0 = H, W
    R1, L1, H1, W1 = _pool_matrices(H0, W0, mid)
    R2, L2, H2, W2 = _pool_matrices(H1, W1, mid)
    R3, L3, H3, W3 = _pool_matrices(H2, W2, mid)
    UH4, UW4 = _upsample_matrices(H3, W3, H2, W2, mid)
    UH3, UW3 = _upsample_matrices(H2, W2, H1, W1, mid)
    UH2, UW2 = _upsample_matrices(H1, W1, H0, W0, mid)

    def stage(name, W_out, H_stage, dil, parts):
        """One conv as a single (K+1, W_out*Cout) matrix (last row = bias).

        parts: [(weight_slice (3,3,Cin_s,Cout), lane_fold_matrix or None)], in
        the exact source order the kernel lane-concatenates for this conv.
        """
        _, scale, bias = params[name]
        part_bands = []
        for (w_part, L) in parts:
            band3 = _band_matrices(w_part, W_out, dil)          # (3, lanes_in, lanes_out)
            if L is not None:                                   # fold pool/upsample lane matrix
                band3 = jnp.einsum("ab,ybc->yac", L, band3)
            part_bands.append(band3)
        blocks = []
        for ky in range(3):
            if abs((ky - 1) * dil) >= H_stage:
                continue                      # this row-tap reads only zero padding
            for pb in part_bands:
                blocks.append(pb[ky])
        M = jnp.concatenate(blocks, axis=0)
        M = M * jnp.tile(scale, W_out)[None, :]                 # fold BN scale
        bias_row = jnp.tile(bias, W_out)[None, :]               # folded conv+BN bias
        return jnp.concatenate([M, bias_row], axis=0).astype(jnp.bfloat16)

    def halves(name):
        w = params[name][0]
        half = int(w.shape[2]) // 2
        return w[:, :, :half, :], w[:, :, half:, :]

    w4a, w4b = halves("c4d")
    w3a, w3b = halves("c3d")
    w2a, w2b = halves("c2d")
    w1a, w1b = halves("c1d")

    conv = {
        "in":  stage("in",  W0, H0, 1, [(params["in"][0], None)]),
        "c1":  stage("c1",  W0, H0, 1, [(params["c1"][0], None)]),
        "c2":  stage("c2",  W1, H1, 1, [(params["c2"][0], L1)]),
        "c3":  stage("c3",  W2, H2, 1, [(params["c3"][0], L2)]),
        "c4":  stage("c4",  W3, H3, 1, [(params["c4"][0], L3)]),
        "c5":  stage("c5",  W3, H3, 2, [(params["c5"][0], None)]),
        "c4d": stage("c4d", W3, H3, 1, [(w4a, None), (w4b, None)]),
        "c3d": stage("c3d", W2, H2, 1, [(w3a, UW4), (w3b, None)]),
        "c2d": stage("c2d", W1, H1, 1, [(w2a, UW3), (w2b, None)]),
        "c1d": stage("c1d", W0, H0, 1, [(w1a, UW2), (w1b, None)]),
    }

    def kb(R):  # block-diagonal across the images stacked along rows
        R = jnp.asarray(R)
        if n_per_block > 1:
            R = jnp.kron(jnp.eye(n_per_block, dtype=R.dtype), R)
        return R.astype(jnp.bfloat16)

    rows = {"p1": kb(R1), "p2": kb(R2), "p3": kb(R3),
            "u4": kb(UH4), "u3": kb(UH3), "u2": kb(UH2)}

    consts = {"conv": conv, "rows": rows}
    total = sum(int(np.prod(l.shape)) * l.dtype.itemsize
                for l in jax.tree_util.tree_leaves(consts))
    # TODO(synk): add a BlockSpec-pipelined NHWC conv fallback for real RSU5
    # sizes where the W^2*Cin*Cout band matrices no longer fit v7x's 64 MiB VMEM.
    if total > 24 * 1024 * 1024:
        raise NotImplementedError("band-matrix constants exceed VMEM budget")
    return consts


# -----------------------------------------------------------------------------
# Fused RSU5 forward (public API: NCHW in / NCHW out, like the PyTorch module).
# -----------------------------------------------------------------------------
def rsu5_forward(x_nchw, consts, *, n_per_block=1):
    N, in_ch, H0, W0 = x_nchw.shape
    NB = int(n_per_block)
    assert N % NB == 0
    G = N // NB
    H1 = -(-H0 // 2)
    H2 = -(-H1 // 2)
    H3 = -(-H2 // 2)
    out_ch = int(consts["conv"]["in"].shape[1]) // W0

    leaves, treedef = jax.tree_util.tree_flatten(consts)

    def kernel(*refs):
        x_ref, out_ref = refs[0], refs[-1]
        c = jax.tree_util.tree_unflatten(treedef, refs[1:-1])
        conv_m, row_m = c["conv"], c["rows"]

        def shift_rows(a, off, Hs):
            # out[r] = a[r + off] within each stacked image of Hs rows, else 0.
            if off == 0:
                return a
            rows_t, lanes = a.shape
            zpad = jnp.zeros((abs(off), lanes), a.dtype)
            if off > 0:
                sh = jnp.concatenate([a[off:, :], zpad], axis=0)
            else:
                sh = jnp.concatenate([zpad, a[:off, :]], axis=0)
            if NB > 1:  # zero rows whose source row would bleed into a neighbor image
                r = jax.lax.broadcasted_iota(jnp.int32, (rows_t, 1), 0)
                if (Hs & (Hs - 1)) == 0:
                    y = jnp.bitwise_and(r, Hs - 1)
                else:
                    y = jax.lax.rem(r, Hs)
                ok = jnp.logical_and(y + off >= 0, y + off < Hs)
                sh = jnp.where(ok, sh, 0.0)
            return sh

        def conv(srcs, name, Hs, dil=1):
            # REBNCONV (+ folded pool/upsample lane matrix) as ONE wide-K matmul:
            # row-taps via cheap shifts (VPU/XLU), lane concat, single MXU dot.
            taps = []
            for ky in range(3):
                off = (ky - 1) * dil
                if abs(off) >= Hs:
                    continue
                for s in srcs:
                    taps.append(shift_rows(s, off, Hs))
            lhs = taps[0] if len(taps) == 1 else jnp.concatenate(taps, axis=1)
            mref = conv_m[name]
            K = mref.shape[0] - 1
            mat = mref[pl.ds(0, K), :]                      # bf16 weights (BN scale folded)
            bias = mref[pl.ds(K, 1), :].astype(jnp.float32)  # folded conv+BN bias
            y = jnp.dot(lhs.astype(jnp.bfloat16), mat,
                        preferred_element_type=jnp.float32)
            return jnp.maximum(y + bias, 0.0)

        def rowmul(name, a):
            # Pool / bilinear upsample row mixing (lane matrix already folded
            # into the following conv's band matrix host-side).
            return jnp.dot(row_m[name][...], a.astype(jnp.bfloat16),
                           preferred_element_type=jnp.float32)

        x = x_ref[...]                                      # (NB*H0, W0*in_ch)
        hxin = conv([x], "in", H0, 1)
        hx1 = conv([hxin], "c1", H0, 1)
        hx2 = conv([rowmul("p1", hx1)], "c2", H1, 1)
        hx3 = conv([rowmul("p2", hx2)], "c3", H2, 1)
        hx4 = conv([rowmul("p3", hx3)], "c4", H3, 1)
        hx5 = conv([hx4], "c5", H3, 2)
        hx4d = conv([hx5, hx4], "c4d", H3, 1)
        hx3d = conv([rowmul("u4", hx4d), hx3], "c3d", H2, 1)
        hx2d = conv([rowmul("u3", hx3d), hx2], "c2d", H1, 1)
        hx1d = conv([rowmul("u2", hx2d), hx1], "c1d", H0, 1)
        out_ref[...] = hx1d + hxin                          # residual add

    # NCHW -> row-stacked lane-interleaved layout (N*H0, W0*in_ch).
    x = jnp.transpose(x_nchw, (0, 2, 3, 1)).astype(jnp.float32)
    x = x.reshape(N * H0, W0 * in_ch)

    const_specs = [
        pl.BlockSpec(leaf.shape, (lambda g, _nd=leaf.ndim: (0,) * _nd))
        for leaf in leaves
    ]
    out_flat = pl.pallas_call(
        kernel,
        out_shape=jax.ShapeDtypeStruct((N * H0, W0 * out_ch), jnp.float32),
        grid=(G,),
        in_specs=[pl.BlockSpec((NB * H0, W0 * in_ch), lambda g: (g, 0))]
                 + const_specs,
        out_specs=pl.BlockSpec((NB * H0, W0 * out_ch), lambda g: (g, 0)),
        compiler_params=pltpu.CompilerParams(
            dimension_semantics=("parallel",)),  # 2 TCs on v7x take one image each
    )(x, *leaves)

    out = out_flat.reshape(N, H0, W0, out_ch)
    return jnp.transpose(out, (0, 3, 1, 2))                 # -> NCHW


def _tensorcores_per_device():
    try:
        kind = jax.devices()[0].device_kind.lower()
    except Exception:
        return 1
    return 2 if ("v7" in kind or "tpu7" in kind) else 1


if __name__ == "__main__":
    in_ch, mid_ch, out_ch = 4, 8, 4
    N, H, W = 2, 16, 16
    x = jax.random.normal(jax.random.PRNGKey(0), (N, in_ch, H, W),
                          dtype=jnp.float32)
    params = init_rsu5_params(jax.random.PRNGKey(1234), in_ch, mid_ch, out_ch)

    # v5e/v6e (single TensorCore): stack the whole batch along rows in one
    # invocation.  v7x (2 TensorCores): split the batch across cores via grid.
    tc = _tensorcores_per_device()
    n_per_block = N // tc if (tc > 1 and N % tc == 0) else N
    consts = prepare_rsu5_consts(params, H, W, n_per_block=n_per_block)

    fwd = jax.jit(functools.partial(rsu5_forward, n_per_block=n_per_block))
    out = jax.block_until_ready(fwd(x, consts))

    assert out.shape == (N, out_ch, H, W), out.shape
    assert bool(jnp.all(jnp.isfinite(out)))
    print("KERNEL_OK")
</pallas_src>

<mosaic_0001>
module attributes {stable_mosaic.version = 11 : i64} {
  func.func @kernel(%arg0: i32, %arg1: memref<32x64xf32, #tpu.memory_space<vmem>>, %arg2: memref<193x128xbf16, #tpu.memory_space<vmem>>, %arg3: memref<577x64xbf16, #tpu.memory_space<vmem>>, %arg4: memref<385x64xbf16, #tpu.memory_space<vmem>>, %arg5: memref<289x64xbf16, #tpu.memory_space<vmem>>, %arg6: memref<193x32xbf16, #tpu.memory_space<vmem>>, %arg7: memref<145x32xbf16, #tpu.memory_space<vmem>>, %arg8: memref<97x16xbf16, #tpu.memory_space<vmem>>, %arg9: memref<97x16xbf16, #tpu.memory_space<vmem>>, %arg10: memref<17x16xbf16, #tpu.memory_space<vmem>>, %arg11: memref<193x64xbf16, #tpu.memory_space<vmem>>, %arg12: memref<16x32xbf16, #tpu.memory_space<vmem>>, %arg13: memref<8x16xbf16, #tpu.memory_space<vmem>>, %arg14: memref<4x8xbf16, #tpu.memory_space<vmem>>, %arg15: memref<32x16xbf16, #tpu.memory_space<vmem>>, %arg16: memref<16x8xbf16, #tpu.memory_space<vmem>>, %arg17: memref<8x4xbf16, #tpu.memory_space<vmem>>, %arg18: memref<32x64xf32, #tpu.memory_space<vmem>>) attributes {dimension_semantics = [#tpu.dimension_semantics<parallel>], iteration_bounds = array<i64: 1>, scalar_prefetch = 0 : i64, scratch_operands = 0 : i64, tpu.core_type = #tpu.core_type<tc>, window_params = [{transform_indices = @transform_0, window_bounds = array<i64: 32, 64>}, {pipeline_mode = #tpu.pipeline_mode<synchronous>, transform_indices = @transform_1, window_bounds = array<i64: 193, 128>}, {pipeline_mode = #tpu.pipeline_mode<synchronous>, transform_indices = @transform_2, window_bounds = array<i64: 577, 64>}, {pipeline_mode = #tpu.pipeline_mode<synchronous>, transform_indices = @transform_3, window_bounds = array<i64: 385, 64>}, {pipeline_mode = #tpu.pipeline_mode<synchronous>, transform_indices = @transform_4, window_bounds = array<i64: 289, 64>}, {pipeline_mode = #tpu.pipeline_mode<synchronous>, transform_indices = @transform_5, window_bounds = array<i64: 193, 32>}, {pipeline_mode = #tpu.pipeline_mode<synchronous>, transform_indices = @transform_6, window_bounds = array<i64: 145, 32>}, {pipeline_mode = #tpu.pipeline_mode<synchronous>, transform_indices = @transform_7, window_bounds = array<i64: 97, 16>}, {pipeline_mode = #tpu.pipeline_mode<synchronous>, transform_indices = @transform_8, window_bounds = array<i64: 97, 16>}, {pipeline_mode = #tpu.pipeline_mode<synchronous>, transform_indices = @transform_9, window_bounds = array<i64: 17, 16>}, {pipeline_mode = #tpu.pipeline_mode<synchronous>, transform_indices = @transform_10, window_bounds = array<i64: 193, 64>}, {pipeline_mode = #tpu.pipeline_mode<synchronous>, transform_indices = @transform_11, window_bounds = array<i64: 16, 32>}, {pipeline_mode = #tpu.pipeline_mode<synchronous>, transform_indices = @transform_12, window_bounds = array<i64: 8, 16>}, {pipeline_mode = #tpu.pipeline_mode<synchronous>, transform_indices = @transform_13, window_bounds = array<i64: 4, 8>}, {pipeline_mode = #tpu.pipeline_mode<synchronous>, transform_indices = @transform_14, window_bounds = array<i64: 32, 16>}, {pipeline_mode = #tpu.pipeline_mode<synchronous>, transform_indices = @transform_15, window_bounds = array<i64: 16, 8>}, {pipeline_mode = #tpu.pipeline_mode<synchronous>, transform_indices = @transform_16, window_bounds = array<i64: 8, 4>}, {transform_indices = @transform_17, window_bounds = array<i64: 32, 64>}]} {
    %c0 = arith.constant 0 : index
    %c0_0 = arith.constant 0 : index
    %0 = vector.load %arg1[%c0, %c0_0] : memref<32x64xf32, #tpu.memory_space<vmem>>, vector<32x64xf32>
    %cst = arith.constant 0.000000e+00 : f32
    %1 = vector.broadcast %cst : f32 to vector<1x64xf32>
    %2 = vector.extract_strided_slice %0 {offsets = [0, 0], sizes = [31, 64], strides = [1, 1]} : vector<32x64xf32> to vector<31x64xf32>
    %3 = tpu.concatenate %1, %2 in 0 : vector<1x64xf32>, vector<31x64xf32> -> vector<32x64xf32>
    %4 = tpu.iota {dimensions = array<i32: 0>} : vector<32x1xi32>
    %c15_i32 = arith.constant 15 : i32
    %5 = vector.broadcast %c15_i32 : i32 to vector<32x1xi32>
    %6 = arith.andi %4, %5 : vector<32x1xi32>
    %c-1_i32 = arith.constant -1 : i32
    %7 = vector.broadcast %c-1_i32 : i32 to vector<32x1xi32>
    %8 = arith.addi %6, %7 : vector<32x1xi32>
    %c0_i32 = arith.constant 0 : i32
    %9 = vector.broadcast %c0_i32 : i32 to vector<32x1xi32>
    %10 = arith.cmpi sge, %8, %9 : vector<32x1xi32>
    %c-1_i32_1 = arith.constant -1 : i32
    %11 = vector.broadcast %c-1_i32_1 : i32 to vector<32x1xi32>
    %12 = arith.addi %6, %11 : vector<32x1xi32>
    %c16_i32 = arith.constant 16 : i32
    %13 = vector.broadcast %c16_i32 : i32 to vector<32x1xi32>
    %14 = arith.cmpi slt, %12, %13 : vector<32x1xi32>
    %15 = arith.andi %10, %14 : vector<32x1xi1>
    %cst_2 = arith.constant 0.000000e+00 : f32
    %16 = vector.shape_cast %15 : vector<32x1xi1> to vector<32x1xi1>
    %17 = vector.broadcast %16 : vector<32x1xi1> to vector<32x64xi1>
    %18 = vector.broadcast %cst_2 : f32 to vector<32x64xf32>
    %19 = arith.select %17, %3, %18 : vector<32x64xi1>, vector<32x64xf32>
    %cst_3 = arith.constant 0.000000e+00 : f32
    %20 = vector.broadcast %cst_3 : f32 to vector<1x64xf32>
    %21 = vector.extract_strided_slice %0 {offsets = [1, 0], sizes = [31, 64], strides = [1, 1]} : vector<32x64xf32> to vector<31x64xf32>
    %22 = tpu.concatenate %21, %20 in 0 : vector<31x64xf32>, vector<1x64xf32> -> vector<32x64xf32>
    %23 = tpu.iota {dimensions = array<i32: 0>} : vector<32x1xi32>
    %c15_i32_4 = arith.constant 15 : i32
    %24 = vector.broadcast %c15_i32_4 : i32 to vector<32x1xi32>
    %25 = arith.andi %23, %24 : vector<32x1xi32>
    %c1_i32 = arith.constant 1 : i32
    %26 = vector.broadcast %c1_i32 : i32 to vector<32x1xi32>
    %27 = arith.addi %25, %26 : vector<32x1xi32>
    %c0_i32_5 = arith.constant 0 : i32
    %28 = vector.broadcast %c0_i32_5 : i32 to vector<32x1xi32>
    %29 = arith.cmpi sge, %27, %28 : vector<32x1xi32>
    %c1_i32_6 = arith.constant 1 : i32
    %30 = vector.broadcast %c1_i32_6 : i32 to vector<32x1xi32>
    %31 = arith.addi %25, %30 : vector<32x1xi32>
    %c16_i32_7 = arith.constant 16 : i32
    %32 = vector.broadcast %c16_i32_7 : i32 to vector<32x1xi32>
    %33 = arith.cmpi slt, %31, %32 : vector<32x1xi32>
    %34 = arith.andi %29, %33 : vector<32x1xi1>
    %cst_8 = arith.constant 0.000000e+00 : f32
    %35 = vector.shape_cast %34 : vector<32x1xi1> to vector<32x1xi1>
    %36 = vector.broadcast %35 : vector<32x1xi1> to vector<32x64xi1>
    %37 = vector.broadcast %cst_8 : f32 to vector<32x64xf32>
    %38 = arith.select %36, %22, %37 : vector<32x64xi1>, vector<32x64xf32>
    %39 = tpu.concatenate %19, %0, %38 in 1 : vector<32x64xf32>, vector<32x64xf32>, vector<32x64xf32> -> vector<32x192xf32>
    %c0_9 = arith.constant 0 : index
    %c0_10 = arith.constant 0 : index
    %40 = vector.load %arg11[%c0_9, %c0_10] : memref<193x64xbf16, #tpu.memory_space<vmem>>, vector<192x64xbf16>
    %c192 = arith.constant 192 : index
    %c0_11 = arith.constant 0 : index
    %41 = vector.load %arg11[%c192, %c0_11] : memref<193x64xbf16, #tpu.memory_space<vmem>>, vector<1x64xbf16>
    %42 = arith.extf %41 : vector<1x64xbf16> to vector<1x64xf32>
    %43 = arith.truncf %39 : vector<32x192xf32> to vector<32x192xbf16>
    %cst_12 = arith.constant dense<0.000000e+00> : vector<32x64xf32>
    %44 = tpu.matmul %43, %40, %cst_12 {dimension_numbers = #tpu.dot_dimension_numbers<[1], [0], [0], [1], [0, 0, 1, 1], [], []>} : vector<32x192xbf16>, vector<192x64xbf16>, vector<32x64xf32> -> vector<32x64xf32>
    %45 = vector.broadcast %42 : vector<1x64xf32> to vector<32x64xf32>
    %46 = arith.addf %44, %45 : vector<32x64xf32>
    %cst_13 = arith.constant 0.000000e+00 : f32
    %47 = vector.broadcast %cst_13 : f32 to vector<32x64xf32>
    %48 = arith.maximumf %46, %47 : vector<32x64xf32>
    %cst_14 = arith.constant 0.000000e+00 : f32
    %49 = vector.broadcast %cst_14 : f32 to vector<1x64xf32>
    %50 = vector.extract_strided_slice %48 {offsets = [0, 0], sizes = [31, 64], strides = [1, 1]} : vector<32x64xf32> to vector<31x64xf32>
    %51 = tpu.concatenate %49, %50 in 0 : vector<1x64xf32>, vector<31x64xf32> -> vector<32x64xf32>
    %52 = tpu.iota {dimensions = array<i32: 0>} : vector<32x1xi32>
    %c15_i32_15 = arith.constant 15 : i32
    %53 = vector.broadcast %c15_i32_15 : i32 to vector<32x1xi32>
    %54 = arith.andi %52, %53 : vector<32x1xi32>
    %c-1_i32_16 = arith.constant -1 : i32
    %55 = vector.broadcast %c-1_i32_16 : i32 to vector<32x1xi32>
    %56 = arith.addi %54, %55 : vector<32x1xi32>
    %c0_i32_17 = arith.constant 0 : i32
    %57 = vector.broadcast %c0_i32_17 : i32 to vector<32x1xi32>
    %58 = arith.cmpi sge, %56, %57 : vector<32x1xi32>
    %c-1_i32_18 = arith.constant -1 : i32
    %59 = vector.broadcast %c-1_i32_18 : i32 to vector<32x1xi32>
    %60 = arith.addi %54, %59 : vector<32x1xi32>
    %c16_i32_19 = arith.constant 16 : i32
    %61 = vector.broadcast %c16_i32_19 : i32 to vector<32x1xi32>
    %62 = arith.cmpi slt, %60, %61 : vector<32x1xi32>
    %63 = arith.andi %58, %62 : vector<32x1xi1>
    %cst_20 = arith.constant 0.000000e+00 : f32
    %64 = vector.shape_cast %63 : vector<32x1xi1> to vector<32x1xi1>
    %65 = vector.broadcast %64 : vector<32x1xi1> to vector<32x64xi1>
    %66 = vector.broadcast %cst_20 : f32 to vector<32x64xf32>
    %67 = arith.select %65, %51, %66 : vector<32x64xi1>, vector<32x64xf32>
    %cst_21 = arith.constant 0.000000e+00 : f32
    %68 = vector.broadcast %cst_21 : f32 to vector<1x64xf32>
    %69 = vector.extract_strided_slice %48 {offsets = [1, 0], sizes = [31, 64], strides = [1, 1]} : vector<32x64xf32> to vector<31x64xf32>
    %70 = tpu.concatenate %69, %68 in 0 : vector<31x64xf32>, vector<1x64xf32> -> vector<32x64xf32>
    %71 = tpu.iota {dimensions = array<i32: 0>} : vector<32x1xi32>
    %c15_i32_22 = arith.constant 15 : i32
    %72 = vector.broadcast %c15_i32_22 : i32 to vector<32x1xi32>
    %73 = arith.andi %71, %72 : vector<32x1xi32>
    %c1_i32_23 = arith.constant 1 : i32
    %74 = vector.broadcast %c1_i32_23 : i32 to vector<32x1xi32>
    %75 = arith.addi %73, %74 : vector<32x1xi32>
    %c0_i32_24 = arith.constant 0 : i32
    %76 = vector.broadcast %c0_i32_24 : i32 to vector<32x1xi32>
    %77 = arith.cmpi sge, %75, %76 : vector<32x1xi32>
    %c1_i32_25 = arith.constant 1 : i32
    %78 = vector.broadcast %c1_i32_25 : i32 to vector<32x1xi32>
    %79 = arith.addi %73, %78 : vector<32x1xi32>
    %c16_i32_26 = arith.constant 16 : i32
    %80 = vector.broadcast %c16_i32_26 : i32 to vector<32x1xi32>
    %81 = arith.cmpi slt, %79, %80 : vector<32x1xi32>
    %82 = arith.andi %77, %81 : vector<32x1xi1>
    %cst_27 = arith.constant 0.000000e+00 : f32
    %83 = vector.shape_cast %82 : vector<32x1xi1> to vector<32x1xi1>
    %84 = vector.broadcast %83 : vector<32x1xi1> to vector<32x64xi1>
    %85 = vector.broadcast %cst_27 : f32 to vector<32x64xf32>
    %86 = arith.select %84, %70, %85 : vector<32x64xi1>, vector<32x64xf32>
    %87 = tpu.concatenate %67, %48, %86 in 1 : vector<32x64xf32>, vector<32x64xf32>, vector<32x64xf32> -> vector<32x192xf32>
    %c0_28 = arith.constant 0 : index
    %c0_29 = arith.constant 0 : index
    %88 = vector.load %arg2[%c0_28, %c0_29] : memref<193x128xbf16, #tpu.memory_space<vmem>>, vector<192x128xbf16>
    %c192_30 = arith.constant 192 : index
    %c0_31 = arith.constant 0 : index
    %89 = vector.load %arg2[%c192_30, %c0_31] : memref<193x128xbf16, #tpu.memory_space<vmem>>, vector<1x128xbf16>
    %90 = arith.extf %89 : vector<1x128xbf16> to vector<1x128xf32>
    %91 = arith.truncf %87 : vector<32x192xf32> to vector<32x192xbf16>
    %cst_32 = arith.constant dense<0.000000e+00> : vector<32x128xf32>
    %92 = tpu.matmul %91, %88, %cst_32 {dimension_numbers = #tpu.dot_dimension_numbers<[1], [0], [0], [1], [0, 0, 1, 1], [], []>} : vector<32x192xbf16>, vector<192x128xbf16>, vector<32x128xf32> -> vector<32x128xf32>
    %93 = vector.broadcast %90 : vector<1x128xf32> to vector<32x128xf32>
    %94 = arith.addf %92, %93 : vector<32x128xf32>
    %cst_33 = arith.constant 0.000000e+00 : f32
    %95 = vector.broadcast %cst_33 : f32 to vector<32x128xf32>
    %96 = arith.maximumf %94, %95 : vector<32x128xf32>
    %c0_34 = arith.constant 0 : index
    %c0_35 = arith.constant 0 : index
    %97 = vector.load %arg12[%c0_34, %c0_35] : memref<16x32xbf16, #tpu.memory_space<vmem>>, vector<16x32xbf16>
    %98 = arith.truncf %96 : vector<32x128xf32> to vector<32x128xbf16>
    %cst_36 = arith.constant dense<0.000000e+00> : vector<16x128xf32>
    %99 = tpu.matmul %97, %98, %cst_36 {dimension_numbers = #tpu.dot_dimension_numbers<[1], [0], [0], [1], [0, 0, 1, 1], [], []>} : vector<16x32xbf16>, vector<32x128xbf16>, vector<16x128xf32> -> vector<16x128xf32>
    %cst_37 = arith.constant 0.000000e+00 : f32
    %100 = vector.broadcast %cst_37 : f32 to vector<1x128xf32>
    %101 = vector.extract_strided_slice %99 {offsets = [0, 0], sizes = [15, 128], strides = [1, 1]} : vector<16x128xf32> to vector<15x128xf32>
    %102 = tpu.concatenate %100, %101 in 0 : vector<1x128xf32>, vector<15x128xf32> -> vector<16x128xf32>
    %103 = tpu.iota {dimensions = array<i32: 0>} : vector<16x1xi32>
    %c7_i32 = arith.constant 7 : i32
    %104 = vector.broadcast %c7_i32 : i32 to vector<16x1xi32>
    %105 = arith.andi %103, %104 : vector<16x1xi32>
    %c-1_i32_38 = arith.constant -1 : i32
    %106 = vector.broadcast %c-1_i32_38 : i32 to vector<16x1xi32>
    %107 = arith.addi %105, %106 : vector<16x1xi32>
    %c0_i32_39 = arith.constant 0 : i32
    %108 = vector.broadcast %c0_i32_39 : i32 to vector<16x1xi32>
    %109 = arith.cmpi sge, %107, %108 : vector<16x1xi32>
    %c-1_i32_40 = arith.constant -1 : i32
    %110 = vector.broadcast %c-1_i32_40 : i32 to vector<16x1xi32>
    %111 = arith.addi %105, %110 : vector<16x1xi32>
    %c8_i32 = arith.constant 8 : i32
    %112 = vector.broadcast %c8_i32 : i32 to vector<16x1xi32>
    %113 = arith.cmpi slt, %111, %112 : vector<16x1xi32>
    %114 = arith.andi %109, %113 : vector<16x1xi1>
    %cst_41 = arith.constant 0.000000e+00 : f32
    %115 = vector.shape_cast %114 : vector<16x1xi1> to vector<16x1xi1>
    %116 = vector.broadcast %115 : vector<16x1xi1> to vector<16x128xi1>
    %117 = vector.broadcast %cst_41 : f32 to vector<16x128xf32>
    %118 = arith.select %116, %102, %117 : vector<16x128xi1>, vector<16x128xf32>
    %cst_42 = arith.constant 0.000000e+00 : f32
    %119 = vector.broadcast %cst_42 : f32 to vector<1x128xf32>
    %120 = vector.extract_strided_slice %99 {offsets = [1, 0], sizes = [15, 128], strides = [1, 1]} : vector<16x128xf32> to vector<15x128xf32>
    %121 = tpu.concatenate %120, %119 in 0 : vector<15x128xf32>, vector<1x128xf32> -> vector<16x128xf32>
    %122 = tpu.iota {dimensions = array<i32: 0>} : vector<16x1xi32>
    %c7_i32_43 = arith.constant 7 : i32
    %123 = vector.broadcast %c7_i32_43 : i32 to vector<16x1xi32>
    %124 = arith.andi %122, %123 : vector<16x1xi32>
    %c1_i32_44 = arith.constant 1 : i32
    %125 = vector.broadcast %c1_i32_44 : i32 to vector<16x1xi32>
    %126 = arith.addi %124, %125 : vector<16x1xi32>
    %c0_i32_45 = arith.constant 0 : i32
    %127 = vector.broadcast %c0_i32_45 : i32 to vector<16x1xi32>
    %128 = arith.cmpi sge, %126, %127 : vector<16x1xi32>
    %c1_i32_46 = arith.constant 1 : i32
    %129 = vector.broadcast %c1_i32_46 : i32 to vector<16x1xi32>
    %130 = arith.addi %124, %129 : vector<16x1xi32>
    %c8_i32_47 = arith.constant 8 : i32
    %131 = vector.broadcast %c8_i32_47 : i32 to vector<16x1xi32>
    %132 = arith.cmpi slt, %130, %131 : vector<16x1xi32>
    %133 = arith.andi %128, %132 : vector<16x1xi1>
    %cst_48 = arith.constant 0.000000e+00 : f32
    %134 = vector.shape_cast %133 : vector<16x1xi1> to vector<16x1xi1>
    %135 = vector.broadcast %134 : vector<16x1xi1> to vector<16x128xi1>
    %136 = vector.broadcast %cst_48 : f32 to vector<16x128xf32>
    %137 = arith.select %135, %121, %136 : vector<16x128xi1>, vector<16x128xf32>
    %138 = tpu.concatenate %118, %99, %137 in 1 : vector<16x128xf32>, vector<16x128xf32>, vector<16x128xf32> -> vector<16x384xf32>
    %c0_49 = arith.constant 0 : index
    %c0_50 = arith.constant 0 : index
    %139 = vector.load %arg4[%c0_49, %c0_50] : memref<385x64xbf16, #tpu.memory_space<vmem>>, vector<384x64xbf16>
    %c384 = arith.constant 384 : index
    %c0_51 = arith.constant 0 : index
    %140 = vector.load %arg4[%c384, %c0_51] : memref<385x64xbf16, #tpu.memory_space<vmem>>, vector<1x64xbf16>
    %141 = arith.extf %140 : vector<1x64xbf16> to vector<1x64xf32>
    %142 = arith.truncf %138 : vector<16x384xf32> to vector<16x384xbf16>
    %cst_52 = arith.constant dense<0.000000e+00> : vector<16x64xf32>
    %143 = tpu.matmul %142, %139, %cst_52 {dimension_numbers = #tpu.dot_dimension_numbers<[1], [0], [0], [1], [0, 0, 1, 1], [], []>} : vector<16x384xbf16>, vector<384x64xbf16>, vector<16x64xf32> -> vector<16x64xf32>
    %144 = vector.broadcast %141 : vector<1x64xf32> to vector<16x64xf32>
    %145 = arith.addf %143, %144 : vector<16x64xf32>
    %cst_53 = arith.constant 0.000000e+00 : f32
    %146 = vector.broadcast %cst_53 : f32 to vector<16x64xf32>
    %147 = arith.maximumf %145, %146 : vector<16x64xf32>
    %c0_54 = arith.constant 0 : index
    %c0_55 = arith.constant 0 : index
    %148 = vector.load %arg13[%c0_54, %c0_55] : memref<8x16xbf16, #tpu.memory_space<vmem>>, vector<8x16xbf16>
    %149 = arith.truncf %147 : vector<16x64xf32> to vector<16x64xbf16>
    %cst_56 = arith.constant dense<0.000000e+00> : vector<8x64xf32>
    %150 = tpu.matmul %148, %149, %cst_56 {dimension_numbers = #tpu.dot_dimension_numbers<[1], [0], [0], [1], [0, 0, 1, 1], [], []>} : vector<8x16xbf16>, vector<16x64xbf16>, vector<8x64xf32> -> vector<8x64xf32>
    %cst_57 = arith.constant 0.000000e+00 : f32
    %151 = vector.broadcast %cst_57 : f32 to vector<1x64xf32>
    %152 = vector.extract_strided_slice %150 {offsets = [0, 0], sizes = [7, 64], strides = [1, 1]} : vector<8x64xf32> to vector<7x64xf32>
    %153 = tpu.concatenate %151, %152 in 0 : vector<1x64xf32>, vector<7x64xf32> -> vector<8x64xf32>
    %154 = tpu.iota {dimensions = array<i32: 0>} : vector<8x1xi32>
    %c3_i32 = arith.constant 3 : i32
    %155 = vector.broadcast %c3_i32 : i32 to vector<8x1xi32>
    %156 = arith.andi %154, %155 : vector<8x1xi32>
    %c-1_i32_58 = arith.constant -1 : i32
    %157 = vector.broadcast %c-1_i32_58 : i32 to vector<8x1xi32>
    %158 = arith.addi %156, %157 : vector<8x1xi32>
    %c0_i32_59 = arith.constant 0 : i32
    %159 = vector.broadcast %c0_i32_59 : i32 to vector<8x1xi32>
    %160 = arith.cmpi sge, %158, %159 : vector<8x1xi32>
    %c-1_i32_60 = arith.constant -1 : i32
    %161 = vector.broadcast %c-1_i32_60 : i32 to vector<8x1xi32>
    %162 = arith.addi %156, %161 : vector<8x1xi32>
    %c4_i32 = arith.constant 4 : i32
    %163 = vector.broadcast %c4_i32 : i32 to vector<8x1xi32>
    %164 = arith.cmpi slt, %162, %163 : vector<8x1xi32>
    %165 = arith.andi %160, %164 : vector<8x1xi1>
    %cst_61 = arith.constant 0.000000e+00 : f32
    %166 = vector.shape_cast %165 : vector<8x1xi1> to vector<8x1xi1>
    %167 = vector.broadcast %166 : vector<8x1xi1> to vector<8x64xi1>
    %168 = vector.broadcast %cst_61 : f32 to vector<8x64xf32>
    %169 = arith.select %167, %153, %168 : vector<8x64xi1>, vector<8x64xf32>
    %cst_62 = arith.constant 0.000000e+00 : f32
    %170 = vector.broadcast %cst_62 : f32 to vector<1x64xf32>
    %171 = vector.extract_strided_slice %150 {offsets = [1, 0], sizes = [7, 64], strides = [1, 1]} : vector<8x64xf32> to vector<7x64xf32>
    %172 = tpu.concatenate %171, %170 in 0 : vector<7x64xf32>, vector<1x64xf32> -> vector<8x64xf32>
    %173 = tpu.iota {dimensions = array<i32: 0>} : vector<8x1xi32>
    %c3_i32_63 = arith.constant 3 : i32
    %174 = vector.broadcast %c3_i32_63 : i32 to vector<8x1xi32>
    %175 = arith.andi %173, %174 : vector<8x1xi32>
    %c1_i32_64 = arith.constant 1 : i32
    %176 = vector.broadcast %c1_i32_64 : i32 to vector<8x1xi32>
    %177 = arith.addi %175, %176 : vector<8x1xi32>
    %c0_i32_65 = arith.constant 0 : i32
    %178 = vector.broadcast %c0_i32_65 : i32 to vector<8x1xi32>
    %179 = arith.cmpi sge, %177, %178 : vector<8x1xi32>
    %c1_i32_66 = arith.constant 1 : i32
    %180 = vector.broadcast %c1_i32_66 : i32 to vector<8x1xi32>
    %181 = arith.addi %175, %180 : vector<8x1xi32>
    %c4_i32_67 = arith.constant 4 : i32
    %182 = vector.broadcast %c4_i32_67 : i32 to vector<8x1xi32>
    %183 = arith.cmpi slt, %181, %182 : vector<8x1xi32>
    %184 = arith.andi %179, %183 : vector<8x1xi1>
    %cst_68 = arith.constant 0.000000e+00 : f32
    %185 = vector.shape_cast %184 : vector<8x1xi1> to vector<8x1xi1>
    %186 = vector.broadcast %185 : vector<8x1xi1> to vector<8x64xi1>
    %187 = vector.broadcast %cst_68 : f32 to vector<8x64xf32>
    %188 = arith.select %186, %172, %187 : vector<8x64xi1>, vector<8x64xf32>
    %189 = tpu.concatenate %169, %150, %188 in 1 : vector<8x64xf32>, vector<8x64xf32>, vector<8x64xf32> -> vector<8x192xf32>
    %c0_69 = arith.constant 0 : index
    %c0_70 = arith.constant 0 : index
    %190 = vector.load %arg6[%c0_69, %c0_70] : memref<193x32xbf16, #tpu.memory_space<vmem>>, vector<192x32xbf16>
    %c192_71 = arith.constant 192 : index
    %c0_72 = arith.constant 0 : index
    %191 = vector.load %arg6[%c192_71, %c0_72] : memref<193x32xbf16, #tpu.memory_space<vmem>>, vector<1x32xbf16>
    %192 = arith.extf %191 : vector<1x32xbf16> to vector<1x32xf32>
    %193 = arith.truncf %189 : vector<8x192xf32> to vector<8x192xbf16>
    %cst_73 = arith.constant dense<0.000000e+00> : vector<8x32xf32>
    %194 = tpu.matmul %193, %190, %cst_73 {dimension_numbers = #tpu.dot_dimension_numbers<[1], [0], [0], [1], [0, 0, 1, 1], [], []>} : vector<8x192xbf16>, vector<192x32xbf16>, vector<8x32xf32> -> vector<8x32xf32>
    %195 = vector.broadcast %192 : vector<1x32xf32> to vector<8x32xf32>
    %196 = arith.addf %194, %195 : vector<8x32xf32>
    %cst_74 = arith.constant 0.000000e+00 : f32
    %197 = vector.broadcast %cst_74 : f32 to vector<8x32xf32>
    %198 = arith.maximumf %196, %197 : vector<8x32xf32>
    %c0_75 = arith.constant 0 : index
    %c0_76 = arith.constant 0 : index
    %199 = vector.load %arg14[%c0_75, %c0_76] : memref<4x8xbf16, #tpu.memory_space<vmem>>, vector<4x8xbf16>
    %200 = arith.truncf %198 : vector<8x32xf32> to vector<8x32xbf16>
    %cst_77 = arith.constant dense<0.000000e+00> : vector<4x32xf32>
    %201 = tpu.matmul %199, %200, %cst_77 {dimension_numbers = #tpu.dot_dimension_numbers<[1], [0], [0], [1], [0, 0, 1, 1], [], []>} : vector<4x8xbf16>, vector<8x32xbf16>, vector<4x32xf32> -> vector<4x32xf32>
    %cst_78 = arith.constant 0.000000e+00 : f32
    %202 = vector.broadcast %cst_78 : f32 to vector<1x32xf32>
    %203 = vector.extract_strided_slice %201 {offsets = [0, 0], sizes = [3, 32], strides = [1, 1]} : vector<4x32xf32> to vector<3x32xf32>
    %204 = tpu.concatenate %202, %203 in 0 : vector<1x32xf32>, vector<3x32xf32> -> vector<4x32xf32>
    %205 = tpu.iota {dimensions = array<i32: 0>} : vector<4x1xi32>
    %c1_i32_79 = arith.constant 1 : i32
    %206 = vector.broadcast %c1_i32_79 : i32 to vector<4x1xi32>
    %207 = arith.andi %205, %206 : vector<4x1xi32>
    %c-1_i32_80 = arith.constant -1 : i32
    %208 = vector.broadcast %c-1_i32_80 : i32 to vector<4x1xi32>
    %209 = arith.addi %207, %208 : vector<4x1xi32>
    %c0_i32_81 = arith.constant 0 : i32
    %210 = vector.broadcast %c0_i32_81 : i32 to vector<4x1xi32>
    %211 = arith.cmpi sge, %209, %210 : vector<4x1xi32>
    %c-1_i32_82 = arith.constant -1 : i32
    %212 = vector.broadcast %c-1_i32_82 : i32 to vector<4x1xi32>
    %213 = arith.addi %207, %212 : vector<4x1xi32>
    %c2_i32 = arith.constant 2 : i32
    %214 = vector.broadcast %c2_i32 : i32 to vector<4x1xi32>
    %215 = arith.cmpi slt, %213, %214 : vector<4x1xi32>
    %216 = arith.andi %211, %215 : vector<4x1xi1>
    %cst_83 = arith.constant 0.000000e+00 : f32
    %217 = vector.shape_cast %216 : vector<4x1xi1> to vector<4x1xi1>
    %218 = vector.broadcast %217 : vector<4x1xi1> to vector<4x32xi1>
    %219 = vector.broadcast %cst_83 : f32 to vector<4x32xf32>
    %220 = arith.select %218, %204, %219 : vector<4x32xi1>, vector<4x32xf32>
    %cst_84 = arith.constant 0.000000e+00 : f32
    %221 = vector.broadcast %cst_84 : f32 to vector<1x32xf32>
    %222 = vector.extract_strided_slice %201 {offsets = [1, 0], sizes = [3, 32], strides = [1, 1]} : vector<4x32xf32> to vector<3x32xf32>
    %223 = tpu.concatenate %222, %221 in 0 : vector<3x32xf32>, vector<1x32xf32> -> vector<4x32xf32>
    %224 = tpu.iota {dimensions = array<i32: 0>} : vector<4x1xi32>
    %c1_i32_85 = arith.constant 1 : i32
    %225 = vector.broadcast %c1_i32_85 : i32 to vector<4x1xi32>
    %226 = arith.andi %224, %225 : vector<4x1xi32>
    %c1_i32_86 = arith.constant 1 : i32
    %227 = vector.broadcast %c1_i32_86 : i32 to vector<4x1xi32>
    %228 = arith.addi %226, %227 : vector<4x1xi32>
    %c0_i32_87 = arith.constant 0 : i32
    %229 = vector.broadcast %c0_i32_87 : i32 to vector<4x1xi32>
    %230 = arith.cmpi sge, %228, %229 : vector<4x1xi32>
    %c1_i32_88 = arith.constant 1 : i32
    %231 = vector.broadcast %c1_i32_88 : i32 to vector<4x1xi32>
    %232 = arith.addi %226, %231 : vector<4x1xi32>
    %c2_i32_89 = arith.constant 2 : i32
    %233 = vector.broadcast %c2_i32_89 : i32 to vector<4x1xi32>
    %234 = arith.cmpi slt, %232, %233 : vector<4x1xi32>
    %235 = arith.andi %230, %234 : vector<4x1xi1>
    %cst_90 = arith.constant 0.000000e+00 : f32
    %236 = vector.shape_cast %235 : vector<4x1xi1> to vector<4x1xi1>
    %237 = vector.broadcast %236 : vector<4x1xi1> to vector<4x32xi1>
    %238 = vector.broadcast %cst_90 : f32 to vector<4x32xf32>
    %239 = arith.select %237, %223, %238 : vector<4x32xi1>, vector<4x32xf32>
    %240 = tpu.concatenate %220, %201, %239 in 1 : vector<4x32xf32>, vector<4x32xf32>, vector<4x32xf32> -> vector<4x96xf32>
    %c0_91 = arith.constant 0 : index
    %c0_92 = arith.constant 0 : index
    %241 = vector.load %arg8[%c0_91, %c0_92] : memref<97x16xbf16, #tpu.memory_space<vmem>>, vector<96x16xbf16>
    %c96 = arith.constant 96 : index
    %c0_93 = arith.constant 0 : index
    %242 = vector.load %arg8[%c96, %c0_93] : memref<97x16xbf16, #tpu.memory_space<vmem>>, vector<1x16xbf16>
    %243 = arith.extf %242 : vector<1x16xbf16> to vector<1x16xf32>
    %244 = arith.truncf %240 : vector<4x96xf32> to vector<4x96xbf16>
    %cst_94 = arith.constant dense<0.000000e+00> : vector<4x16xf32>
    %245 = tpu.matmul %244, %241, %cst_94 {dimension_numbers = #tpu.dot_dimension_numbers<[1], [0], [0], [1], [0, 0, 1, 1], [], []>} : vector<4x96xbf16>, vector<96x16xbf16>, vector<4x16xf32> -> vector<4x16xf32>
    %246 = vector.broadcast %243 : vector<1x16xf32> to vector<4x16xf32>
    %247 = arith.addf %245, %246 : vector<4x16xf32>
    %cst_95 = arith.constant 0.000000e+00 : f32
    %248 = vector.broadcast %cst_95 : f32 to vector<4x16xf32>
    %249 = arith.maximumf %247, %248 : vector<4x16xf32>
    %c0_96 = arith.constant 0 : index
    %c0_97 = arith.constant 0 : index
    %250 = vector.load %arg10[%c0_96, %c0_97] : memref<17x16xbf16, #tpu.memory_space<vmem>>, vector<16x16xbf16>
    %c16 = arith.constant 16 : index
    %c0_98 = arith.constant 0 : index
    %251 = vector.load %arg10[%c16, %c0_98] : memref<17x16xbf16, #tpu.memory_space<vmem>>, vector<1x16xbf16>
    %252 = arith.extf %251 : vector<1x16xbf16> to vector<1x16xf32>
    %253 = arith.truncf %249 : vector<4x16xf32> to vector<4x16xbf16>
    %cst_99 = arith.constant dense<0.000000e+00> : vector<4x16xf32>
    %254 = tpu.matmul %253, %250, %cst_99 {dimension_numbers = #tpu.dot_dimension_numbers<[1], [0], [0], [1], [0, 0, 1, 1], [], []>} : vector<4x16xbf16>, vector<16x16xbf16>, vector<4x16xf32> -> vector<4x16xf32>
    %255 = vector.broadcast %252 : vector<1x16xf32> to vector<4x16xf32>
    %256 = arith.addf %254, %255 : vector<4x16xf32>
    %cst_100 = arith.constant 0.000000e+00 : f32
    %257 = vector.broadcast %cst_100 : f32 to vector<4x16xf32>
    %258 = arith.maximumf %256, %257 : vector<4x16xf32>
    %cst_101 = arith.constant 0.000000e+00 : f32
    %259 = vector.broadcast %cst_101 : f32 to vector<1x16xf32>
    %260 = vector.extract_strided_slice %258 {offsets = [0, 0], sizes = [3, 16], strides = [1, 1]} : vector<4x16xf32> to vector<3x16xf32>
    %261 = tpu.concatenate %259, %260 in 0 : vector<1x16xf32>, vector<3x16xf32> -> vector<4x16xf32>
    %262 = tpu.iota {dimensions = array<i32: 0>} : vector<4x1xi32>
    %c1_i32_102 = arith.constant 1 : i32
    %263 = vector.broadcast %c1_i32_102 : i32 to vector<4x1xi32>
    %264 = arith.andi %262, %263 : vector<4x1xi32>
    %c-1_i32_103 = arith.constant -1 : i32
    %265 = vector.broadcast %c-1_i32_103 : i32 to vector<4x1xi32>
    %266 = arith.addi %264, %265 : vector<4x1xi32>
    %c0_i32_104 = arith.constant 0 : i32
    %267 = vector.broadcast %c0_i32_104 : i32 to vector<4x1xi32>
    %268 = arith.cmpi sge, %266, %267 : vector<4x1xi32>
    %c-1_i32_105 = arith.constant -1 : i32
    %269 = vector.broadcast %c-1_i32_105 : i32 to vector<4x1xi32>
    %270 = arith.addi %264, %269 : vector<4x1xi32>
    %c2_i32_106 = arith.constant 2 : i32
    %271 = vector.broadcast %c2_i32_106 : i32 to vector<4x1xi32>
    %272 = arith.cmpi slt, %270, %271 : vector<4x1xi32>
    %273 = arith.andi %268, %272 : vector<4x1xi1>
    %cst_107 = arith.constant 0.000000e+00 : f32
    %274 = vector.shape_cast %273 : vector<4x1xi1> to vector<4x1xi1>
    %275 = vector.broadcast %274 : vector<4x1xi1> to vector<4x16xi1>
    %276 = vector.broadcast %cst_107 : f32 to vector<4x16xf32>
    %277 = arith.select %275, %261, %276 : vector<4x16xi1>, vector<4x16xf32>
    %cst_108 = arith.constant 0.000000e+00 : f32
    %278 = vector.broadcast %cst_108 : f32 to vector<1x16xf32>
    %279 = vector.extract_strided_slice %249 {offsets = [0, 0], sizes = [3, 16], strides = [1, 1]} : vector<4x16xf32> to vector<3x16xf32>
    %280 = tpu.concatenate %278, %279 in 0 : vector<1x16xf32>, vector<3x16xf32> -> vector<4x16xf32>
    %281 = tpu.iota {dimensions = array<i32: 0>} : vector<4x1xi32>
    %c1_i32_109 = arith.constant 1 : i32
    %282 = vector.broadcast %c1_i32_109 : i32 to vector<4x1xi32>
    %283 = arith.andi %281, %282 : vector<4x1xi32>
    %c-1_i32_110 = arith.constant -1 : i32
    %284 = vector.broadcast %c-1_i32_110 : i32 to vector<4x1xi32>
    %285 = arith.addi %283, %284 : vector<4x1xi32>
    %c0_i32_111 = arith.constant 0 : i32
    %286 = vector.broadcast %c0_i32_111 : i32 to vector<4x1xi32>
    %287 = arith.cmpi sge, %285, %286 : vector<4x1xi32>
    %c-1_i32_112 = arith.constant -1 : i32
    %288 = vector.broadcast %c-1_i32_112 : i32 to vector<4x1xi32>
    %289 = arith.addi %283, %288 : vector<4x1xi32>
    %c2_i32_113 = arith.constant 2 : i32
    %290 = vector.broadcast %c2_i32_113 : i32 to vector<4x1xi32>
    %291 = arith.cmpi slt, %289, %290 : vector<4x1xi32>
    %292 = arith.andi %287, %291 : vector<4x1xi1>
    %cst_114 = arith.constant 0.000000e+00 : f32
    %293 = vector.shape_cast %292 : vector<4x1xi1> to vector<4x1xi1>
    %294 = vector.broadcast %293 : vector<4x1xi1> to vector<4x16xi1>
    %295 = vector.broadcast %cst_114 : f32 to vector<4x16xf32>
    %296 = arith.select %294, %280, %295 : vector<4x16xi1>, vector<4x16xf32>
    %cst_115 = arith.constant 0.000000e+00 : f32
    %297 = vector.broadcast %cst_115 : f32 to vector<1x16xf32>
    %298 = vector.extract_strided_slice %258 {offsets = [1, 0], sizes = [3, 16], strides = [1, 1]} : vector<4x16xf32> to vector<3x16xf32>
    %299 = tpu.concatenate %298, %297 in 0 : vector<3x16xf32>, vector<1x16xf32> -> vector<4x16xf32>
    %300 = tpu.iota {dimensions = array<i32: 0>} : vector<4x1xi32>
    %c1_i32_116 = arith.constant 1 : i32
    %301 = vector.broadcast %c1_i32_116 : i32 to vector<4x1xi32>
    %302 = arith.andi %300, %301 : vector<4x1xi32>
    %c1_i32_117 = arith.constant 1 : i32
    %303 = vector.broadcast %c1_i32_117 : i32 to vector<4x1xi32>
    %304 = arith.addi %302, %303 : vector<4x1xi32>
    %c0_i32_118 = arith.constant 0 : i32
    %305 = vector.broadcast %c0_i32_118 : i32 to vector<4x1xi32>
    %306 = arith.cmpi sge, %304, %305 : vector<4x1xi32>
    %c1_i32_119 = arith.constant 1 : i32
    %307 = vector.broadcast %c1_i32_119 : i32 to vector<4x1xi32>
    %308 = arith.addi %302, %307 : vector<4x1xi32>
    %c2_i32_120 = arith.constant 2 : i32
    %309 = vector.broadcast %c2_i32_120 : i32 to vector<4x1xi32>
    %310 = arith.cmpi slt, %308, %309 : vector<4x1xi32>
    %311 = arith.andi %306, %310 : vector<4x1xi1>
    %cst_121 = arith.constant 0.000000e+00 : f32
    %312 = vector.shape_cast %311 : vector<4x1xi1> to vector<4x1xi1>
    %313 = vector.broadcast %312 : vector<4x1xi1> to vector<4x16xi1>
    %314 = vector.broadcast %cst_121 : f32 to vector<4x16xf32>
    %315 = arith.select %313, %299, %314 : vector<4x16xi1>, vector<4x16xf32>
    %cst_122 = arith.constant 0.000000e+00 : f32
    %316 = vector.broadcast %cst_122 : f32 to vector<1x16xf32>
    %317 = vector.extract_strided_slice %249 {offsets = [1, 0], sizes = [3, 16], strides = [1, 1]} : vector<4x16xf32> to vector<3x16xf32>
    %318 = tpu.concatenate %317, %316 in 0 : vector<3x16xf32>, vector<1x16xf32> -> vector<4x16xf32>
    %319 = tpu.iota {dimensions = array<i32: 0>} : vector<4x1xi32>
    %c1_i32_123 = arith.constant 1 : i32
    %320 = vector.broadcast %c1_i32_123 : i32 to vector<4x1xi32>
    %321 = arith.andi %319, %320 : vector<4x1xi32>
    %c1_i32_124 = arith.constant 1 : i32
    %322 = vector.broadcast %c1_i32_124 : i32 to vector<4x1xi32>
    %323 = arith.addi %321, %322 : vector<4x1xi32>
    %c0_i32_125 = arith.constant 0 : i32
    %324 = vector.broadcast %c0_i32_125 : i32 to vector<4x1xi32>
    %325 = arith.cmpi sge, %323, %324 : vector<4x1xi32>
    %c1_i32_126 = arith.constant 1 : i32
    %326 = vector.broadcast %c1_i32_126 : i32 to vector<4x1xi32>
    %327 = arith.addi %321, %326 : vector<4x1xi32>
    %c2_i32_127 = arith.constant 2 : i32
    %328 = vector.broadcast %c2_i32_127 : i32 to vector<4x1xi32>
    %329 = arith.cmpi slt, %327, %328 : vector<4x1xi32>
    %330 = arith.andi %325, %329 : vector<4x1xi1>
    %cst_128 = arith.constant 0.000000e+00 : f32
    %331 = vector.shape_cast %330 : vector<4x1xi1> to vector<4x1xi1>
    %332 = vector.broadcast %331 : vector<4x1xi1> to vector<4x16xi1>
    %333 = vector.broadcast %cst_128 : f32 to vector<4x16xf32>
    %334 = arith.select %332, %318, %333 : vector<4x16xi1>, vector<4x16xf32>
    %335 = tpu.concatenate %277, %296, %258, %249, %315, %334 in 1 : vector<4x16xf32>, vector<4x16xf32>, vector<4x16xf32>, vector<4x16xf32>, vector<4x16xf32>, vector<4x16xf32> -> vector<4x96xf32>
    %c0_129 = arith.constant 0 : index
    %c0_130 = arith.constant 0 : index
    %336 = vector.load %arg9[%c0_129, %c0_130] : memref<97x16xbf16, #tpu.memory_space<vmem>>, vector<96x16xbf16>
    %c96_131 = arith.constant 96 : index
    %c0_132 = arith.constant 0 : index
    %337 = vector.load %arg9[%c96_131, %c0_132] : memref<97x16xbf16, #tpu.memory_space<vmem>>, vector<1x16xbf16>
    %338 = arith.extf %337 : vector<1x16xbf16> to vector<1x16xf32>
    %339 = arith.truncf %335 : vector<4x96xf32> to vector<4x96xbf16>
    %cst_133 = arith.constant dense<0.000000e+00> : vector<4x16xf32>
    %340 = tpu.matmul %339, %336, %cst_133 {dimension_numbers = #tpu.dot_dimension_numbers<[1], [0], [0], [1], [0, 0, 1, 1], [], []>} : vector<4x96xbf16>, vector<96x16xbf16>, vector<4x16xf32> -> vector<4x16xf32>
    %341 = vector.broadcast %338 : vector<1x16xf32> to vector<4x16xf32>
    %342 = arith.addf %340, %341 : vector<4x16xf32>
    %cst_134 = arith.constant 0.000000e+00 : f32
    %343 = vector.broadcast %cst_134 : f32 to vector<4x16xf32>
    %344 = arith.maximumf %342, %343 : vector<4x16xf32>
    %c0_135 = arith.constant 0 : index
    %c0_136 = arith.constant 0 : index
    %345 = vector.load %arg17[%c0_135, %c0_136] : memref<8x4xbf16, #tpu.memory_space<vmem>>, vector<8x4xbf16>
    %346 = arith.truncf %344 : vector<4x16xf32> to vector<4x16xbf16>
    %cst_137 = arith.constant dense<0.000000e+00> : vector<8x16xf32>
    %347 = tpu.matmul %345, %346, %cst_137 {dimension_numbers = #tpu.dot_dimension_numbers<[1], [0], [0], [1], [0, 0, 1, 1], [], []>} : vector<8x4xbf16>, vector<4x16xbf16>, vector<8x16xf32> -> vector<8x16xf32>
    %cst_138 = arith.constant 0.000000e+00 : f32
    %348 = vector.broadcast %cst_138 : f32 to vector<1x16xf32>
    %349 = vector.extract_strided_slice %347 {offsets = [0, 0], sizes = [7, 16], strides = [1, 1]} : vector<8x16xf32> to vector<7x16xf32>
    %350 = tpu.concatenate %348, %349 in 0 : vector<1x16xf32>, vector<7x16xf32> -> vector<8x16xf32>
    %351 = tpu.iota {dimensions = array<i32: 0>} : vector<8x1xi32>
    %c3_i32_139 = arith.constant 3 : i32
    %352 = vector.broadcast %c3_i32_139 : i32 to vector<8x1xi32>
    %353 = arith.andi %351, %352 : vector<8x1xi32>
    %c-1_i32_140 = arith.constant -1 : i32
    %354 = vector.broadcast %c-1_i32_140 : i32 to vector<8x1xi32>
    %355 = arith.addi %353, %354 : vector<8x1xi32>
    %c0_i32_141 = arith.constant 0 : i32
    %356 = vector.broadcast %c0_i32_141 : i32 to vector<8x1xi32>
    %357 = arith.cmpi sge, %355, %356 : vector<8x1xi32>
    %c-1_i32_142 = arith.constant -1 : i32
    %358 = vector.broadcast %c-1_i32_142 : i32 to vector<8x1xi32>
    %359 = arith.addi %353, %358 : vector<8x1xi32>
    %c4_i32_143 = arith.constant 4 : i32
    %360 = vector.broadcast %c4_i32_143 : i32 to vector<8x1xi32>
    %361 = arith.cmpi slt, %359, %360 : vector<8x1xi32>
    %362 = arith.andi %357, %361 : vector<8x1xi1>
    %cst_144 = arith.constant 0.000000e+00 : f32
    %363 = vector.shape_cast %362 : vector<8x1xi1> to vector<8x1xi1>
    %364 = vector.broadcast %363 : vector<8x1xi1> to vector<8x16xi1>
    %365 = vector.broadcast %cst_144 : f32 to vector<8x16xf32>
    %366 = arith.select %364, %350, %365 : vector<8x16xi1>, vector<8x16xf32>
    %cst_145 = arith.constant 0.000000e+00 : f32
    %367 = vector.broadcast %cst_145 : f32 to vector<1x32xf32>
    %368 = vector.extract_strided_slice %198 {offsets = [0, 0], sizes = [7, 32], strides = [1, 1]} : vector<8x32xf32> to vector<7x32xf32>
    %369 = tpu.concatenate %367, %368 in 0 : vector<1x32xf32>, vector<7x32xf32> -> vector<8x32xf32>
    %370 = tpu.iota {dimensions = array<i32: 0>} : vector<8x1xi32>
    %c3_i32_146 = arith.constant 3 : i32
    %371 = vector.broadcast %c3_i32_146 : i32 to vector<8x1xi32>
    %372 = arith.andi %370, %371 : vector<8x1xi32>
    %c-1_i32_147 = arith.constant -1 : i32
    %373 = vector.broadcast %c-1_i32_147 : i32 to vector<8x1xi32>
    %374 = arith.addi %372, %373 : vector<8x1xi32>
    %c0_i32_148 = arith.constant 0 : i32
    %375 = vector.broadcast %c0_i32_148 : i32 to vector<8x1xi32>
    %376 = arith.cmpi sge, %374, %375 : vector<8x1xi32>
    %c-1_i32_149 = arith.constant -1 : i32
    %377 = vector.broadcast %c-1_i32_149 : i32 to vector<8x1xi32>
    %378 = arith.addi %372, %377 : vector<8x1xi32>
    %c4_i32_150 = arith.constant 4 : i32
    %379 = vector.broadcast %c4_i32_150 : i32 to vector<8x1xi32>
    %380 = arith.cmpi slt, %378, %379 : vector<8x1xi32>
    %381 = arith.andi %376, %380 : vector<8x1xi1>
    %cst_151 = arith.constant 0.000000e+00 : f32
    %382 = vector.shape_cast %381 : vector<8x1xi1> to vector<8x1xi1>
    %383 = vector.broadcast %382 : vector<8x1xi1> to vector<8x32xi1>
    %384 = vector.broadcast %cst_151 : f32 to vector<8x32xf32>
    %385 = arith.select %383, %369, %384 : vector<8x32xi1>, vector<8x32xf32>
    %cst_152 = arith.constant 0.000000e+00 : f32
    %386 = vector.broadcast %cst_152 : f32 to vector<1x16xf32>
    %387 = vector.extract_strided_slice %347 {offsets = [1, 0], sizes = [7, 16], strides = [1, 1]} : vector<8x16xf32> to vector<7x16xf32>
    %388 = tpu.concatenate %387, %386 in 0 : vector<7x16xf32>, vector<1x16xf32> -> vector<8x16xf32>
    %389 = tpu.iota {dimensions = array<i32: 0>} : vector<8x1xi32>
    %c3_i32_153 = arith.constant 3 : i32
    %390 = vector.broadcast %c3_i32_153 : i32 to vector<8x1xi32>
    %391 = arith.andi %389, %390 : vector<8x1xi32>
    %c1_i32_154 = arith.constant 1 : i32
    %392 = vector.broadcast %c1_i32_154 : i32 to vector<8x1xi32>
    %393 = arith.addi %391, %392 : vector<8x1xi32>
    %c0_i32_155 = arith.constant 0 : i32
    %394 = vector.broadcast %c0_i32_155 : i32 to vector<8x1xi32>
    %395 = arith.cmpi sge, %393, %394 : vector<8x1xi32>
    %c1_i32_156 = arith.constant 1 : i32
    %396 = vector.broadcast %c1_i32_156 : i32 to vector<8x1xi32>
    %397 = arith.addi %391, %396 : vector<8x1xi32>
    %c4_i32_157 = arith.constant 4 : i32
    %398 = vector.broadcast %c4_i32_157 : i32 to vector<8x1xi32>
    %399 = arith.cmpi slt, %397, %398 : vector<8x1xi32>
    %400 = arith.andi %395, %399 : vector<8x1xi1>
    %cst_158 = arith.constant 0.000000e+00 : f32
    %401 = vector.shape_cast %400 : vector<8x1xi1> to vector<8x1xi1>
    %402 = vector.broadcast %401 : vector<8x1xi1> to vector<8x16xi1>
    %403 = vector.broadcast %cst_158 : f32 to vector<8x16xf32>
    %404 = arith.select %402, %388, %403 : vector<8x16xi1>, vector<8x16xf32>
    %cst_159 = arith.constant 0.000000e+00 : f32
    %405 = vector.broadcast %cst_159 : f32 to vector<1x32xf32>
    %406 = vector.extract_strided_slice %198 {offsets = [1, 0], sizes = [7, 32], strides = [1, 1]} : vector<8x32xf32> to vector<7x32xf32>
    %407 = tpu.concatenate %406, %405 in 0 : vector<7x32xf32>, vector<1x32xf32> -> vector<8x32xf32>
    %408 = tpu.iota {dimensions = array<i32: 0>} : vector<8x1xi32>
    %c3_i32_160 = arith.constant 3 : i32
    %409 = vector.broadcast %c3_i32_160 : i32 to vector<8x1xi32>
    %410 = arith.andi %408, %409 : vector<8x1xi32>
    %c1_i32_161 = arith.constant 1 : i32
    %411 = vector.broadcast %c1_i32_161 : i32 to vector<8x1xi32>
    %412 = arith.addi %410, %411 : vector<8x1xi32>
    %c0_i32_162 = arith.constant 0 : i32
    %413 = vector.broadcast %c0_i32_162 : i32 to vector<8x1xi32>
    %414 = arith.cmpi sge, %412, %413 : vector<8x1xi32>
    %c1_i32_163 = arith.constant 1 : i32
    %415 = vector.broadcast %c1_i32_163 : i32 to vector<8x1xi32>
    %416 = arith.addi %410, %415 : vector<8x1xi32>
    %c4_i32_164 = arith.constant 4 : i32
    %417 = vector.broadcast %c4_i32_164 : i32 to vector<8x1xi32>
    %418 = arith.cmpi slt, %416, %417 : vector<8x1xi32>
    %419 = arith.andi %414, %418 : vector<8x1xi1>
    %cst_165 = arith.constant 0.000000e+00 : f32
    %420 = vector.shape_cast %419 : vector<8x1xi1> to vector<8x1xi1>
    %421 = vector.broadcast %420 : vector<8x1xi1> to vector<8x32xi1>
    %422 = vector.broadcast %cst_165 : f32 to vector<8x32xf32>
    %423 = arith.select %421, %407, %422 : vector<8x32xi1>, vector<8x32xf32>
    %424 = tpu.concatenate %366, %385, %347, %198, %404, %423 in 1 : vector<8x16xf32>, vector<8x32xf32>, vector<8x16xf32>, vector<8x32xf32>, vector<8x16xf32>, vector<8x32xf32> -> vector<8x144xf32>
    %c0_166 = arith.constant 0 : index
    %c0_167 = arith.constant 0 : index
    %425 = vector.load %arg7[%c0_166, %c0_167] : memref<145x32xbf16, #tpu.memory_space<vmem>>, vector<144x32xbf16>
    %c144 = arith.constant 144 : index
    %c0_168 = arith.constant 0 : index
    %426 = vector.load %arg7[%c144, %c0_168] : memref<145x32xbf16, #tpu.memory_space<vmem>>, vector<1x32xbf16>
    %427 = arith.extf %426 : vector<1x32xbf16> to vector<1x32xf32>
    %428 = arith.truncf %424 : vector<8x144xf32> to vector<8x144xbf16>
    %cst_169 = arith.constant dense<0.000000e+00> : vector<8x32xf32>
    %429 = tpu.matmul %428, %425, %cst_169 {dimension_numbers = #tpu.dot_dimension_numbers<[1], [0], [0], [1], [0, 0, 1, 1], [], []>} : vector<8x144xbf16>, vector<144x32xbf16>, vector<8x32xf32> -> vector<8x32xf32>
    %430 = vector.broadcast %427 : vector<1x32xf32> to vector<8x32xf32>
    %431 = arith.addf %429, %430 : vector<8x32xf32>
    %cst_170 = arith.constant 0.000000e+00 : f32
    %432 = vector.broadcast %cst_170 : f32 to vector<8x32xf32>
    %433 = arith.maximumf %431, %432 : vector<8x32xf32>
    %c0_171 = arith.constant 0 : index
    %c0_172 = arith.constant 0 : index
    %434 = vector.load %arg16[%c0_171, %c0_172] : memref<16x8xbf16, #tpu.memory_space<vmem>>, vector<16x8xbf16>
    %435 = arith.truncf %433 : vector<8x32xf32> to vector<8x32xbf16>
    %cst_173 = arith.constant dense<0.000000e+00> : vector<16x32xf32>
    %436 = tpu.matmul %434, %435, %cst_173 {dimension_numbers = #tpu.dot_dimension_numbers<[1], [0], [0], [1], [0, 0, 1, 1], [], []>} : vector<16x8xbf16>, vector<8x32xbf16>, vector<16x32xf32> -> vector<16x32xf32>
    %cst_174 = arith.constant 0.000000e+00 : f32
    %437 = vector.broadcast %cst_174 : f32 to vector<1x32xf32>
    %438 = vector.extract_strided_slice %436 {offsets = [0, 0], sizes = [15, 32], strides = [1, 1]} : vector<16x32xf32> to vector<15x32xf32>
    %439 = tpu.concatenate %437, %438 in 0 : vector<1x32xf32>, vector<15x32xf32> -> vector<16x32xf32>
    %440 = tpu.iota {dimensions = array<i32: 0>} : vector<16x1xi32>
    %c7_i32_175 = arith.constant 7 : i32
    %441 = vector.broadcast %c7_i32_175 : i32 to vector<16x1xi32>
    %442 = arith.andi %440, %441 : vector<16x1xi32>
    %c-1_i32_176 = arith.constant -1 : i32
    %443 = vector.broadcast %c-1_i32_176 : i32 to vector<16x1xi32>
    %444 = arith.addi %442, %443 : vector<16x1xi32>
    %c0_i32_177 = arith.constant 0 : i32
    %445 = vector.broadcast %c0_i32_177 : i32 to vector<16x1xi32>
    %446 = arith.cmpi sge, %444, %445 : vector<16x1xi32>
    %c-1_i32_178 = arith.constant -1 : i32
    %447 = vector.broadcast %c-1_i32_178 : i32 to vector<16x1xi32>
    %448 = arith.addi %442, %447 : vector<16x1xi32>
    %c8_i32_179 = arith.constant 8 : i32
    %449 = vector.broadcast %c8_i32_179 : i32 to vector<16x1xi32>
    %450 = arith.cmpi slt, %448, %449 : vector<16x1xi32>
    %451 = arith.andi %446, %450 : vector<16x1xi1>
    %cst_180 = arith.constant 0.000000e+00 : f32
    %452 = vector.shape_cast %451 : vector<16x1xi1> to vector<16x1xi1>
    %453 = vector.broadcast %452 : vector<16x1xi1> to vector<16x32xi1>
    %454 = vector.broadcast %cst_180 : f32 to vector<16x32xf32>
    %455 = arith.select %453, %439, %454 : vector<16x32xi1>, vector<16x32xf32>
    %cst_181 = arith.constant 0.000000e+00 : f32
    %456 = vector.broadcast %cst_181 : f32 to vector<1x64xf32>
    %457 = vector.extract_strided_slice %147 {offsets = [0, 0], sizes = [15, 64], strides = [1, 1]} : vector<16x64xf32> to vector<15x64xf32>
    %458 = tpu.concatenate %456, %457 in 0 : vector<1x64xf32>, vector<15x64xf32> -> vector<16x64xf32>
    %459 = tpu.iota {dimensions = array<i32: 0>} : vector<16x1xi32>
    %c7_i32_182 = arith.constant 7 : i32
    %460 = vector.broadcast %c7_i32_182 : i32 to vector<16x1xi32>
    %461 = arith.andi %459, %460 : vector<16x1xi32>
    %c-1_i32_183 = arith.constant -1 : i32
    %462 = vector.broadcast %c-1_i32_183 : i32 to vector<16x1xi32>
    %463 = arith.addi %461, %462 : vector<16x1xi32>
    %c0_i32_184 = arith.constant 0 : i32
    %464 = vector.broadcast %c0_i32_184 : i32 to vector<16x1xi32>
    %465 = arith.cmpi sge, %463, %464 : vector<16x1xi32>
    %c-1_i32_185 = arith.constant -1 : i32
    %466 = vector.broadcast %c-1_i32_185 : i32 to vector<16x1xi32>
    %467 = arith.addi %461, %466 : vector<16x1xi32>
    %c8_i32_186 = arith.constant 8 : i32
    %468 = vector.broadcast %c8_i32_186 : i32 to vector<16x1xi32>
    %469 = arith.cmpi slt, %467, %468 : vector<16x1xi32>
    %470 = arith.andi %465, %469 : vector<16x1xi1>
    %cst_187 = arith.constant 0.000000e+00 : f32
    %471 = vector.shape_cast %470 : vector<16x1xi1> to vector<16x1xi1>
    %472 = vector.broadcast %471 : vector<16x1xi1> to vector<16x64xi1>
    %473 = vector.broadcast %cst_187 : f32 to vector<16x64xf32>
    %474 = arith.select %472, %458, %473 : vector<16x64xi1>, vector<16x64xf32>
    %cst_188 = arith.constant 0.000000e+00 : f32
    %475 = vector.broadcast %cst_188 : f32 to vector<1x32xf32>
    %476 = vector.extract_strided_slice %436 {offsets = [1, 0], sizes = [15, 32], strides = [1, 1]} : vector<16x32xf32> to vector<15x32xf32>
    %477 = tpu.concatenate %476, %475 in 0 : vector<15x32xf32>, vector<1x32xf32> -> vector<16x32xf32>
    %478 = tpu.iota {dimensions = array<i32: 0>} : vector<16x1xi32>
    %c7_i32_189 = arith.constant 7 : i32
    %479 = vector.broadcast %c7_i32_189 : i32 to vector<16x1xi32>
    %480 = arith.andi %478, %479 : vector<16x1xi32>
    %c1_i32_190 = arith.constant 1 : i32
    %481 = vector.broadcast %c1_i32_190 : i32 to vector<16x1xi32>
    %482 = arith.addi %480, %481 : vector<16x1xi32>
    %c0_i32_191 = arith.constant 0 : i32
    %483 = vector.broadcast %c0_i32_191 : i32 to vector<16x1xi32>
    %484 = arith.cmpi sge, %482, %483 : vector<16x1xi32>
    %c1_i32_192 = arith.constant 1 : i32
    %485 = vector.broadcast %c1_i32_192 : i32 to vector<16x1xi32>
    %486 = arith.addi %480, %485 : vector<16x1xi32>
    %c8_i32_193 = arith.constant 8 : i32
    %487 = vector.broadcast %c8_i32_193 : i32 to vector<16x1xi32>
    %488 = arith.cmpi slt, %486, %487 : vector<16x1xi32>
    %489 = arith.andi %484, %488 : vector<16x1xi1>
    %cst_194 = arith.constant 0.000000e+00 : f32
    %490 = vector.shape_cast %489 : vector<16x1xi1> to vector<16x1xi1>
    %491 = vector.broadcast %490 : vector<16x1xi1> to vector<16x32xi1>
    %492 = vector.broadcast %cst_194 : f32 to vector<16x32xf32>
    %493 = arith.select %491, %477, %492 : vector<16x32xi1>, vector<16x32xf32>
    %cst_195 = arith.constant 0.000000e+00 : f32
    %494 = vector.broadcast %cst_195 : f32 to vector<1x64xf32>
    %495 = vector.extract_strided_slice %147 {offsets = [1, 0], sizes = [15, 64], strides = [1, 1]} : vector<16x64xf32> to vector<15x64xf32>
    %496 = tpu.concatenate %495, %494 in 0 : vector<15x64xf32>, vector<1x64xf32> -> vector<16x64xf32>
    %497 = tpu.iota {dimensions = array<i32: 0>} : vector<16x1xi32>
    %c7_i32_196 = arith.constant 7 : i32
    %498 = vector.broadcast %c7_i32_196 : i32 to vector<16x1xi32>
    %499 = arith.andi %497, %498 : vector<16x1xi32>
    %c1_i32_197 = arith.constant 1 : i32
    %500 = vector.broadcast %c1_i32_197 : i32 to vector<16x1xi32>
    %501 = arith.addi %499, %500 : vector<16x1xi32>
    %c0_i32_198 = arith.constant 0 : i32
    %502 = vector.broadcast %c0_i32_198 : i32 to vector<16x1xi32>
    %503 = arith.cmpi sge, %501, %502 : vector<16x1xi32>
    %c1_i32_199 = arith.constant 1 : i32
    %504 = vector.broadcast %c1_i32_199 : i32 to vector<16x1xi32>
    %505 = arith.addi %499, %504 : vector<16x1xi32>
    %c8_i32_200 = arith.constant 8 : i32
    %506 = vector.broadcast %c8_i32_200 : i32 to vector<16x1xi32>
    %507 = arith.cmpi slt, %505, %506 : vector<16x1xi32>
    %508 = arith.andi %503, %507 : vector<16x1xi1>
    %cst_201 = arith.constant 0.000000e+00 : f32
    %509 = vector.shape_cast %508 : vector<16x1xi1> to vector<16x1xi1>
    %510 = vector.broadcast %509 : vector<16x1xi1> to vector<16x64xi1>
    %511 = vector.broadcast %cst_201 : f32 to vector<16x64xf32>
    %512 = arith.select %510, %496, %511 : vector<16x64xi1>, vector<16x64xf32>
    %513 = tpu.concatenate %455, %474, %436, %147, %493, %512 in 1 : vector<16x32xf32>, vector<16x64xf32>, vector<16x32xf32>, vector<16x64xf32>, vector<16x32xf32>, vector<16x64xf32> -> vector<16x288xf32>
    %c0_202 = arith.constant 0 : index
    %c0_203 = arith.constant 0 : index
    %514 = vector.load %arg5[%c0_202, %c0_203] : memref<289x64xbf16, #tpu.memory_space<vmem>>, vector<288x64xbf16>
    %c288 = arith.constant 288 : index
    %c0_204 = arith.constant 0 : index
    %515 = vector.load %arg5[%c288, %c0_204] : memref<289x64xbf16, #tpu.memory_space<vmem>>, vector<1x64xbf16>
    %516 = arith.extf %515 : vector<1x64xbf16> to vector<1x64xf32>
    %517 = arith.truncf %513 : vector<16x288xf32> to vector<16x288xbf16>
    %cst_205 = arith.constant dense<0.000000e+00> : vector<16x64xf32>
    %518 = tpu.matmul %517, %514, %cst_205 {dimension_numbers = #tpu.dot_dimension_numbers<[1], [0], [0], [1], [0, 0, 1, 1], [], []>} : vector<16x288xbf16>, vector<288x64xbf16>, vector<16x64xf32> -> vector<16x64xf32>
    %519 = vector.broadcast %516 : vector<1x64xf32> to vector<16x64xf32>
    %520 = arith.addf %518, %519 : vector<16x64xf32>
    %cst_206 = arith.constant 0.000000e+00 : f32
    %521 = vector.broadcast %cst_206 : f32 to vector<16x64xf32>
    %522 = arith.maximumf %520, %521 : vector<16x64xf32>
    %c0_207 = arith.constant 0 : index
    %c0_208 = arith.constant 0 : index
    %523 = vector.load %arg15[%c0_207, %c0_208] : memref<32x16xbf16, #tpu.memory_space<vmem>>, vector<32x16xbf16>
    %524 = arith.truncf %522 : vector<16x64xf32> to vector<16x64xbf16>
    %cst_209 = arith.constant dense<0.000000e+00> : vector<32x64xf32>
    %525 = tpu.matmul %523, %524, %cst_209 {dimension_numbers = #tpu.dot_dimension_numbers<[1], [0], [0], [1], [0, 0, 1, 1], [], []>} : vector<32x16xbf16>, vector<16x64xbf16>, vector<32x64xf32> -> vector<32x64xf32>
    %cst_210 = arith.constant 0.000000e+00 : f32
    %526 = vector.broadcast %cst_210 : f32 to vector<1x64xf32>
    %527 = vector.extract_strided_slice %525 {offsets = [0, 0], sizes = [31, 64], strides = [1, 1]} : vector<32x64xf32> to vector<31x64xf32>
    %528 = tpu.concatenate %526, %527 in 0 : vector<1x64xf32>, vector<31x64xf32> -> vector<32x64xf32>
    %529 = tpu.iota {dimensions = array<i32: 0>} : vector<32x1xi32>
    %c15_i32_211 = arith.constant 15 : i32
    %530 = vector.broadcast %c15_i32_211 : i32 to vector<32x1xi32>
    %531 = arith.andi %529, %530 : vector<32x1xi32>
    %c-1_i32_212 = arith.constant -1 : i32
    %532 = vector.broadcast %c-1_i32_212 : i32 to vector<32x1xi32>
    %533 = arith.addi %531, %532 : vector<32x1xi32>
    %c0_i32_213 = arith.constant 0 : i32
    %534 = vector.broadcast %c0_i32_213 : i32 to vector<32x1xi32>
    %535 = arith.cmpi sge, %533, %534 : vector<32x1xi32>
    %c-1_i32_214 = arith.constant -1 : i32
    %536 = vector.broadcast %c-1_i32_214 : i32 to vector<32x1xi32>
    %537 = arith.addi %531, %536 : vector<32x1xi32>
    %c16_i32_215 = arith.constant 16 : i32
    %538 = vector.broadcast %c16_i32_215 : i32 to vector<32x1xi32>
    %539 = arith.cmpi slt, %537, %538 : vector<32x1xi32>
    %540 = arith.andi %535, %539 : vector<32x1xi1>
    %cst_216 = arith.constant 0.000000e+00 : f32
    %541 = vector.shape_cast %540 : vector<32x1xi1> to vector<32x1xi1>
    %542 = vector.broadcast %541 : vector<32x1xi1> to vector<32x64xi1>
    %543 = vector.broadcast %cst_216 : f32 to vector<32x64xf32>
    %544 = arith.select %542, %528, %543 : vector<32x64xi1>, vector<32x64xf32>
    %cst_217 = arith.constant 0.000000e+00 : f32
    %545 = vector.broadcast %cst_217 : f32 to vector<1x128xf32>
    %546 = vector.extract_strided_slice %96 {offsets = [0, 0], sizes = [31, 128], strides = [1, 1]} : vector<32x128xf32> to vector<31x128xf32>
    %547 = tpu.concatenate %545, %546 in 0 : vector<1x128xf32>, vector<31x128xf32> -> vector<32x128xf32>
    %548 = tpu.iota {dimensions = array<i32: 0>} : vector<32x1xi32>
    %c15_i32_218 = arith.constant 15 : i32
    %549 = vector.broadcast %c15_i32_218 : i32 to vector<32x1xi32>
    %550 = arith.andi %548, %549 : vector<32x1xi32>
    %c-1_i32_219 = arith.constant -1 : i32
    %551 = vector.broadcast %c-1_i32_219 : i32 to vector<32x1xi32>
    %552 = arith.addi %550, %551 : vector<32x1xi32>
    %c0_i32_220 = arith.constant 0 : i32
    %553 = vector.broadcast %c0_i32_220 : i32 to vector<32x1xi32>
    %554 = arith.cmpi sge, %552, %553 : vector<32x1xi32>
    %c-1_i32_221 = arith.constant -1 : i32
    %555 = vector.broadcast %c-1_i32_221 : i32 to vector<32x1xi32>
    %556 = arith.addi %550, %555 : vector<32x1xi32>
    %c16_i32_222 = arith.constant 16 : i32
    %557 = vector.broadcast %c16_i32_222 : i32 to vector<32x1xi32>
    %558 = arith.cmpi slt, %556, %557 : vector<32x1xi32>
    %559 = arith.andi %554, %558 : vector<32x1xi1>
    %cst_223 = arith.constant 0.000000e+00 : f32
    %560 = vector.shape_cast %559 : vector<32x1xi1> to vector<32x1xi1>
    %561 = vector.broadcast %560 : vector<32x1xi1> to vector<32x128xi1>
    %562 = vector.broadcast %cst_223 : f32 to vector<32x128xf32>
    %563 = arith.select %561, %547, %562 : vector<32x128xi1>, vector<32x128xf32>
    %cst_224 = arith.constant 0.000000e+00 : f32
    %564 = vector.broadcast %cst_224 : f32 to vector<1x64xf32>
    %565 = vector.extract_strided_slice %525 {offsets = [1, 0], sizes = [31, 64], strides = [1, 1]} : vector<32x64xf32> to vector<31x64xf32>
    %566 = tpu.concatenate %565, %564 in 0 : vector<31x64xf32>, vector<1x64xf32> -> vector<32x64xf32>
    %567 = tpu.iota {dimensions = array<i32: 0>} : vector<32x1xi32>
    %c15_i32_225 = arith.constant 15 : i32
    %568 = vector.broadcast %c15_i32_225 : i32 to vector<32x1xi32>
    %569 = arith.andi %567, %568 : vector<32x1xi32>
    %c1_i32_226 = arith.constant 1 : i32
    %570 = vector.broadcast %c1_i32_226 : i32 to vector<32x1xi32>
    %571 = arith.addi %569, %570 : vector<32x1xi32>
    %c0_i32_227 = arith.constant 0 : i32
    %572 = vector.broadcast %c0_i32_227 : i32 to vector<32x1xi32>
    %573 = arith.cmpi sge, %571, %572 : vector<32x1xi32>
    %c1_i32_228 = arith.constant 1 : i32
    %574 = vector.broadcast %c1_i32_228 : i32 to vector<32x1xi32>
    %575 = arith.addi %569, %574 : vector<32x1xi32>
    %c16_i32_229 = arith.constant 16 : i32
    %576 = vector.broadcast %c16_i32_229 : i32 to vector<32x1xi32>
    %577 = arith.cmpi slt, %575, %576 : vector<32x1xi32>
    %578 = arith.andi %573, %577 : vector<32x1xi1>
    %cst_230 = arith.constant 0.000000e+00 : f32
    %579 = vector.shape_cast %578 : vector<32x1xi1> to vector<32x1xi1>
    %580 = vector.broadcast %579 : vector<32x1xi1> to vector<32x64xi1>
    %581 = vector.broadcast %cst_230 : f32 to vector<32x64xf32>
    %582 = arith.select %580, %566, %581 : vector<32x64xi1>, vector<32x64xf32>
    %cst_231 = arith.constant 0.000000e+00 : f32
    %583 = vector.broadcast %cst_231 : f32 to vector<1x128xf32>
    %584 = vector.extract_strided_slice %96 {offsets = [1, 0], sizes = [31, 128], strides = [1, 1]} : vector<32x128xf32> to vector<31x128xf32>
    %585 = tpu.concatenate %584, %583 in 0 : vector<31x128xf32>, vector<1x128xf32> -> vector<32x128xf32>
    %586 = tpu.iota {dimensions = array<i32: 0>} : vector<32x1xi32>
    %c15_i32_232 = arith.constant 15 : i32
    %587 = vector.broadcast %c15_i32_232 : i32 to vector<32x1xi32>
    %588 = arith.andi %586, %587 : vector<32x1xi32>
    %c1_i32_233 = arith.constant 1 : i32
    %589 = vector.broadcast %c1_i32_233 : i32 to vector<32x1xi32>
    %590 = arith.addi %588, %589 : vector<32x1xi32>
    %c0_i32_234 = arith.constant 0 : i32
    %591 = vector.broadcast %c0_i32_234 : i32 to vector<32x1xi32>
    %592 = arith.cmpi sge, %590, %591 : vector<32x1xi32>
    %c1_i32_235 = arith.constant 1 : i32
    %593 = vector.broadcast %c1_i32_235 : i32 to vector<32x1xi32>
    %594 = arith.addi %588, %593 : vector<32x1xi32>
    %c16_i32_236 = arith.constant 16 : i32
    %595 = vector.broadcast %c16_i32_236 : i32 to vector<32x1xi32>
    %596 = arith.cmpi slt, %594, %595 : vector<32x1xi32>
    %597 = arith.andi %592, %596 : vector<32x1xi1>
    %cst_237 = arith.constant 0.000000e+00 : f32
    %598 = vector.shape_cast %597 : vector<32x1xi1> to vector<32x1xi1>
    %599 = vector.broadcast %598 : vector<32x1xi1> to vector<32x128xi1>
    %600 = vector.broadcast %cst_237 : f32 to vector<32x128xf32>
    %601 = arith.select %599, %585, %600 : vector<32x128xi1>, vector<32x128xf32>
    %602 = tpu.concatenate %544, %563, %525, %96, %582, %601 in 1 : vector<32x64xf32>, vector<32x128xf32>, vector<32x64xf32>, vector<32x128xf32>, vector<32x64xf32>, vector<32x128xf32> -> vector<32x576xf32>
    %c0_238 = arith.constant 0 : index
    %c0_239 = arith.constant 0 : index
    %603 = vector.load %arg3[%c0_238, %c0_239] : memref<577x64xbf16, #tpu.memory_space<vmem>>, vector<576x64xbf16>
    %c576 = arith.constant 576 : index
    %c0_240 = arith.constant 0 : index
    %604 = vector.load %arg3[%c576, %c0_240] : memref<577x64xbf16, #tpu.memory_space<vmem>>, vector<1x64xbf16>
    %605 = arith.extf %604 : vector<1x64xbf16> to vector<1x64xf32>
    %606 = arith.truncf %602 : vector<32x576xf32> to vector<32x576xbf16>
    %cst_241 = arith.constant dense<0.000000e+00> : vector<32x64xf32>
    %607 = tpu.matmul %606, %603, %cst_241 {dimension_numbers = #tpu.dot_dimension_numbers<[1], [0], [0], [1], [0, 0, 1, 1], [], []>} : vector<32x576xbf16>, vector<576x64xbf16>, vector<32x64xf32> -> vector<32x64xf32>
    %608 = vector.broadcast %605 : vector<1x64xf32> to vector<32x64xf32>
    %609 = arith.addf %607, %608 : vector<32x64xf32>
    %cst_242 = arith.constant 0.000000e+00 : f32
    %610 = vector.broadcast %cst_242 : f32 to vector<32x64xf32>
    %611 = arith.maximumf %609, %610 : vector<32x64xf32>
    %612 = arith.addf %611, %48 : vector<32x64xf32>
    %c0_243 = arith.constant 0 : index
    %c0_244 = arith.constant 0 : index
    %613 = vector.load %arg18[%c0_243, %c0_244] : memref<32x64xf32, #tpu.memory_space<vmem>>, vector<32x64xf32>
    tpu.vector_store %arg18[%c0_243, %c0_244], %612 {strides = array<i32>} : memref<32x64xf32, #tpu.memory_space<vmem>>, vector<32x64xf32>,
    return
  }
  func.func @transform_0(%arg0: i32) -> (i32, i32) {
    %c0_i32 = arith.constant 0 : i32
    %c0_i32_0 = arith.constant 0 : i32
    return %arg0, %c0_i32 : i32, i32
  }
  func.func @transform_1(%arg0: i32) -> (i32, i32) {
    %c0_i32 = arith.constant 0 : i32
    %c0_i32_0 = arith.constant 0 : i32
    %c0_i32_1 = arith.constant 0 : i32
    return %c0_i32, %c0_i32_0 : i32, i32
  }
  func.func @transform_2(%arg0: i32) -> (i32, i32) {
    %c0_i32 = arith.constant 0 : i32
    %c0_i32_0 = arith.constant 0 : i32
    %c0_i32_1 = arith.constant 0 : i32
    return %c0_i32, %c0_i32_0 : i32, i32
  }
  func.func @transform_3(%arg0: i32) -> (i32, i32) {
    %c0_i32 = arith.constant 0 : i32
    %c0_i32_0 = arith.constant 0 : i32
    %c0_i32_1 = arith.constant 0 : i32
    return %c0_i32, %c0_i32_0 : i32, i32
  }
  func.func @transform_4(%arg0: i32) -> (i32, i32) {
    %c0_i32 = arith.constant 0 : i32
    %c0_i32_0 = arith.constant 0 : i32
    %c0_i32_1 = arith.constant 0 : i32
    return %c0_i32, %c0_i32_0 : i32, i32
  }
  func.func @transform_5(%arg0: i32) -> (i32, i32) {
    %c0_i32 = arith.constant 0 : i32
    %c0_i32_0 = arith.constant 0 : i32
    %c0_i32_1 = arith.constant 0 : i32
    return %c0_i32, %c0_i32_0 : i32, i32
  }
  func.func @transform_6(%arg0: i32) -> (i32, i32) {
    %c0_i32 = arith.constant 0 : i32
    %c0_i32_0 = arith.constant 0 : i32
    %c0_i32_1 = arith.constant 0 : i32
    return %c0_i32, %c0_i32_0 : i32, i32
  }
  func.func @transform_7(%arg0: i32) -> (i32, i32) {
    %c0_i32 = arith.constant 0 : i32
    %c0_i32_0 = arith.constant 0 : i32
    %c0_i32_1 = arith.constant 0 : i32
    return %c0_i32, %c0_i32_0 : i32, i32
  }
  func.func @transform_8(%arg0: i32) -> (i32, i32) {
    %c0_i32 = arith.constant 0 : i32
    %c0_i32_0 = arith.constant 0 : i32
    %c0_i32_1 = arith.constant 0 : i32
    return %c0_i32, %c0_i32_0 : i32, i32
  }
  func.func @transform_9(%arg0: i32) -> (i32, i32) {
    %c0_i32 = arith.constant 0 : i32
    %c0_i32_0 = arith.constant 0 : i32
    %c0_i32_1 = arith.constant 0 : i32
    return %c0_i32, %c0_i32_0 : i32, i32
  }
  func.func @transform_10(%arg0: i32) -> (i32, i32) {
    %c0_i32 = arith.constant 0 : i32
    %c0_i32_0 = arith.constant 0 : i32
    %c0_i32_1 = arith.constant 0 : i32
    return %c0_i32, %c0_i32_0 : i32, i32
  }
  func.func @transform_11(%arg0: i32) -> (i32, i32) {
    %c0_i32 = arith.constant 0 : i32
    %c0_i32_0 = arith.constant 0 : i32
    %c0_i32_1 = arith.constant 0 : i32
    return %c0_i32, %c0_i32_0 : i32, i32
  }
  func.func @transform_12(%arg0: i32) -> (i32, i32) {
    %c0_i32 = arith.constant 0 : i32
    %c0_i32_0 = arith.constant 0 : i32
    %c0_i32_1 = arith.constant 0 : i32
    return %c0_i32, %c0_i32_0 : i32, i32
  }
  func.func @transform_13(%arg0: i32) -> (i32, i32) {
    %c0_i32 = arith.constant 0 : i32
    %c0_i32_0 = arith.constant 0 : i32
    %c0_i32_1 = arith.constant 0 : i32
    return %c0_i32, %c0_i32_0 : i32, i32
  }
  func.func @transform_14(%arg0: i32) -> (i32, i32) {
    %c0_i32 = arith.constant 0 : i32
    %c0_i32_0 = arith.constant 0 : i32
    %c0_i32_1 = arith.constant 0 : i32
    return %c0_i32, %c0_i32_0 : i32, i32
  }
  func.func @transform_15(%arg0: i32) -> (i32, i32) {
    %c0_i32 = arith.constant 0 : i32
    %c0_i32_0 = arith.constant 0 : i32
    %c0_i32_1 = arith.constant 0 : i32
    return %c0_i32, %c0_i32_0 : i32, i32
  }
  func.func @transform_16(%arg0: i32) -> (i32, i32) {
    %c0_i32 = arith.constant 0 : i32
    %c0_i32_0 = arith.constant 0 : i32
    %c0_i32_1 = arith.constant 0 : i32
    return %c0_i32, %c0_i32_0 : i32, i32
  }
  func.func @transform_17(%arg0: i32) -> (i32, i32) {
    %c0_i32 = arith.constant 0 : i32
    %c0_i32_0 = arith.constant 0 : i32
    return %arg0, %c0_i32 : i32, i32
  }
}

</mosaic_0001>

<llo_original>
// kernel: rsu5_forward.1
$region0: #{rsu5_forward.1}
  #allocation0 [shape = 'u32[]', space=smem, size = 0x4, offset = 0x4, fixed_abs, tag = 'smem constant byte address 0x4 - core index']
  #allocation1 [shape = 'u32[144,128]{1,0:T(1,128)}', space=vmem, size = 0x12000, scoped, tag = 'internal scratch']
  %s0 = inlined_call_operand.vmem [shape: f32[32,64], index: 0, kind: input, shape index: {}]
  %s1 = inlined_call_operand.vmem [shape: bf16[193,128], index: 1, kind: input, shape index: {}]
  %s2 = inlined_call_operand.vmem [shape: bf16[577,64], index: 2, kind: input, shape index: {}]
  %s3 = inlined_call_operand.vmem [shape: bf16[385,64], index: 3, kind: input, shape index: {}]
  %s4 = inlined_call_operand.vmem [shape: bf16[289,64], index: 4, kind: input, shape index: {}]
  %s5 = inlined_call_operand.vmem [shape: bf16[193,32], index: 5, kind: input, shape index: {}]
  %s6 = inlined_call_operand.vmem [shape: bf16[145,32], index: 6, kind: input, shape index: {}]
  %s7 = inlined_call_operand.vmem [shape: bf16[97,16], index: 7, kind: input, shape index: {}]
  %s8 = inlined_call_operand.vmem [shape: bf16[97,16], index: 8, kind: input, shape index: {}]
  %s9 = inlined_call_operand.vmem [shape: bf16[17,16], index: 9, kind: input, shape index: {}]
  %s10 = inlined_call_operand.vmem [shape: bf16[193,64], index: 10, kind: input, shape index: {}]
  %s11 = inlined_call_operand.vmem [shape: bf16[16,32], index: 11, kind: input, shape index: {}]
  %s12 = inlined_call_operand.vmem [shape: bf16[8,16], index: 12, kind: input, shape index: {}]
  %s13 = inlined_call_operand.vmem [shape: bf16[4,8], index: 13, kind: input, shape index: {}]
  %s14 = inlined_call_operand.vmem [shape: bf16[32,16], index: 14, kind: input, shape index: {}]
  %s15 = inlined_call_operand.vmem [shape: bf16[16,8], index: 15, kind: input, shape index: {}]
  %s16 = inlined_call_operand.vmem [shape: bf16[8,4], index: 16, kind: input, shape index: {}]
  %s17 = inlined_call_operand.vmem [shape: f32[32,64], index: 17, kind: output, shape index: {}]
  %s18 = sld [smem:[#allocation0]]
  $region78: #{rsu5_forward.1} parent=0
    _
  %s20 = ssub.s32 1, %s18
  %s21 = scalar_select 0, %s20, %s18
  // Predicated region
  $region2: #{rsu5_forward.1} parent=0 // pred_check
    _
  $region3: #{rsu5_forward.1} parent=0 // pred_check_branch
    %23 = sbr.rel (0) target = $region5
  $region4: #{rsu5_forward.1} parent=0 // pred_region
    _
  $region5: #{rsu5_forward.1} parent=0 // pred_fallthru
    _
  // Predicated region
  $region6: #{rsu5_forward.1} parent=0 // pred_check
    _
  $region7: #{rsu5_forward.1} parent=0 // pred_check_branch
    %25 = sbr.rel (0) target = $region9
  $region8: #{rsu5_forward.1} parent=0 // pred_region
    _
  $region9: #{rsu5_forward.1} parent=0 // pred_fallthru
    _
  // Predicated region
  $region10: #{rsu5_forward.1} parent=0 // pred_check
    _
  $region11: #{rsu5_forward.1} parent=0 // pred_check_branch
    %27 = sbr.rel (0) target = $region13
  $region12: #{rsu5_forward.1} parent=0 // pred_region
    _
  $region13: #{rsu5_forward.1} parent=0 // pred_fallthru
    _
  // Predicated region
  $region14: #{rsu5_forward.1} parent=0 // pred_check
    _
  $region15: #{rsu5_forward.1} parent=0 // pred_check_branch
    %29 = sbr.rel (0) target = $region17
  $region16: #{rsu5_forward.1} parent=0 // pred_region
    _
  $region17: #{rsu5_forward.1} parent=0 // pred_fallthru
    _
  // Predicated region
  $region18: #{rsu5_forward.1} parent=0 // pred_check
    _
  $region19: #{rsu5_forward.1} parent=0 // pred_check_branch
    %31 = sbr.rel (0) target = $region21
  $region20: #{rsu5_forward.1} parent=0 // pred_region
    _
  $region21: #{rsu5_forward.1} parent=0 // pred_fallthru
    _
  // Predicated region
  $region22: #{rsu5_forward.1} parent=0 // pred_check
    _
  $region23: #{rsu5_forward.1} parent=0 // pred_check_branch
    %33 = sbr.rel (0) target = $region25
  $region24: #{rsu5_forward.1} parent=0 // pred_region
    _
  $region25: #{rsu5_forward.1} parent=0 // pred_fallthru
    _
  // Predicated region
  $region26: #{rsu5_forward.1} parent=0 // pred_check
    _
  $region27: #{rsu5_forward.1} parent=0 // pred_check_branch
    %35 = sbr.rel (0) target = $region29
  $region28: #{rsu5_forward.1} parent=0 // pred_region
    _
  $region29: #{rsu5_forward.1} parent=0 // pred_fallthru
    _
  // Predicated region
  $region30: #{rsu5_forward.1} parent=0 // pred_check
    _
  $region31: #{rsu5_forward.1} parent=0 // pred_check_branch
    %37 = sbr.rel (0) target = $region33
  $region32: #{rsu5_forward.1} parent=0 // pred_region
    _
  $region33: #{rsu5_forward.1} parent=0 // pred_fallthru
    _
  // Predicated region
  $region34: #{rsu5_forward.1} parent=0 // pred_check
    _
  $region35: #{rsu5_forward.1} parent=0 // pred_check_branch
    %39 = sbr.rel (0) target = $region37
  $region36: #{rsu5_forward.1} parent=0 // pred_region
    _
  $region37: #{rsu5_forward.1} parent=0 // pred_fallthru
    _
  // Predicated region
  $region38: #{rsu5_forward.1} parent=0 // pred_check
    _
  $region39: #{rsu5_forward.1} parent=0 // pred_check_branch
    %41 = sbr.rel (0) target = $region41
  $region40: #{rsu5_forward.1} parent=0 // pred_region
    _
  $region41: #{rsu5_forward.1} parent=0 // pred_fallthru
    _
  // Predicated region
  $region42: #{rsu5_forward.1} parent=0 // pred_check
    _
  $region43: #{rsu5_forward.1} parent=0 // pred_check_branch
    %43 = sbr.rel (0) target = $region45
  $region44: #{rsu5_forward.1} parent=0 // pred_region
    _
  $region45: #{rsu5_forward.1} parent=0 // pred_fallthru
    _
  // Predicated region
  $region46: #{rsu5_forward.1} parent=0 // pred_check
    _
  $region47: #{rsu5_forward.1} parent=0 // pred_check_branch
    %45 = sbr.rel (0) target = $region49
  $region48: #{rsu5_forward.1} parent=0 // pred_region
    _
  $region49: #{rsu5_forward.1} parent=0 // pred_fallthru
    _
  // Predicated region
  $region50: #{rsu5_forward.1} parent=0 // pred_check
    _
  $region51: #{rsu5_forward.1} parent=0 // pred_check_branch
    %47 = sbr.rel (0) target = $region53
  $region52: #{rsu5_forward.1} parent=0 // pred_region
    _
  $region53: #{rsu5_forward.1} parent=0 // pred_fallthru
    _
  // Predicated region
  $region54: #{rsu5_forward.1} parent=0 // pred_check
    _
  $region55: #{rsu5_forward.1} parent=0 // pred_check_branch
    %49 = sbr.rel (0) target = $region57
  $region56: #{rsu5_forward.1} parent=0 // pred_region
    _
  $region57: #{rsu5_forward.1} parent=0 // pred_fallthru
    _
  // Predicated region
  $region58: #{rsu5_forward.1} parent=0 // pred_check
    _
  $region59: #{rsu5_forward.1} parent=0 // pred_check_branch
    %51 = sbr.rel (0) target = $region61
  $region60: #{rsu5_forward.1} parent=0 // pred_region
    _
  $region61: #{rsu5_forward.1} parent=0 // pred_fallthru
    _
  // Predicated region
  $region62: #{rsu5_forward.1} parent=0 // pred_check
    _
  $region63: #{rsu5_forward.1} parent=0 // pred_check_branch
    %53 = sbr.rel (0) target = $region65
  $region64: #{rsu5_forward.1} parent=0 // pred_region
    _
  $region65: #{rsu5_forward.1} parent=0 // pred_fallthru
    _
  // Predicated region
  $region66: #{rsu5_forward.1} parent=0 // pred_check
    _
  $region67: #{rsu5_forward.1} parent=0 // pred_check_branch
    %55 = sbr.rel (0) target = $region69
  $region68: #{rsu5_forward.1} parent=0 // pred_region
    _
  $region69: #{rsu5_forward.1} parent=0 // pred_fallthru
    _
  %v57 = vld [vmem:[%s0] sm:$0xff]
  %v58 = vld [vmem:[%s0 + $0x8] sm:$0xff]
  %v59 = vld [vmem:[%s0 + $0x10] sm:$0xff]
  %v60 = vld [vmem:[%s0 + $0x18] sm:$0xff]
  %vm65 = vcmask 1040384
  %v66 = vrot.slane %v57, 7
  %v67 = vrot.slane %v58, 7
  %v68 = vsel %vm65, %v66, %v67
  %v69 = vrot.slane %v59, 7
  %v70 = vsel %vm65, %v67, %v69
  %v71 = vrot.slane %v60, 7
  %v72 = vsel %vm65, %v69, %v71
  %v77 = vsel %vm65, 0.0, %v66
  %v78 = vlaneseq
  %v79 = vshrl.u32 %v78, 7
  %v80 = vadd.s32 %v79, 8
  %v81 = vadd.s32 %v79, 16
  %v82 = vadd.s32 %v79, 24
  %v83 = vand.u32 %v79, 15
  %v84 = vand.u32 %v80, 15
  %v85 = vand.u32 %v81, 15
  %v86 = vand.u32 %v82, 15
  %v87 = vadd.s32 %v83, 4294967295
  %v88 = vadd.s32 %v84, 4294967295
  %v89 = vadd.s32 %v85, 4294967295
  %v90 = vadd.s32 %v86, 4294967295
  %vm91 = vcmp.ge.s32.totalorder %v87, 0
  %vm92 = vcmp.ge.s32.totalorder %v88, 0
  %vm93 = vcmp.ge.s32.totalorder %v89, 0
  %vm94 = vcmp.ge.s32.totalorder %v90, 0
  %vm95 = vcmp.lt.s32.totalorder %v87, 16
  %vm96 = vcmp.lt.s32.totalorder %v88, 16
  %vm97 = vcmp.lt.s32.totalorder %v89, 16
  %vm98 = vcmp.lt.s32.totalorder %v90, 16
  %vm99 = vmand %vm91, %vm95
  %vm100 = vmand %vm92, %vm96
  %vm101 = vmand %vm93, %vm97
  %vm102 = vmand %vm94, %vm98
  %v103 = vsel %vm99, 1, 0
  %v104 = vsel %vm100, 1, 0
  %v105 = vsel %vm101, 1, 0
  %v106 = vsel %vm102, 1, 0
  %vm107 = vcmp.eq.s32.totalorder %v103, 1
  %vm108 = vcmp.eq.s32.totalorder %v104, 1
  %vm109 = vcmp.eq.s32.totalorder %v105, 1
  %vm110 = vcmp.eq.s32.totalorder %v106, 1
  %v111 = vsel %vm107, %v77, 0.0
  %v112 = vsel %vm108, %v68, 0.0
  %v113 = vsel %vm109, %v70, 0.0
  %v114 = vsel %vm110, %v72, 0.0
  %vm115 = vcmask 1046528
  %v116 = vrot.slane %v57, 1
  %v117 = vrot.slane %v58, 1
  %v118 = vsel %vm115, %v116, %v117
  %v119 = vrot.slane %v59, 1
  %v120 = vsel %vm115, %v117, %v119
  %v121 = vrot.slane %v60, 1
  %v122 = vsel %vm115, %v119, %v121
  %v127 = vsel %vm115, %v121, 0.0
  %v128 = vadd.s32 %v83, 1
  %v129 = vadd.s32 %v84, 1
  %v130 = vadd.s32 %v85, 1
  %v131 = vadd.s32 %v86, 1
  %vm132 = vcmp.ge.s32.totalorder %v128, 0
  %vm133 = vcmp.ge.s32.totalorder %v129, 0
  %vm134 = vcmp.ge.s32.totalorder %v130, 0
  %vm135 = vcmp.ge.s32.totalorder %v131, 0
  %vm136 = vcmp.lt.s32.totalorder %v128, 16
  %vm137 = vcmp.lt.s32.totalorder %v129, 16
  %vm138 = vcmp.lt.s32.totalorder %v130, 16
  %vm139 = vcmp.lt.s32.totalorder %v131, 16
  %vm140 = vmand %vm132, %vm136
  %vm141 = vmand %vm133, %vm137
  %vm142 = vmand %vm134, %vm138
  %vm143 = vmand %vm135, %vm139
  %v144 = vsel %vm140, 1, 0
  %v145 = vsel %vm141, 1, 0
  %v146 = vsel %vm142, 1, 0
  %v147 = vsel %vm143, 1, 0
  %vm148 = vcmp.eq.s32.totalorder %v144, 1
  %vm149 = vcmp.eq.s32.totalorder %v145, 1
  %vm150 = vcmp.eq.s32.totalorder %v146, 1
  %vm151 = vcmp.eq.s32.totalorder %v147, 1
  %v152 = vsel %vm148, %v118, 0.0
  %v153 = vsel %vm149, %v120, 0.0
  %v154 = vsel %vm150, %v122, 0.0
  %v155 = vsel %vm151, %v127, 0.0
  %156 = vrot.lane.b32.xlu0 %v57, 64
  %v157 = vpop.permute.xlu0 %156
  %158 = vrot.lane.b32.xlu0 %v58, 64
  %v159 = vpop.permute.xlu0 %158
  %160 = vrot.lane.b32.xlu0 %v59, 64
  %v161 = vpop.permute.xlu0 %160
  %162 = vrot.lane.b32.xlu0 %v60, 64
  %v163 = vpop.permute.xlu0 %162
  %vm168 = vcmask 523264
  %v169 = vsel %vm168, %v111, %v157
  %v170 = vsel %vm168, %v112, %v159
  %v171 = vsel %vm168, %v113, %v161
  %v172 = vsel %vm168, %v114, %v163
  %v173 = vld [vmem:[%s10] sm:$0xf]
  %v174 = vld [vmem:[%s10 + $0x4] sm:$0xf]
  %v175 = vld [vmem:[%s10 + $0x8] sm:$0xf]
  %v176 = vld [vmem:[%s10 + $0xc] sm:$0xf]
  %v177 = vld [vmem:[%s10 + $0x10] sm:$0xf]
  %v178 = vld [vmem:[%s10 + $0x14] sm:$0xf]
  %v179 = vld [vmem:[%s10 + $0x18] sm:$0xf]
  %v180 = vld [vmem:[%s10 + $0x1c] sm:$0xf]
  %v181 = vld [vmem:[%s10 + $0x20] sm:$0xf]
  %v182 = vld [vmem:[%s10 + $0x24] sm:$0xf]
  %v183 = vld [vmem:[%s10 + $0x28] sm:$0xf]
  %v184 = vld [vmem:[%s10 + $0x2c] sm:$0xf]
  %v185 = vld [vmem:[%s10 + $0x30] sm:$0xf]
  %v186 = vld [vmem:[%s10 + $0x34] sm:$0xf]
  %v187 = vld [vmem:[%s10 + $0x38] sm:$0xf]
  %v188 = vld [vmem:[%s10 + $0x3c] sm:$0xf]
  %v189 = vld [vmem:[%s10 + $0x40] sm:$0xf]
  %v190 = vld [vmem:[%s10 + $0x44] sm:$0xf]
  %v191 = vld [vmem:[%s10 + $0x48] sm:$0xf]
  %v192 = vld [vmem:[%s10 + $0x4c] sm:$0xf]
  %v193 = vld [vmem:[%s10 + $0x50] sm:$0xf]
  %v194 = vld [vmem:[%s10 + $0x54] sm:$0xf]
  %v195 = vld [vmem:[%s10 + $0x58] sm:$0xf]
  %v196 = vld [vmem:[%s10 + $0x5c] sm:$0xf]
  %v197 = vld [vmem:[%s10 + $0x60] sm:$0x1]
  %v198 = vunpack.c.l.bf16 %v197
  %v199 = vpack.c.bf16 %v170, %v169
  %v200 = vpack.c.bf16 %v153, %v152
  %v201 = vpack.c.bf16 %v172, %v171
  %v202 = vpack.c.bf16 %v155, %v154
  %v203 = vlaneseq
  %v204 = vshrl.u32 %v203, 7
  %v205 = vsub.s32 0, %v204
  %v206 = vrot.slane %v198, %v205
  %v231 = vunpack.c.l.b16 %v173
  %v232 = vunpack.c.l.b16 %v174
  %v233 = vunpack.c.l.b16 %v175
  %v234 = vunpack.c.l.b16 %v176
  %v235 = vunpack.c.l.b16 %v177
  %v236 = vunpack.c.l.b16 %v178
  %v237 = vunpack.c.l.b16 %v179
  %v238 = vunpack.c.l.b16 %v180
  %v239 = vunpack.c.l.b16 %v181
  %v240 = vunpack.c.l.b16 %v182
  %v241 = vunpack.c.l.b16 %v183
  %v242 = vunpack.c.l.b16 %v184
  %v243 = vunpack.c.l.b16 %v185
  %v244 = vunpack.c.l.b16 %v186
  %v245 = vunpack.c.l.b16 %v187
  %v246 = vunpack.c.l.b16 %v188
  %v247 = vunpack.c.l.b16 %v189
  %v248 = vunpack.c.l.b16 %v190
  %v249 = vunpack.c.l.b16 %v191
  %v250 = vunpack.c.l.b16 %v192
  %v251 = vunpack.c.l.b16 %v193
  %v252 = vunpack.c.l.b16 %v194
  %v253 = vunpack.c.l.b16 %v195
  %v254 = vunpack.c.l.b16 %v196
  %v255 = vpack.c.b16 %v232, %v231
  %v256 = vpack.c.b16 %v234, %v233
  %v257 = vpack.c.b16 %v236, %v235
  %v258 = vpack.c.b16 %v238, %v237
  %v259 = vpack.c.b16 %v240, %v239
  %v260 = vpack.c.b16 %v242, %v241
  %v261 = vpack.c.b16 %v244, %v243
  %v262 = vpack.c.b16 %v246, %v245
  %v263 = vpack.c.b16 %v248, %v247
  %v264 = vpack.c.b16 %v250, %v249
  %v265 = vpack.c.b16 %v252, %v251
  %v266 = vpack.c.b16 %v254, %v253
  %v280 = vsel %vm168, %v200, 0
  %v283 = vsel %vm168, %v202, 0
  %285 = vmatprep.subr.bf16.mxu0 0
  %286 = vmatpush1.bf16.msra.mxu0 %v262
  %287 = vmatprep.subr.bf16.mxu0 0
  %288 = vmatpush1.bf16.msra.mxu0 %v261
  %289 = vmatprep.subr.bf16.mxu0 0
  %290 = vmatpush1.bf16.msra.mxu0 %v260
  %291 = vmatprep.subr.bf16.mxu0 0
  %292 = vmatpush1.bf16.msra.mxu0 %v259
  %293 = vmatprep.subr.bf16.mxu0 0
  %294 = vmatpush1.bf16.msra.mxu0 %v258
  %295 = vmatprep.subr.bf16.mxu0 0
  %296 = vmatpush1.bf16.msra.mxu0 %v257
  %297 = vmatprep.subr.bf16.mxu0 0
  %298 = vmatpush1.bf16.msra.mxu0 %v256
  %299 = vmatprep.subr.bf16.mxu0 0
  %300 = vmatpush1.bf16.msra.mxu0 %v255
  %301 = vmatprep.subr.bf16.mxu0 0
  %302 = vmatpush2.bf16.msra.mxu0 0
  %303 = vmatprep.subr.bf16.mxu0 0
  %304 = vmatpush2.bf16.msra.mxu0 0
  %305 = vmatprep.subr.bf16.mxu0 0
  %306 = vmatpush2.bf16.msra.mxu0 0
  %307 = vmatprep.subr.bf16.mxu0 0
  %308 = vmatpush2.bf16.msra.mxu0 0
  %309 = vmatprep.subr.bf16.mxu0 0
  %310 = vmatpush2.bf16.msra.mxu0 %v266
  %311 = vmatprep.subr.bf16.mxu0 0
  %312 = vmatpush2.bf16.msra.mxu0 %v265
  %313 = vmatprep.subr.bf16.mxu0 0
  %314 = vmatpush2.bf16.msra.mxu0 %v264
  %315 = vmatprep.subr.bf16.mxu0 0
  %316 = vmatpush2.bf16.msra.mxu0 %v263
  %317 = vmatprep.mubr.bf16.mxu0 %v280
  %318 = vmatmul.mubr.bf16.gmra.mxu0 %v199
  %v319 = vpop.f32.mrf.mxu0
  %v320 = vadd.f32 %v206, %v319
  %v321 = vpop.f32.mrf.mxu0
  %v322 = vpop.f32.mrf.mxu0
  %v323 = vadd.f32 %v206, %v322
  %v324 = vpop.f32.mrf.mxu0
  %325 = vmatprep.mubr.bf16.mxu0 %v283
  %326 = vmatmul.mubr.bf16.gmra.mxu0 %v201
  %v327 = vpop.f32.mrf.mxu0
  %v328 = vadd.f32 %v206, %v327
  %v329 = vpop.f32.mrf.mxu0
  %v330 = vpop.f32.mrf.mxu0
  %v331 = vadd.f32 %v206, %v330
  %v332 = vpop.f32.mrf.mxu0
  %333 = vdwg.mxu0
  %v334 = vmax.f32 %v320, 0.0
  %v335 = vmax.f32 %v323, 0.0
  %v336 = vmax.f32 %v328, 0.0
  %v337 = vmax.f32 %v331, 0.0
  %v342 = vrot.slane %v334, 7
  %v343 = vrot.slane %v335, 7
  %v344 = vsel %vm65, %v342, %v343
  %v345 = vrot.slane %v336, 7
  %v346 = vsel %vm65, %v343, %v345
  %v347 = vrot.slane %v337, 7
  %v348 = vsel %vm65, %v345, %v347
  %v353 = vsel %vm65, 0.0, %v342
  %v354 = vsel %vm107, %v353, 0.0
  %v355 = vsel %vm108, %v344, 0.0
  %v356 = vsel %vm109, %v346, 0.0
  %v357 = vsel %vm110, %v348, 0.0
  %v358 = vrot.slane %v334, 1
  %v359 = vrot.slane %v335, 1
  %v360 = vsel %vm115, %v358, %v359
  %v361 = vrot.slane %v336, 1
  %v362 = vsel %vm115, %v359, %v361
  %v363 = vrot.slane %v337, 1
  %v364 = vsel %vm115, %v361, %v363
  %v369 = vsel %vm115, %v363, 0.0
  %v370 = vsel %vm148, %v360, 0.0
  %v371 = vsel %vm149, %v362, 0.0
  %v372 = vsel %vm150, %v364, 0.0
  %v373 = vsel %vm151, %v369, 0.0
  %374 = vrot.lane.b32.xlu0 %v334, 64
  %v375 = vpop.permute.xlu0 %374
  %376 = vrot.lane.b32.xlu0 %v335, 64
  %v377 = vpop.permute.xlu0 %376
  %378 = vrot.lane.b32.xlu0 %v336, 64
  %v379 = vpop.permute.xlu0 %378
  %380 = vrot.lane.b32.xlu0 %v337, 64
  %v381 = vpop.permute.xlu0 %380
  %v386 = vsel %vm168, %v354, %v375
  %v387 = vsel %vm168, %v355, %v377
  %v388 = vsel %vm168, %v356, %v379
  %v389 = vsel %vm168, %v357, %v381
  %v390 = vld [vmem:[%s1] sm:$0xf]
  %v391 = vld [vmem:[%s1 + $0x4] sm:$0xf]
  %v392 = vld [vmem:[%s1 + $0x8] sm:$0xf]
  %v393 = vld [vmem:[%s1 + $0xc] sm:$0xf]
  %v394 = vld [vmem:[%s1 + $0x10] sm:$0xf]
  %v395 = vld [vmem:[%s1 + $0x14] sm:$0xf]
  %v396 = vld [vmem:[%s1 + $0x18] sm:$0xf]
  %v397 = vld [vmem:[%s1 + $0x1c] sm:$0xf]
  %v398 = vld [vmem:[%s1 + $0x20] sm:$0xf]
  %v399 = vld [vmem:[%s1 + $0x24] sm:$0xf]
  %v400 = vld [vmem:[%s1 + $0x28] sm:$0xf]
  %v401 = vld [vmem:[%s1 + $0x2c] sm:$0xf]
  %v402 = vld [vmem:[%s1 + $0x30] sm:$0xf]
  %v403 = vld [vmem:[%s1 + $0x34] sm:$0xf]
  %v404 = vld [vmem:[%s1 + $0x38] sm:$0xf]
  %v405 = vld [vmem:[%s1 + $0x3c] sm:$0xf]
  %v406 = vld [vmem:[%s1 + $0x40] sm:$0xf]
  %v407 = vld [vmem:[%s1 + $0x44] sm:$0xf]
  %v408 = vld [vmem:[%s1 + $0x48] sm:$0xf]
  %v409 = vld [vmem:[%s1 + $0x4c] sm:$0xf]
  %v410 = vld [vmem:[%s1 + $0x50] sm:$0xf]
  %v411 = vld [vmem:[%s1 + $0x54] sm:$0xf]
  %v412 = vld [vmem:[%s1 + $0x58] sm:$0xf]
  %v413 = vld [vmem:[%s1 + $0x5c] sm:$0xf]
  %v414 = vld [vmem:[%s1 + $0x60] sm:$0x1]
  %v415 = vunpack.c.l.bf16 %v414
  %v416 = vpack.c.bf16 %v387, %v386
  %v417 = vpack.c.bf16 %v371, %v370
  %v418 = vpack.c.bf16 %v389, %v388
  %v419 = vpack.c.bf16 %v373, %v372
  %v420 = vlaneseq
  %v421 = vshrl.u32 %v420, 7
  %v422 = vsub.s32 0, %v421
  %v423 = vrot.slane %v415, %v422
  %v448 = vunpack.c.l.b16 %v390
  %v449 = vunpack.c.l.b16 %v391
  %v450 = vunpack.c.l.b16 %v392
  %v451 = vunpack.c.l.b16 %v393
  %v452 = vunpack.c.l.b16 %v394
  %v453 = vunpack.c.l.b16 %v395
  %v454 = vunpack.c.l.b16 %v396
  %v455 = vunpack.c.l.b16 %v397
  %v456 = vunpack.c.l.b16 %v398
  %v457 = vunpack.c.l.b16 %v399
  %v458 = vunpack.c.l.b16 %v400
  %v459 = vunpack.c.l.b16 %v401
  %v460 = vunpack.c.l.b16 %v402
  %v461 = vunpack.c.l.b16 %v403
  %v462 = vunpack.c.l.b16 %v404
  %v463 = vunpack.c.l.b16 %v405
  %v464 = vunpack.c.l.b16 %v406
  %v465 = vunpack.c.l.b16 %v407
  %v466 = vunpack.c.l.b16 %v408
  %v467 = vunpack.c.l.b16 %v409
  %v468 = vunpack.c.l.b16 %v410
  %v469 = vunpack.c.l.b16 %v411
  %v470 = vunpack.c.l.b16 %v412
  %v471 = vunpack.c.l.b16 %v413
  %v472 = vpack.c.b16 %v449, %v448
  %v473 = vpack.c.b16 %v451, %v450
  %v474 = vpack.c.b16 %v453, %v452
  %v475 = vpack.c.b16 %v455, %v454
  %v476 = vpack.c.b16 %v457, %v456
  %v477 = vpack.c.b16 %v459, %v458
  %v478 = vpack.c.b16 %v461, %v460
  %v479 = vpack.c.b16 %v463, %v462
  %v480 = vpack.c.b16 %v465, %v464
  %v481 = vpack.c.b16 %v467, %v466
  %v482 = vpack.c.b16 %v469, %v468
  %v483 = vpack.c.b16 %v471, %v470
  %v497 = vsel %vm168, %v417, 0
  %v500 = vsel %vm168, %v419, 0
  %502 = vmatprep.subr.bf16.mxu0 0
  %503 = vmatpush1.bf16.msra.mxu0 %v479
  %504 = vmatprep.subr.bf16.mxu0 0
  %505 = vmatpush1.bf16.msra.mxu0 %v478
  %506 = vmatprep.subr.bf16.mxu0 0
  %507 = vmatpush1.bf16.msra.mxu0 %v477
  %508 = vmatprep.subr.bf16.mxu0 0
  %509 = vmatpush1.bf16.msra.mxu0 %v476
  %510 = vmatprep.subr.bf16.mxu0 0
  %511 = vmatpush1.bf16.msra.mxu0 %v475
  %512 = vmatprep.subr.bf16.mxu0 0
  %513 = vmatpush1.bf16.msra.mxu0 %v474
  %514 = vmatprep.subr.bf16.mxu0 0
  %515 = vmatpush1.bf16.msra.mxu0 %v473
  %516 = vmatprep.subr.bf16.mxu0 0
  %517 = vmatpush1.bf16.msra.mxu0 %v472
  %518 = vmatprep.subr.bf16.mxu0 0
  %519 = vmatpush2.bf16.msra.mxu0 0
  %520 = vmatprep.subr.bf16.mxu0 0
  %521 = vmatpush2.bf16.msra.mxu0 0
  %522 = vmatprep.subr.bf16.mxu0 0
  %523 = vmatpush2.bf16.msra.mxu0 0
  %524 = vmatprep.subr.bf16.mxu0 0
  %525 = vmatpush2.bf16.msra.mxu0 0
  %526 = vmatprep.subr.bf16.mxu0 0
  %527 = vmatpush2.bf16.msra.mxu0 %v483
  %528 = vmatprep.subr.bf16.mxu0 0
  %529 = vmatpush2.bf16.msra.mxu0 %v482
  %530 = vmatprep.subr.bf16.mxu0 0
  %531 = vmatpush2.bf16.msra.mxu0 %v481
  %532 = vmatprep.subr.bf16.mxu0 0
  %533 = vmatpush2.bf16.msra.mxu0 %v480
  %534 = vmatprep.mubr.bf16.mxu0 %v497
  %535 = vmatmul.mubr.bf16.gmra.mxu0 %v416
  %v536 = vpop.f32.mrf.mxu0
  %v537 = vadd.f32 %v423, %v536
  %v538 = vpop.f32.mrf.mxu0
  %v539 = vpop.f32.mrf.mxu0
  %v540 = vadd.f32 %v423, %v539
  %v541 = vpop.f32.mrf.mxu0
  %542 = vmatprep.mubr.bf16.mxu0 %v500
  %543 = vmatmul.mubr.bf16.gmra.mxu0 %v418
  %v544 = vpop.f32.mrf.mxu0
  %v545 = vadd.f32 %v423, %v544
  %v546 = vpop.f32.mrf.mxu0
  %v547 = vpop.f32.mrf.mxu0
  %v548 = vadd.f32 %v423, %v547
  %v549 = vpop.f32.mrf.mxu0
  %550 = vdwg.mxu0
  %v551 = vmax.f32 %v537, 0.0
  %v552 = vmax.f32 %v540, 0.0
  %v553 = vmax.f32 %v545, 0.0
  %v554 = vmax.f32 %v548, 0.0
  %v555 = vld [vmem:[%s11] sm:$0xf]
  %v556 = vld [vmem:[%s11 + $0x4] sm:$0xf]
  %v557 = vpack.c.bf16 %v552, %v551
  %v558 = vpack.c.bf16 %v554, %v553
  %v561 = vunpack.c.l.b16 %v555
  %v562 = vunpack.c.l.b16 %v556
  %v563 = vpack.c.b16 %v562, %v561
  %vm564 = vcmask 261120
  %v566 = vsel %vm564, %v563, 0
  %568 = vmatprep.subr.bf16.mxu0 0
  %569 = vmatpush1.bf16.msra.mxu0 0
  %570 = vmatprep.subr.bf16.mxu0 0
  %571 = vmatpush1.bf16.msra.mxu0 0
  %572 = vmatprep.subr.bf16.mxu0 0
  %573 = vmatpush1.bf16.msra.mxu0 0
  %574 = vmatprep.subr.bf16.mxu0 0
  %575 = vmatpush1.bf16.msra.mxu0 0
  %576 = vmatprep.subr.bf16.mxu0 0
  %577 = vmatpush1.bf16.msra.mxu0 0
  %578 = vmatprep.subr.bf16.mxu0 0
  %579 = vmatpush1.bf16.msra.mxu0 0
  %580 = vmatprep.subr.bf16.mxu0 0
  %581 = vmatpush1.bf16.msra.mxu0 %v558
  %582 = vmatprep.subr.bf16.mxu0 0
  %583 = vmatpush1.bf16.msra.mxu0 %v557
  %584 = vmatprep.subr.bf16.mxu0 0
  %585 = vmatpush2.bf16.msra.mxu0 0
  %586 = vmatprep.subr.bf16.mxu0 0
  %587 = vmatpush2.bf16.msra.mxu0 0
  %588 = vmatprep.subr.bf16.mxu0 0
  %589 = vmatpush2.bf16.msra.mxu0 0
  %590 = vmatprep.subr.bf16.mxu0 0
  %591 = vmatpush2.bf16.msra.mxu0 0
  %592 = vmatprep.subr.bf16.mxu0 0
  %593 = vmatpush2.bf16.msra.mxu0 0
  %594 = vmatprep.subr.bf16.mxu0 0
  %595 = vmatpush2.bf16.msra.mxu0 0
  %596 = vmatprep.subr.bf16.mxu0 0
  %597 = vmatpush2.bf16.msra.mxu0 0
  %598 = vmatprep.subr.bf16.mxu0 0
  %599 = vmatpush2.bf16.msra.mxu0 0
  %600 = vmatprep.mubr.bf16.mxu0 0
  %601 = vmatmul.mubr.bf16.gmra.mxu0 %v566
  %v602 = vpop.f32.mrf.mxu0
  %v603 = vadd.f32 0.0, %v602
  %v604 = vpop.f32.mrf.mxu0
  %v605 = vpop.f32.mrf.mxu0
  %v606 = vadd.f32 0.0, %v605
  %v607 = vpop.f32.mrf.mxu0
  %608 = vdwg.mxu0
  %v611 = vrot.slane %v603, 7
  %v612 = vrot.slane %v606, 7
  %v613 = vsel %vm65, %v611, %v612
  %v616 = vsel %vm65, 0.0, %v611
  %v617 = vand.u32 %v79, 7
  %v618 = vand.u32 %v80, 7
  %v619 = vadd.s32 %v617, 4294967295
  %v620 = vadd.s32 %v618, 4294967295
  %vm621 = vcmp.ge.s32.totalorder %v619, 0
  %vm622 = vcmp.ge.s32.totalorder %v620, 0
  %vm623 = vcmp.lt.s32.totalorder %v619, 8
  %vm624 = vcmp.lt.s32.totalorder %v620, 8
  %vm625 = vmand %vm621, %vm623
  %vm626 = vmand %vm622, %vm624
  %v627 = vsel %vm625, 1, 0
  %v628 = vsel %vm626, 1, 0
  %vm629 = vcmp.eq.s32.totalorder %v627, 1
  %vm630 = vcmp.eq.s32.totalorder %v628, 1
  %v631 = vsel %vm629, %v616, 0.0
  %v632 = vsel %vm630, %v613, 0.0
  %v633 = vrot.slane %v603, 1
  %v634 = vrot.slane %v606, 1
  %v635 = vsel %vm115, %v633, %v634
  %v638 = vsel %vm115, %v634, 0.0
  %v639 = vadd.s32 %v617, 1
  %v640 = vadd.s32 %v618, 1
  %vm641 = vcmp.ge.s32.totalorder %v639, 0
  %vm642 = vcmp.ge.s32.totalorder %v640, 0
  %vm643 = vcmp.lt.s32.totalorder %v639, 8
  %vm644 = vcmp.lt.s32.totalorder %v640, 8
  %vm645 = vmand %vm641, %vm643
  %vm646 = vmand %vm642, %vm644
  %v647 = vsel %vm645, 1, 0
  %v648 = vsel %vm646, 1, 0
  %vm649 = vcmp.eq.s32.totalorder %v647, 1
  %vm650 = vcmp.eq.s32.totalorder %v648, 1
  %v651 = vsel %vm649, %v635, 0.0
  %v652 = vsel %vm650, %v638, 0.0
  %v653 = vld [vmem:[%s3] sm:$0xf]
  %v654 = vld [vmem:[%s3 + $0x4] sm:$0xf]
  %v655 = vld [vmem:[%s3 + $0x8] sm:$0xf]
  %v656 = vld [vmem:[%s3 + $0xc] sm:$0xf]
  %v657 = vld [vmem:[%s3 + $0x10] sm:$0xf]
  %v658 = vld [vmem:[%s3 + $0x14] sm:$0xf]
  %v659 = vld [vmem:[%s3 + $0x18] sm:$0xf]
  %v660 = vld [vmem:[%s3 + $0x1c] sm:$0xf]
  %v661 = vld [vmem:[%s3 + $0x20] sm:$0xf]
  %v662 = vld [vmem:[%s3 + $0x24] sm:$0xf]
  %v663 = vld [vmem:[%s3 + $0x28] sm:$0xf]
  %v664 = vld [vmem:[%s3 + $0x2c] sm:$0xf]
  %v665 = vld [vmem:[%s3 + $0x30] sm:$0xf]
  %v666 = vld [vmem:[%s3 + $0x34] sm:$0xf]
  %v667 = vld [vmem:[%s3 + $0x38] sm:$0xf]
  %v668 = vld [vmem:[%s3 + $0x3c] sm:$0xf]
  %v669 = vld [vmem:[%s3 + $0x40] sm:$0xf]
  %v670 = vld [vmem:[%s3 + $0x44] sm:$0xf]
  %v671 = vld [vmem:[%s3 + $0x48] sm:$0xf]
  %v672 = vld [vmem:[%s3 + $0x4c] sm:$0xf]
  %v673 = vld [vmem:[%s3 + $0x50] sm:$0xf]
  %v674 = vld [vmem:[%s3 + $0x54] sm:$0xf]
  %v675 = vld [vmem:[%s3 + $0x58] sm:$0xf]
  %v676 = vld [vmem:[%s3 + $0x5c] sm:$0xf]
  %v677 = vld [vmem:[%s3 + $0x60] sm:$0xf]
  %v678 = vld [vmem:[%s3 + $0x64] sm:$0xf]
  %v679 = vld [vmem:[%s3 + $0x68] sm:$0xf]
  %v680 = vld [vmem:[%s3 + $0x6c] sm:$0xf]
  %v681 = vld [vmem:[%s3 + $0x70] sm:$0xf]
  %v682 = vld [vmem:[%s3 + $0x74] sm:$0xf]
  %v683 = vld [vmem:[%s3 + $0x78] sm:$0xf]
  %v684 = vld [vmem:[%s3 + $0x7c] sm:$0xf]
  %v685 = vld [vmem:[%s3 + $0x80] sm:$0xf]
  %v686 = vld [vmem:[%s3 + $0x84] sm:$0xf]
  %v687 = vld [vmem:[%s3 + $0x88] sm:$0xf]
  %v688 = vld [vmem:[%s3 + $0x8c] sm:$0xf]
  %v689 = vld [vmem:[%s3 + $0x90] sm:$0xf]
  %v690 = vld [vmem:[%s3 + $0x94] sm:$0xf]
  %v691 = vld [vmem:[%s3 + $0x98] sm:$0xf]
  %v692 = vld [vmem:[%s3 + $0x9c] sm:$0xf]
  %v693 = vld [vmem:[%s3 + $0xa0] sm:$0xf]
  %v694 = vld [vmem:[%s3 + $0xa4] sm:$0xf]
  %v695 = vld [vmem:[%s3 + $0xa8] sm:$0xf]
  %v696 = vld [vmem:[%s3 + $0xac] sm:$0xf]
  %v697 = vld [vmem:[%s3 + $0xb0] sm:$0xf]
  %v698 = vld [vmem:[%s3 + $0xb4] sm:$0xf]
  %v699 = vld [vmem:[%s3 + $0xb8] sm:$0xf]
  %v700 = vld [vmem:[%s3 + $0xbc] sm:$0xf]
  %v701 = vld [vmem:[%s3 + $0xc0] sm:$0x1]
  %v702 = vunpack.c.l.bf16 %v701
  %v703 = vpack.c.bf16 %v632, %v631
  %v704 = vpack.c.bf16 %v606, %v603
  %v705 = vpack.c.bf16 %v652, %v651
  %v706 = vlaneseq
  %v707 = vshrl.u32 %v706, 7
  %v708 = vsub.s32 0, %v707
  %v709 = vrot.slane %v702, %v708
  %v758 = vunpack.c.l.b16 %v653
  %v759 = vunpack.c.l.b16 %v654
  %v760 = vunpack.c.l.b16 %v655
  %v761 = vunpack.c.l.b16 %v656
  %v762 = vunpack.c.l.b16 %v657
  %v763 = vunpack.c.l.b16 %v658
  %v764 = vunpack.c.l.b16 %v659
  %v765 = vunpack.c.l.b16 %v660
  %v766 = vunpack.c.l.b16 %v661
  %v767 = vunpack.c.l.b16 %v662
  %v768 = vunpack.c.l.b16 %v663
  %v769 = vunpack.c.l.b16 %v664
  %v770 = vunpack.c.l.b16 %v665
  %v771 = vunpack.c.l.b16 %v666
  %v772 = vunpack.c.l.b16 %v667
  %v773 = vunpack.c.l.b16 %v668
  %v774 = vunpack.c.l.b16 %v669
  %v775 = vunpack.c.l.b16 %v670
  %v776 = vunpack.c.l.b16 %v671
  %v777 = vunpack.c.l.b16 %v672
  %v778 = vunpack.c.l.b16 %v673
  %v779 = vunpack.c.l.b16 %v674
  %v780 = vunpack.c.l.b16 %v675
  %v781 = vunpack.c.l.b16 %v676
  %v782 = vunpack.c.l.b16 %v677
  %v783 = vunpack.c.l.b16 %v678
  %v784 = vunpack.c.l.b16 %v679
  %v785 = vunpack.c.l.b16 %v680
  %v786 = vunpack.c.l.b16 %v681
  %v787 = vunpack.c.l.b16 %v682
  %v788 = vunpack.c.l.b16 %v683
  %v789 = vunpack.c.l.b16 %v684
  %v790 = vunpack.c.l.b16 %v685
  %v791 = vunpack.c.l.b16 %v686
  %v792 = vunpack.c.l.b16 %v687
  %v793 = vunpack.c.l.b16 %v688
  %v794 = vunpack.c.l.b16 %v689
  %v795 = vunpack.c.l.b16 %v690
  %v796 = vunpack.c.l.b16 %v691
  %v797 = vunpack.c.l.b16 %v692
  %v798 = vunpack.c.l.b16 %v693
  %v799 = vunpack.c.l.b16 %v694
  %v800 = vunpack.c.l.b16 %v695
  %v801 = vunpack.c.l.b16 %v696
  %v802 = vunpack.c.l.b16 %v697
  %v803 = vunpack.c.l.b16 %v698
  %v804 = vunpack.c.l.b16 %v699
  %v805 = vunpack.c.l.b16 %v700
  %v806 = vpack.c.b16 %v759, %v758
  %v807 = vpack.c.b16 %v761, %v760
  %v808 = vpack.c.b16 %v763, %v762
  %v809 = vpack.c.b16 %v765, %v764
  %v810 = vpack.c.b16 %v767, %v766
  %v811 = vpack.c.b16 %v769, %v768
  %v812 = vpack.c.b16 %v771, %v770
  %v813 = vpack.c.b16 %v773, %v772
  %v814 = vpack.c.b16 %v775, %v774
  %v815 = vpack.c.b16 %v777, %v776
  %v816 = vpack.c.b16 %v779, %v778
  %v817 = vpack.c.b16 %v781, %v780
  %v818 = vpack.c.b16 %v783, %v782
  %v819 = vpack.c.b16 %v785, %v784
  %v820 = vpack.c.b16 %v787, %v786
  %v821 = vpack.c.b16 %v789, %v788
  %v822 = vpack.c.b16 %v791, %v790
  %v823 = vpack.c.b16 %v793, %v792
  %v824 = vpack.c.b16 %v795, %v794
  %v825 = vpack.c.b16 %v797, %v796
  %v826 = vpack.c.b16 %v799, %v798
  %v827 = vpack.c.b16 %v801, %v800
  %v828 = vpack.c.b16 %v803, %v802
  %v829 = vpack.c.b16 %v805, %v804
  %854 = vmatprep.subr.bf16.mxu0 0
  %855 = vmatpush1.bf16.msra.mxu0 %v813
  %856 = vmatprep.subr.bf16.mxu0 0
  %857 = vmatpush1.bf16.msra.mxu0 %v812
  %858 = vmatprep.subr.bf16.mxu0 0
  %859 = vmatpush1.bf16.msra.mxu0 %v811
  %860 = vmatprep.subr.bf16.mxu0 0
  %861 = vmatpush1.bf16.msra.mxu0 %v810
  %862 = vmatprep.subr.bf16.mxu0 0
  %863 = vmatpush1.bf16.msra.mxu0 %v809
  %864 = vmatprep.subr.bf16.mxu0 0
  %865 = vmatpush1.bf16.msra.mxu0 %v808
  %866 = vmatprep.subr.bf16.mxu0 0
  %867 = vmatpush1.bf16.msra.mxu0 %v807
  %868 = vmatprep.subr.bf16.mxu0 0
  %869 = vmatpush1.bf16.msra.mxu0 %v806
  %870 = vmatprep.subr.bf16.mxu0 0
  %871 = vmatpush2.bf16.msra.mxu0 %v821
  %872 = vmatprep.subr.bf16.mxu0 0
  %873 = vmatpush2.bf16.msra.mxu0 %v820
  %874 = vmatprep.subr.bf16.mxu0 0
  %875 = vmatpush2.bf16.msra.mxu0 %v819
  %876 = vmatprep.subr.bf16.mxu0 0
  %877 = vmatpush2.bf16.msra.mxu0 %v818
  %878 = vmatprep.subr.bf16.mxu0 0
  %879 = vmatpush2.bf16.msra.mxu0 %v817
  %880 = vmatprep.subr.bf16.mxu0 0
  %881 = vmatpush2.bf16.msra.mxu0 %v816
  %882 = vmatprep.subr.bf16.mxu0 0
  %883 = vmatpush2.bf16.msra.mxu0 %v815
  %884 = vmatprep.subr.bf16.mxu0 0
  %885 = vmatpush2.bf16.msra.mxu0 %v814
  %886 = vmatprep.mubr.bf16.mxu0 %v704
  %887 = vmatmul.mubr.bf16.gmra.mxu0 %v703
  %v888 = vpop.f32.mrf.mxu0
  %v889 = vadd.f32 %v709, %v888
  %v890 = vpop.f32.mrf.mxu0
  %v891 = vpop.f32.mrf.mxu0
  %v892 = vadd.f32 %v709, %v891
  %v893 = vpop.f32.mrf.mxu0
  %894 = vdwg.mxu0
  %895 = vmatprep.subr.bf16.mxu0 0
  %896 = vmatpush1.bf16.msra.mxu0 %v829
  %897 = vmatprep.subr.bf16.mxu0 0
  %898 = vmatpush1.bf16.msra.mxu0 %v828
  %899 = vmatprep.subr.bf16.mxu0 0
  %900 = vmatpush1.bf16.msra.mxu0 %v827
  %901 = vmatprep.subr.bf16.mxu0 0
  %902 = vmatpush1.bf16.msra.mxu0 %v826
  %903 = vmatprep.subr.bf16.mxu0 0
  %904 = vmatpush1.bf16.msra.mxu0 %v825
  %905 = vmatprep.subr.bf16.mxu0 0
  %906 = vmatpush1.bf16.msra.mxu0 %v824
  %907 = vmatprep.subr.bf16.mxu0 0
  %908 = vmatpush1.bf16.msra.mxu0 %v823
  %909 = vmatprep.subr.bf16.mxu0 0
  %910 = vmatpush1.bf16.msra.mxu0 %v822
  %911 = vmatprep.subr.bf16.mxu0 0
  %912 = vmatpush2.bf16.msra.mxu0 0
  %913 = vmatprep.subr.bf16.mxu0 0
  %914 = vmatpush2.bf16.msra.mxu0 0
  %915 = vmatprep.subr.bf16.mxu0 0
  %916 = vmatpush2.bf16.msra.mxu0 0
  %917 = vmatprep.subr.bf16.mxu0 0
  %918 = vmatpush2.bf16.msra.mxu0 0
  %919 = vmatprep.subr.bf16.mxu0 0
  %920 = vmatpush2.bf16.msra.mxu0 0
  %921 = vmatprep.subr.bf16.mxu0 0
  %922 = vmatpush2.bf16.msra.mxu0 0
  %923 = vmatprep.subr.bf16.mxu0 0
  %924 = vmatpush2.bf16.msra.mxu0 0
  %925 = vmatprep.subr.bf16.mxu0 0
  %926 = vmatpush2.bf16.msra.mxu0 0
  %927 = vmatprep.mubr.bf16.mxu0 0
  %928 = vmatmul.mubr.bf16.gmra.mxu0 %v705
  %v929 = vpop.f32.mrf.mxu0
  %v930 = vadd.f32 %v889, %v929
  %v931 = vpop.f32.mrf.mxu0
  %v932 = vpop.f32.mrf.mxu0
  %v933 = vadd.f32 %v892, %v932
  %v934 = vpop.f32.mrf.mxu0
  %935 = vdwg.mxu0
  %v936 = vmax.f32 %v930, 0.0
  %v937 = vmax.f32 %v933, 0.0
  %v938 = vld [vmem:[%s12] sm:$0xf]
  %v939 = vpack.c.bf16 %v937, %v936
  %vm940 = vcmask 130048
  %v942 = vsel %vm940, %v938, 0
  %944 = vmatprep.subr.bf16.mxu0 0
  %945 = vmatpush1.bf16.msra.mxu0 0
  %946 = vmatprep.subr.bf16.mxu0 0
  %947 = vmatpush1.bf16.msra.mxu0 0
  %948 = vmatprep.subr.bf16.mxu0 0
  %949 = vmatpush1.bf16.msra.mxu0 0
  %950 = vmatprep.subr.bf16.mxu0 0
  %951 = vmatpush1.bf16.msra.mxu0 0
  %952 = vmatprep.subr.bf16.mxu0 0
  %953 = vmatpush1.bf16.msra.mxu0 0
  %954 = vmatprep.subr.bf16.mxu0 0
  %955 = vmatpush1.bf16.msra.mxu0 0
  %956 = vmatprep.subr.bf16.mxu0 0
  %957 = vmatpush1.bf16.msra.mxu0 0
  %958 = vmatprep.subr.bf16.mxu0 0
  %959 = vmatpush1.bf16.msra.mxu0 %v939
  %960 = vmatprep.subr.bf16.mxu0 0
  %961 = vmatpush2.bf16.msra.mxu0 0
  %962 = vmatprep.subr.bf16.mxu0 0
  %963 = vmatpush2.bf16.msra.mxu0 0
  %964 = vmatprep.subr.bf16.mxu0 0
  %965 = vmatpush2.bf16.msra.mxu0 0
  %966 = vmatprep.subr.bf16.mxu0 0
  %967 = vmatpush2.bf16.msra.mxu0 0
  %968 = vmatprep.subr.bf16.mxu0 0
  %969 = vmatpush2.bf16.msra.mxu0 0
  %970 = vmatprep.subr.bf16.mxu0 0
  %971 = vmatpush2.bf16.msra.mxu0 0
  %972 = vmatprep.subr.bf16.mxu0 0
  %973 = vmatpush2.bf16.msra.mxu0 0
  %974 = vmatprep.subr.bf16.mxu0 0
  %975 = vmatpush2.bf16.msra.mxu0 0
  %976 = vmatprep.mubr.bf16.mxu0 0
  %977 = vmatmul.mubr.bf16.gmra.mxu0 %v942
  %v978 = vpop.f32.mrf.mxu0
  %v979 = vadd.f32 0.0, %v978
  %v980 = vpop.f32.mrf.mxu0
  %v981 = vpop.f32.mrf.mxu0
  %v982 = vpop.f32.mrf.mxu0
  %983 = vdwg.mxu0
  %v985 = vrot.slane %v979, 7
  %v987 = vsel %vm65, 0.0, %v985
  %v988 = vand.u32 %v79, 3
  %v989 = vadd.s32 %v988, 4294967295
  %vm990 = vcmp.ge.s32.totalorder %v989, 0
  %vm991 = vcmp.lt.s32.totalorder %v989, 4
  %vm992 = vmand %vm990, %vm991
  %v993 = vsel %vm992, 1, 0
  %vm994 = vcmp.eq.s32.totalorder %v993, 1
  %v995 = vsel %vm994, %v987, 0.0
  %v996 = vrot.slane %v979, 1
  %v998 = vsel %vm115, %v996, 0.0
  %v999 = vadd.s32 %v988, 1
  %vm1000 = vcmp.ge.s32.totalorder %v999, 0
  %vm1001 = vcmp.lt.s32.totalorder %v999, 4
  %vm1002 = vmand %vm1000, %vm1001
  %v1003 = vsel %vm1002, 1, 0
  %vm1004 = vcmp.eq.s32.totalorder %v1003, 1
  %v1005 = vsel %vm1004, %v998, 0.0
  %1006 = vrot.lane.b32.xlu0 %v979, 64
  %v1007 = vpop.permute.xlu0 %1006
  %v1009 = vsel %vm168, %v995, %v1007
  %v1010 = vld [vmem:[%s5] sm:$0xf]
  %v1011 = vld [vmem:[%s5 + $0x4] sm:$0xf]
  %v1012 = vld [vmem:[%s5 + $0x8] sm:$0xf]
  %v1013 = vld [vmem:[%s5 + $0xc] sm:$0xf]
  %v1014 = vld [vmem:[%s5 + $0x10] sm:$0xf]
  %v1015 = vld [vmem:[%s5 + $0x14] sm:$0xf]
  %v1016 = vld [vmem:[%s5 + $0x18] sm:$0xf]
  %v1017 = vld [vmem:[%s5 + $0x1c] sm:$0xf]
  %v1018 = vld [vmem:[%s5 + $0x20] sm:$0xf]
  %v1019 = vld [vmem:[%s5 + $0x24] sm:$0xf]
  %v1020 = vld [vmem:[%s5 + $0x28] sm:$0xf]
  %v1021 = vld [vmem:[%s5 + $0x2c] sm:$0xf]
  %v1022 = vld [vmem:[%s5 + $0x30] sm:$0xf]
  %v1023 = vld [vmem:[%s5 + $0x34] sm:$0xf]
  %v1024 = vld [vmem:[%s5 + $0x38] sm:$0xf]
  %v1025 = vld [vmem:[%s5 + $0x3c] sm:$0xf]
  %v1026 = vld [vmem:[%s5 + $0x40] sm:$0xf]
  %v1027 = vld [vmem:[%s5 + $0x44] sm:$0xf]
  %v1028 = vld [vmem:[%s5 + $0x48] sm:$0xf]
  %v1029 = vld [vmem:[%s5 + $0x4c] sm:$0xf]
  %v1030 = vld [vmem:[%s5 + $0x50] sm:$0xf]
  %v1031 = vld [vmem:[%s5 + $0x54] sm:$0xf]
  %v1032 = vld [vmem:[%s5 + $0x58] sm:$0xf]
  %v1033 = vld [vmem:[%s5 + $0x5c] sm:$0xf]
  %v1034 = vld [vmem:[%s5 + $0x60] sm:$0x1]
  %v1035 = vunpack.c.l.bf16 %v1034
  %v1036 = vpack.c.bf16 %v1009, %v1009
  %v1037 = vpack.c.bf16 %v1005, %v1005
  %v1038 = vlaneseq
  %v1039 = vshrl.u32 %v1038, 7
  %v1040 = vsub.s32 0, %v1039
  %v1041 = vrot.slane %v1035, %v1040
  %v1066 = vunpack.c.l.b16 %v1010
  %v1067 = vunpack.c.l.b16 %v1011
  %v1068 = vunpack.c.l.b16 %v1012
  %v1069 = vunpack.c.l.b16 %v1013
  %v1070 = vunpack.c.l.b16 %v1014
  %v1071 = vunpack.c.l.b16 %v1015
  %v1072 = vunpack.c.l.b16 %v1016
  %v1073 = vunpack.c.l.b16 %v1017
  %v1074 = vunpack.c.l.b16 %v1018
  %v1075 = vunpack.c.l.b16 %v1019
  %v1076 = vunpack.c.l.b16 %v1020
  %v1077 = vunpack.c.l.b16 %v1021
  %v1078 = vunpack.c.l.b16 %v1022
  %v1079 = vunpack.c.l.b16 %v1023
  %v1080 = vunpack.c.l.b16 %v1024
  %v1081 = vunpack.c.l.b16 %v1025
  %v1082 = vunpack.c.l.b16 %v1026
  %v1083 = vunpack.c.l.b16 %v1027
  %v1084 = vunpack.c.l.b16 %v1028
  %v1085 = vunpack.c.l.b16 %v1029
  %v1086 = vunpack.c.l.b16 %v1030
  %v1087 = vunpack.c.l.b16 %v1031
  %v1088 = vunpack.c.l.b16 %v1032
  %v1089 = vunpack.c.l.b16 %v1033
  %v1090 = vpack.c.b16 %v1067, %v1066
  %v1091 = vpack.c.b16 %v1069, %v1068
  %v1092 = vpack.c.b16 %v1071, %v1070
  %v1093 = vpack.c.b16 %v1073, %v1072
  %v1094 = vpack.c.b16 %v1075, %v1074
  %v1095 = vpack.c.b16 %v1077, %v1076
  %v1096 = vpack.c.b16 %v1079, %v1078
  %v1097 = vpack.c.b16 %v1081, %v1080
  %v1098 = vpack.c.b16 %v1083, %v1082
  %v1099 = vpack.c.b16 %v1085, %v1084
  %v1100 = vpack.c.b16 %v1087, %v1086
  %v1101 = vpack.c.b16 %v1089, %v1088
  %v1115 = vsel %vm168, %v1037, 0
  %1117 = vmatprep.subr.bf16.mxu0 0
  %1118 = vmatpush1.bf16.msra.mxu0 %v1097
  %1119 = vmatprep.subr.bf16.mxu0 0
  %1120 = vmatpush1.bf16.msra.mxu0 %v1096
  %1121 = vmatprep.subr.bf16.mxu0 0
  %1122 = vmatpush1.bf16.msra.mxu0 %v1095
  %1123 = vmatprep.subr.bf16.mxu0 0
  %1124 = vmatpush1.bf16.msra.mxu0 %v1094
  %1125 = vmatprep.subr.bf16.mxu0 0
  %1126 = vmatpush1.bf16.msra.mxu0 %v1093
  %1127 = vmatprep.subr.bf16.mxu0 0
  %1128 = vmatpush1.bf16.msra.mxu0 %v1092
  %1129 = vmatprep.subr.bf16.mxu0 0
  %1130 = vmatpush1.bf16.msra.mxu0 %v1091
  %1131 = vmatprep.subr.bf16.mxu0 0
  %1132 = vmatpush1.bf16.msra.mxu0 %v1090
  %1133 = vmatprep.subr.bf16.mxu0 0
  %1134 = vmatpush2.bf16.msra.mxu0 0
  %1135 = vmatprep.subr.bf16.mxu0 0
  %1136 = vmatpush2.bf16.msra.mxu0 0
  %1137 = vmatprep.subr.bf16.mxu0 0
  %1138 = vmatpush2.bf16.msra.mxu0 0
  %1139 = vmatprep.subr.bf16.mxu0 0
  %1140 = vmatpush2.bf16.msra.mxu0 0
  %1141 = vmatprep.subr.bf16.mxu0 0
  %1142 = vmatpush2.bf16.msra.mxu0 %v1101
  %1143 = vmatprep.subr.bf16.mxu0 0
  %1144 = vmatpush2.bf16.msra.mxu0 %v1100
  %1145 = vmatprep.subr.bf16.mxu0 0
  %1146 = vmatpush2.bf16.msra.mxu0 %v1099
  %1147 = vmatprep.subr.bf16.mxu0 0
  %1148 = vmatpush2.bf16.msra.mxu0 %v1098
  %1149 = vmatprep.mubr.bf16.mxu0 %v1115
  %1150 = vmatmul.mubr.bf16.gmra.mxu0 %v1036
  %v1151 = vpop.f32.mrf.mxu0
  %v1152 = vadd.f32 %v1041, %v1151
  %v1153 = vpop.f32.mrf.mxu0
  %v1154 = vpop.f32.mrf.mxu0
  %v1155 = vpop.f32.mrf.mxu0
  %1156 = vdwg.mxu0
  %v1157 = vmax.f32 %v1152, 0.0
  %v1158 = vld [vmem:[%s13] sm:$0x3]
  %v1159 = vpack.c.bf16 %v1157, %v1157
  %vm1160 = vcmask 64512
  %v1162 = vsel %vm1160, %v1158, 0
  %vm1164 = vcmask 1043456
  %v1166 = vsel %vm1164, %v1159, 0
  %1168 = vmatprep.subr.bf16.mxu0 0
  %1169 = vmatpush1.bf16.msra.mxu0 0
  %1170 = vmatprep.subr.bf16.mxu0 0
  %1171 = vmatpush1.bf16.msra.mxu0 0
  %1172 = vmatprep.subr.bf16.mxu0 0
  %1173 = vmatpush1.bf16.msra.mxu0 0
  %1174 = vmatprep.subr.bf16.mxu0 0
  %1175 = vmatpush1.bf16.msra.mxu0 0
  %1176 = vmatprep.subr.bf16.mxu0 0
  %1177 = vmatpush1.bf16.msra.mxu0 0
  %1178 = vmatprep.subr.bf16.mxu0 0
  %1179 = vmatpush1.bf16.msra.mxu0 0
  %1180 = vmatprep.subr.bf16.mxu0 0
  %1181 = vmatpush1.bf16.msra.mxu0 0
  %1182 = vmatprep.subr.bf16.mxu0 0
  %1183 = vmatpush1.bf16.msra.mxu0 %v1166
  %1184 = vmatprep.subr.bf16.mxu0 0
  %1185 = vmatpush2.bf16.msra.mxu0 0
  %1186 = vmatprep.subr.bf16.mxu0 0
  %1187 = vmatpush2.bf16.msra.mxu0 0
  %1188 = vmatprep.subr.bf16.mxu0 0
  %1189 = vmatpush2.bf16.msra.mxu0 0
  %1190 = vmatprep.subr.bf16.mxu0 0
  %1191 = vmatpush2.bf16.msra.mxu0 0
  %1192 = vmatprep.subr.bf16.mxu0 0
  %1193 = vmatpush2.bf16.msra.mxu0 0
  %1194 = vmatprep.subr.bf16.mxu0 0
  %1195 = vmatpush2.bf16.msra.mxu0 0
  %1196 = vmatprep.subr.bf16.mxu0 0
  %1197 = vmatpush2.bf16.msra.mxu0 0
  %1198 = vmatprep.subr.bf16.mxu0 0
  %1199 = vmatpush2.bf16.msra.mxu0 0
  %1200 = vmatprep.mubr.bf16.mxu0 0
  %1201 = vmatmul.mubr.bf16.gmra.mxu0 %v1162
  %v1202 = vpop.f32.mrf.mxu0
  %v1203 = vadd.f32 0.0, %v1202
  %v1204 = vpop.f32.mrf.mxu0
  %v1205 = vpop.f32.mrf.mxu0
  %v1206 = vpop.f32.mrf.mxu0
  %1207 = vdwg.mxu0
  %v1209 = vrot.slane %v1203, 7
  %v1211 = vsel %vm65, 0.0, %v1209
  %v1212 = vand.u32 %v79, 1
  %v1213 = vadd.s32 %v1212, 4294967295
  %vm1214 = vcmp.ge.s32.totalorder %v1213, 0
  %vm1215 = vcmp.lt.s32.totalorder %v1213, 2
  %vm1216 = vmand %vm1214, %vm1215
  %v1217 = vsel %vm1216, 1, 0
  %vm1218 = vcmp.eq.s32.totalorder %v1217, 1
  %v1219 = vsel %vm1218, %v1211, 0.0
  %v1220 = vrot.slane %v1203, 1
  %vm1222 = vcmask 1042432
  %v1223 = vsel %vm1222, %v1220, 0.0
  %v1224 = vadd.s32 %v1212, 1
  %vm1225 = vcmp.ge.s32.totalorder %v1224, 0
  %vm1226 = vcmp.lt.s32.totalorder %v1224, 2
  %vm1227 = vmand %vm1225, %vm1226
  %v1228 = vsel %vm1227, 1, 0
  %vm1229 = vcmp.eq.s32.totalorder %v1228, 1
  %v1230 = vsel %vm1229, %v1223, 0.0
  %1231 = vrot.lane.b32.xlu0 %v1203, 32
  %v1232 = vpop.permute.xlu0 %1231
  %1235 = vrot.lane.b32.xlu0 %v1230, 64
  %v1236 = vpop.permute.xlu0 %1235
  %v1238 = vsel %vm564, %v1219, %v1232
  %v1239 = vsel %vm168, %v1238, %v1236
  %v1240 = vld [vmem:[%s7] sm:$0xf]
  %v1241 = vld [vmem:[%s7 + $0x4] sm:$0xf]
  %v1242 = vld [vmem:[%s7 + $0x8] sm:$0xf]
  %v1243 = vld [vmem:[%s7 + $0xc] sm:$0xf]
  %v1244 = vld [vmem:[%s7 + $0x10] sm:$0xf]
  %v1245 = vld [vmem:[%s7 + $0x14] sm:$0xf]
  %v1246 = vld [vmem:[%s7 + $0x18] sm:$0xf]
  %v1247 = vld [vmem:[%s7 + $0x1c] sm:$0xf]
  %v1248 = vld [vmem:[%s7 + $0x20] sm:$0xf]
  %v1249 = vld [vmem:[%s7 + $0x24] sm:$0xf]
  %v1250 = vld [vmem:[%s7 + $0x28] sm:$0xf]
  %v1251 = vld [vmem:[%s7 + $0x2c] sm:$0xf]
  %v1252 = vld [vmem:[%s7 + $0x30] sm:$0x1]
  %v1253 = vunpack.c.l.bf16 %v1252
  %v1254 = vpack.c.bf16 %v1239, %v1239
  %v1255 = vlaneseq
  %v1256 = vshrl.u32 %v1255, 7
  %v1257 = vsub.s32 0, %v1256
  %v1258 = vrot.slane %v1253, %v1257
  %v1271 = vunpack.c.l.b16 %v1240
  %v1272 = vunpack.c.l.b16 %v1241
  %v1273 = vunpack.c.l.b16 %v1242
  %v1274 = vunpack.c.l.b16 %v1243
  %v1275 = vunpack.c.l.b16 %v1244
  %v1276 = vunpack.c.l.b16 %v1245
  %v1277 = vunpack.c.l.b16 %v1246
  %v1278 = vunpack.c.l.b16 %v1247
  %v1279 = vunpack.c.l.b16 %v1248
  %v1280 = vunpack.c.l.b16 %v1249
  %v1281 = vunpack.c.l.b16 %v1250
  %v1282 = vunpack.c.l.b16 %v1251
  %v1283 = vpack.c.b16 %v1272, %v1271
  %v1284 = vpack.c.b16 %v1274, %v1273
  %v1285 = vpack.c.b16 %v1276, %v1275
  %v1286 = vpack.c.b16 %v1278, %v1277
  %v1287 = vpack.c.b16 %v1280, %v1279
  %v1288 = vpack.c.b16 %v1282, %v1281
  %vm1295 = vcmask 785408
  %v1297 = vsel %vm1295, %v1254, 0
  %1299 = vmatprep.subr.bf16.mxu0 0
  %1300 = vmatpush1.bf16.msra.mxu0 0
  %1301 = vmatprep.subr.bf16.mxu0 0
  %1302 = vmatpush1.bf16.msra.mxu0 0
  %1303 = vmatprep.subr.bf16.mxu0 0
  %1304 = vmatpush1.bf16.msra.mxu0 %v1288
  %1305 = vmatprep.subr.bf16.mxu0 0
  %1306 = vmatpush1.bf16.msra.mxu0 %v1287
  %1307 = vmatprep.subr.bf16.mxu0 0
  %1308 = vmatpush1.bf16.msra.mxu0 %v1286
  %1309 = vmatprep.subr.bf16.mxu0 0
  %1310 = vmatpush1.bf16.msra.mxu0 %v1285
  %1311 = vmatprep.subr.bf16.mxu0 0
  %1312 = vmatpush1.bf16.msra.mxu0 %v1284
  %1313 = vmatprep.subr.bf16.mxu0 0
  %1314 = vmatpush1.bf16.msra.mxu0 %v1283
  %1315 = vmatprep.subr.bf16.mxu0 0
  %1316 = vmatpush2.bf16.msra.mxu0 0
  %1317 = vmatprep.subr.bf16.mxu0 0
  %1318 = vmatpush2.bf16.msra.mxu0 0
  %1319 = vmatprep.subr.bf16.mxu0 0
  %1320 = vmatpush2.bf16.msra.mxu0 0
  %1321 = vmatprep.subr.bf16.mxu0 0
  %1322 = vmatpush2.bf16.msra.mxu0 0
  %1323 = vmatprep.subr.bf16.mxu0 0
  %1324 = vmatpush2.bf16.msra.mxu0 0
  %1325 = vmatprep.subr.bf16.mxu0 0
  %1326 = vmatpush2.bf16.msra.mxu0 0
  %1327 = vmatprep.subr.bf16.mxu0 0
  %1328 = vmatpush2.bf16.msra.mxu0 0
  %1329 = vmatprep.subr.bf16.mxu0 0
  %1330 = vmatpush2.bf16.msra.mxu0 0
  %1331 = vmatprep.mubr.bf16.mxu0 0
  %1332 = vmatmul.mubr.bf16.gmra.mxu0 %v1297
  %v1333 = vpop.f32.mrf.mxu0
  %v1334 = vadd.f32 %v1258, %v1333
  %v1335 = vpop.f32.mrf.mxu0
  %v1336 = vpop.f32.mrf.mxu0
  %v1337 = vpop.f32.mrf.mxu0
  %1338 = vdwg.mxu0
  %v1339 = vmax.f32 %v1334, 0.0
  %v1340 = vld [vmem:[%s9] sm:$0xf]
  %v1341 = vld [vmem:[%s9 + $0x4] sm:$0xf]
  %v1342 = vld [vmem:[%s9 + $0x8] sm:$0x1]
  %v1343 = vunpack.c.l.bf16 %v1342
  %v1344 = vpack.c.bf16 %v1339, %v1339
  %v1345 = vlaneseq
  %v1346 = vshrl.u32 %v1345, 7
  %v1347 = vsub.s32 0, %v1346
  %v1348 = vrot.slane %v1343, %v1347
  %v1351 = vunpack.c.l.b16 %v1340
  %v1352 = vunpack.c.l.b16 %v1341
  %v1353 = vpack.c.b16 %v1352, %v1351
  %v1356 = vsel %vm940, %v1344, 0
  %1358 = vmatprep.subr.bf16.mxu0 0
  %1359 = vmatpush1.bf16.msra.mxu0 0
  %1360 = vmatprep.subr.bf16.mxu0 0
  %1361 = vmatpush1.bf16.msra.mxu0 0
  %1362 = vmatprep.subr.bf16.mxu0 0
  %1363 = vmatpush1.bf16.msra.mxu0 0
  %1364 = vmatprep.subr.bf16.mxu0 0
  %1365 = vmatpush1.bf16.msra.mxu0 0
  %1366 = vmatprep.subr.bf16.mxu0 0
  %1367 = vmatpush1.bf16.msra.mxu0 0
  %1368 = vmatprep.subr.bf16.mxu0 0
  %1369 = vmatpush1.bf16.msra.mxu0 0
  %1370 = vmatprep.subr.bf16.mxu0 0
  %1371 = vmatpush1.bf16.msra.mxu0 0
  %1372 = vmatprep.subr.bf16.mxu0 0
  %1373 = vmatpush1.bf16.msra.mxu0 %v1353
  %1374 = vmatprep.subr.bf16.mxu0 0
  %1375 = vmatpush2.bf16.msra.mxu0 0
  %1376 = vmatprep.subr.bf16.mxu0 0
  %1377 = vmatpush2.bf16.msra.mxu0 0
  %1378 = vmatprep.subr.bf16.mxu0 0
  %1379 = vmatpush2.bf16.msra.mxu0 0
  %1380 = vmatprep.subr.bf16.mxu0 0
  %1381 = vmatpush2.bf16.msra.mxu0 0
  %1382 = vmatprep.subr.bf16.mxu0 0
  %1383 = vmatpush2.bf16.msra.mxu0 0
  %1384 = vmatprep.subr.bf16.mxu0 0
  %1385 = vmatpush2.bf16.msra.mxu0 0
  %1386 = vmatprep.subr.bf16.mxu0 0
  %1387 = vmatpush2.bf16.msra.mxu0 0
  %1388 = vmatprep.subr.bf16.mxu0 0
  %1389 = vmatpush2.bf16.msra.mxu0 0
  %1390 = vmatprep.mubr.bf16.mxu0 0
  %1391 = vmatmul.mubr.bf16.gmra.mxu0 %v1356
  %v1392 = vpop.f32.mrf.mxu0
  %v1393 = vadd.f32 %v1348, %v1392
  %v1394 = vpop.f32.mrf.mxu0
  %v1395 = vpop.f32.mrf.mxu0
  %v1396 = vpop.f32.mrf.mxu0
  %1397 = vdwg.mxu0
  %v1398 = vmax.f32 %v1393, 0.0
  %v1400 = vrot.slane %v1398, 7
  %v1402 = vsel %vm65, 0.0, %v1400
  %v1403 = vsel %vm1218, %v1402, 0.0
  %v1405 = vrot.slane %v1339, 7
  %v1407 = vsel %vm65, 0.0, %v1405
  %v1408 = vsel %vm1218, %v1407, 0.0
  %v1409 = vrot.slane %v1398, 1
  %v1411 = vsel %vm1222, %v1409, 0.0
  %v1412 = vsel %vm1229, %v1411, 0.0
  %v1413 = vrot.slane %v1339, 1
  %v1415 = vsel %vm1222, %v1413, 0.0
  %v1416 = vsel %vm1229, %v1415, 0.0
  %1418 = vrot.lane.b32.xlu0 %v1408, 16
  %v1419 = vpop.permute.xlu0 %1418
  %1421 = vrot.lane.b32.xlu0 %v1398, 32
  %v1422 = vpop.permute.xlu0 %1421
  %1424 = vrot.lane.b32.xlu0 %v1339, 48
  %v1425 = vpop.permute.xlu0 %1424
  %1428 = vrot.lane.b32.xlu0 %v1412, 64
  %v1429 = vpop.permute.xlu0 %1428
  %1432 = vrot.lane.b32.xlu0 %v1416, 80
  %v1433 = vpop.permute.xlu0 %1432
  %v1435 = vsel %vm940, %v1403, %v1419
  %v1436 = vsel %vm564, %v1435, %v1422
  %vm1437 = vcmask 392192
  %v1438 = vsel %vm1437, %v1436, %v1425
  %v1439 = vsel %vm168, %v1438, %v1429
  %vm1440 = vcmask 654336
  %v1441 = vsel %vm1440, %v1439, %v1433
  %v1442 = vld [vmem:[%s8] sm:$0xf]
  %v1443 = vld [vmem:[%s8 + $0x4] sm:$0xf]
  %v1444 = vld [vmem:[%s8 + $0x8] sm:$0xf]
  %v1445 = vld [vmem:[%s8 + $0xc] sm:$0xf]
  %v1446 = vld [vmem:[%s8 + $0x10] sm:$0xf]
  %v1447 = vld [vmem:[%s8 + $0x14] sm:$0xf]
  %v1448 = vld [vmem:[%s8 + $0x18] sm:$0xf]
  %v1449 = vld [vmem:[%s8 + $0x1c] sm:$0xf]
  %v1450 = vld [vmem:[%s8 + $0x20] sm:$0xf]
  %v1451 = vld [vmem:[%s8 + $0x24] sm:$0xf]
  %v1452 = vld [vmem:[%s8 + $0x28] sm:$0xf]
  %v1453 = vld [vmem:[%s8 + $0x2c] sm:$0xf]
  %v1454 = vld [vmem:[%s8 + $0x30] sm:$0x1]
  %v1455 = vunpack.c.l.bf16 %v1454
  %v1456 = vpack.c.bf16 %v1441, %v1441
  %v1457 = vlaneseq
  %v1458 = vshrl.u32 %v1457, 7
  %v1459 = vsub.s32 0, %v1458
  %v1460 = vrot.slane %v1455, %v1459
  %v1473 = vunpack.c.l.b16 %v1442
  %v1474 = vunpack.c.l.b16 %v1443
  %v1475 = vunpack.c.l.b16 %v1444
  %v1476 = vunpack.c.l.b16 %v1445
  %v1477 = vunpack.c.l.b16 %v1446
  %v1478 = vunpack.c.l.b16 %v1447
  %v1479 = vunpack.c.l.b16 %v1448
  %v1480 = vunpack.c.l.b16 %v1449
  %v1481 = vunpack.c.l.b16 %v1450
  %v1482 = vunpack.c.l.b16 %v1451
  %v1483 = vunpack.c.l.b16 %v1452
  %v1484 = vunpack.c.l.b16 %v1453
  %v1485 = vpack.c.b16 %v1474, %v1473
  %v1486 = vpack.c.b16 %v1476, %v1475
  %v1487 = vpack.c.b16 %v1478, %v1477
  %v1488 = vpack.c.b16 %v1480, %v1479
  %v1489 = vpack.c.b16 %v1482, %v1481
  %v1490 = vpack.c.b16 %v1484, %v1483
  %v1498 = vsel %vm1295, %v1456, 0
  %1500 = vmatprep.subr.bf16.mxu0 0
  %1501 = vmatpush1.bf16.msra.mxu0 0
  %1502 = vmatprep.subr.bf16.mxu0 0
  %1503 = vmatpush1.bf16.msra.mxu0 0
  %1504 = vmatprep.subr.bf16.mxu0 0
  %1505 = vmatpush1.bf16.msra.mxu0 %v1490
  %1506 = vmatprep.subr.bf16.mxu0 0
  %1507 = vmatpush1.bf16.msra.mxu0 %v1489
  %1508 = vmatprep.subr.bf16.mxu0 0
  %1509 = vmatpush1.bf16.msra.mxu0 %v1488
  %1510 = vmatprep.subr.bf16.mxu0 0
  %1511 = vmatpush1.bf16.msra.mxu0 %v1487
  %1512 = vmatprep.subr.bf16.mxu0 0
  %1513 = vmatpush1.bf16.msra.mxu0 %v1486
  %1514 = vmatprep.subr.bf16.mxu0 0
  %1515 = vmatpush1.bf16.msra.mxu0 %v1485
  %1516 = vmatprep.subr.bf16.mxu0 0
  %1517 = vmatpush2.bf16.msra.mxu0 0
  %1518 = vmatprep.subr.bf16.mxu0 0
  %1519 = vmatpush2.bf16.msra.mxu0 0
  %1520 = vmatprep.subr.bf16.mxu0 0
  %1521 = vmatpush2.bf16.msra.mxu0 0
  %1522 = vmatprep.subr.bf16.mxu0 0
  %1523 = vmatpush2.bf16.msra.mxu0 0
  %1524 = vmatprep.subr.bf16.mxu0 0
  %1525 = vmatpush2.bf16.msra.mxu0 0
  %1526 = vmatprep.subr.bf16.mxu0 0
  %1527 = vmatpush2.bf16.msra.mxu0 0
  %1528 = vmatprep.subr.bf16.mxu0 0
  %1529 = vmatpush2.bf16.msra.mxu0 0
  %1530 = vmatprep.subr.bf16.mxu0 0
  %1531 = vmatpush2.bf16.msra.mxu0 0
  %1532 = vmatprep.mubr.bf16.mxu0 0
  %1533 = vmatmul.mubr.bf16.gmra.mxu0 %v1498
  %v1534 = vpop.f32.mrf.mxu0
  %v1535 = vadd.f32 %v1460, %v1534
  %v1536 = vpop.f32.mrf.mxu0
  %v1537 = vpop.f32.mrf.mxu0
  %v1538 = vpop.f32.mrf.mxu0
  %1539 = vdwg.mxu0
  %v1540 = vmax.f32 %v1535, 0.0
  %v1541 = vld [vmem:[%s16] sm:$0xf]
  %v1542 = vpack.c.bf16 %v1540, %v1540
  %vm1543 = vcmask 31744
  %v1545 = vsel %vm1543, %v1541, 0
  %vm1547 = vcmask 1041408
  %v1549 = vsel %vm1547, %v1542, 0
  %1551 = vmatprep.subr.bf16.mxu0 0
  %1552 = vmatpush1.bf16.msra.mxu0 0
  %1553 = vmatprep.subr.bf16.mxu0 0
  %1554 = vmatpush1.bf16.msra.mxu0 0
  %1555 = vmatprep.subr.bf16.mxu0 0
  %1556 = vmatpush1.bf16.msra.mxu0 0
  %1557 = vmatprep.subr.bf16.mxu0 0
  %1558 = vmatpush1.bf16.msra.mxu0 0
  %1559 = vmatprep.subr.bf16.mxu0 0
  %1560 = vmatpush1.bf16.msra.mxu0 0
  %1561 = vmatprep.subr.bf16.mxu0 0
  %1562 = vmatpush1.bf16.msra.mxu0 0
  %1563 = vmatprep.subr.bf16.mxu0 0
  %1564 = vmatpush1.bf16.msra.mxu0 0
  %1565 = vmatprep.subr.bf16.mxu0 0
  %1566 = vmatpush1.bf16.msra.mxu0 %v1549
  %1567 = vmatprep.subr.bf16.mxu0 0
  %1568 = vmatpush2.bf16.msra.mxu0 0
  %1569 = vmatprep.subr.bf16.mxu0 0
  %1570 = vmatpush2.bf16.msra.mxu0 0
  %1571 = vmatprep.subr.bf16.mxu0 0
  %1572 = vmatpush2.bf16.msra.mxu0 0
  %1573 = vmatprep.subr.bf16.mxu0 0
  %1574 = vmatpush2.bf16.msra.mxu0 0
  %1575 = vmatprep.subr.bf16.mxu0 0
  %1576 = vmatpush2.bf16.msra.mxu0 0
  %1577 = vmatprep.subr.bf16.mxu0 0
  %1578 = vmatpush2.bf16.msra.mxu0 0
  %1579 = vmatprep.subr.bf16.mxu0 0
  %1580 = vmatpush2.bf16.msra.mxu0 0
  %1581 = vmatprep.subr.bf16.mxu0 0
  %1582 = vmatpush2.bf16.msra.mxu0 0
  %1583 = vmatprep.mubr.bf16.mxu0 0
  %1584 = vmatmul.mubr.bf16.gmra.mxu0 %v1545
  %v1585 = vpop.f32.mrf.mxu0
  %v1586 = vadd.f32 0.0, %v1585
  %v1587 = vpop.f32.mrf.mxu0
  %v1588 = vpop.f32.mrf.mxu0
  %v1589 = vpop.f32.mrf.mxu0
  %1590 = vdwg.mxu0
  %v1592 = vrot.slane %v1586, 7
  %v1594 = vsel %vm65, 0.0, %v1592
  %v1595 = vsel %vm994, %v1594, 0.0
  %v1597 = vrot.slane %v1157, 7
  %v1599 = vsel %vm65, 0.0, %v1597
  %v1600 = vsel %vm994, %v1599, 0.0
  %v1601 = vrot.slane %v1586, 1
  %v1603 = vsel %vm115, %v1601, 0.0
  %v1604 = vsel %vm1004, %v1603, 0.0
  %v1605 = vrot.slane %v1157, 1
  %v1607 = vsel %vm115, %v1605, 0.0
  %v1608 = vsel %vm1004, %v1607, 0.0
  %1610 = vrot.lane.b32.xlu0 %v1600, 16
  %v1611 = vpop.permute.xlu0 %1610
  %1613 = vrot.lane.b32.xlu0 %v1586, 48
  %v1614 = vpop.permute.xlu0 %1613
  %1616 = vrot.lane.b32.xlu0 %v1157, 64
  %v1617 = vpop.permute.xlu0 %1616
  %1620 = vrot.lane.b32.xlu0 %v1604, 96
  %v1621 = vpop.permute.xlu0 %1620
  %1624 = vrot.lane.b32.xlu0 %v1608, 112
  %v1625 = vpop.permute.xlu0 %1624
  %v1627 = vsel %vm940, %v1595, %v1611
  %v1628 = vsel %vm1437, %v1627, %v1614
  %v1629 = vsel %vm168, %v1628, %v1617
  %v1630 = vsel %vm1295, %v1629, %v1621
  %vm1631 = vcmask 916480
  %v1632 = vsel %vm1631, %v1630, %v1625
  %v1633 = vld [vmem:[%s6] sm:$0xf]
  %v1634 = vld [vmem:[%s6 + $0x4] sm:$0xf]
  %v1635 = vld [vmem:[%s6 + $0x8] sm:$0xf]
  %v1636 = vld [vmem:[%s6 + $0xc] sm:$0xf]
  %v1637 = vld [vmem:[%s6 + $0x10] sm:$0xf]
  %v1638 = vld [vmem:[%s6 + $0x14] sm:$0xf]
  %v1639 = vld [vmem:[%s6 + $0x18] sm:$0xf]
  %v1640 = vld [vmem:[%s6 + $0x1c] sm:$0xf]
  %v1641 = vld [vmem:[%s6 + $0x20] sm:$0xf]
  %v1642 = vld [vmem:[%s6 + $0x24] sm:$0xf]
  %v1643 = vld [vmem:[%s6 + $0x28] sm:$0xf]
  %v1644 = vld [vmem:[%s6 + $0x2c] sm:$0xf]
  %v1645 = vld [vmem:[%s6 + $0x30] sm:$0xf]
  %v1646 = vld [vmem:[%s6 + $0x34] sm:$0xf]
  %v1647 = vld [vmem:[%s6 + $0x38] sm:$0xf]
  %v1648 = vld [vmem:[%s6 + $0x3c] sm:$0xf]
  %v1649 = vld [vmem:[%s6 + $0x40] sm:$0xf]
  %v1650 = vld [vmem:[%s6 + $0x44] sm:$0xf]
  %v1651 = vld [vmem:[%s6 + $0x48] sm:$0x1]
  %v1652 = vunpack.c.l.bf16 %v1651
  %v1653 = vpack.c.bf16 %v1632, %v1632
  %v1654 = vpack.c.bf16 %v1625, %v1625
  %v1655 = vlaneseq
  %v1656 = vshrl.u32 %v1655, 7
  %v1657 = vsub.s32 0, %v1656
  %v1658 = vrot.slane %v1652, %v1657
  %v1677 = vunpack.c.l.b16 %v1633
  %v1678 = vunpack.c.l.b16 %v1634
  %v1679 = vunpack.c.l.b16 %v1635
  %v1680 = vunpack.c.l.b16 %v1636
  %v1681 = vunpack.c.l.b16 %v1637
  %v1682 = vunpack.c.l.b16 %v1638
  %v1683 = vunpack.c.l.b16 %v1639
  %v1684 = vunpack.c.l.b16 %v1640
  %v1685 = vunpack.c.l.b16 %v1641
  %v1686 = vunpack.c.l.b16 %v1642
  %v1687 = vunpack.c.l.b16 %v1643
  %v1688 = vunpack.c.l.b16 %v1644
  %v1689 = vunpack.c.l.b16 %v1645
  %v1690 = vunpack.c.l.b16 %v1646
  %v1691 = vunpack.c.l.b16 %v1647
  %v1692 = vunpack.c.l.b16 %v1648
  %v1693 = vunpack.c.l.b16 %v1649
  %v1694 = vunpack.c.l.b16 %v1650
  %v1695 = vpack.c.b16 %v1678, %v1677
  %v1696 = vpack.c.b16 %v1680, %v1679
  %v1697 = vpack.c.b16 %v1682, %v1681
  %v1698 = vpack.c.b16 %v1684, %v1683
  %v1699 = vpack.c.b16 %v1686, %v1685
  %v1700 = vpack.c.b16 %v1688, %v1687
  %v1701 = vpack.c.b16 %v1690, %v1689
  %v1702 = vpack.c.b16 %v1692, %v1691
  %v1703 = vpack.c.b16 %v1694, %v1693
  %v1714 = vsel %vm940, %v1654, 0
  %1716 = vmatprep.subr.bf16.mxu0 0
  %1717 = vmatpush1.bf16.msra.mxu0 %v1702
  %1718 = vmatprep.subr.bf16.mxu0 0
  %1719 = vmatpush1.bf16.msra.mxu0 %v1701
  %1720 = vmatprep.subr.bf16.mxu0 0
  %1721 = vmatpush1.bf16.msra.mxu0 %v1700
  %1722 = vmatprep.subr.bf16.mxu0 0
  %1723 = vmatpush1.bf16.msra.mxu0 %v1699
  %1724 = vmatprep.subr.bf16.mxu0 0
  %1725 = vmatpush1.bf16.msra.mxu0 %v1698
  %1726 = vmatprep.subr.bf16.mxu0 0
  %1727 = vmatpush1.bf16.msra.mxu0 %v1697
  %1728 = vmatprep.subr.bf16.mxu0 0
  %1729 = vmatpush1.bf16.msra.mxu0 %v1696
  %1730 = vmatprep.subr.bf16.mxu0 0
  %1731 = vmatpush1.bf16.msra.mxu0 %v1695
  %1732 = vmatprep.subr.bf16.mxu0 0
  %1733 = vmatpush2.bf16.msra.mxu0 0
  %1734 = vmatprep.subr.bf16.mxu0 0
  %1735 = vmatpush2.bf16.msra.mxu0 0
  %1736 = vmatprep.subr.bf16.mxu0 0
  %1737 = vmatpush2.bf16.msra.mxu0 0
  %1738 = vmatprep.subr.bf16.mxu0 0
  %1739 = vmatpush2.bf16.msra.mxu0 0
  %1740 = vmatprep.subr.bf16.mxu0 0
  %1741 = vmatpush2.bf16.msra.mxu0 0
  %1742 = vmatprep.subr.bf16.mxu0 0
  %1743 = vmatpush2.bf16.msra.mxu0 0
  %1744 = vmatprep.subr.bf16.mxu0 0
  %1745 = vmatpush2.bf16.msra.mxu0 0
  %1746 = vmatprep.subr.bf16.mxu0 0
  %1747 = vmatpush2.bf16.msra.mxu0 %v1703
  %1748 = vmatprep.mubr.bf16.mxu0 %v1714
  %1749 = vmatmul.mubr.bf16.gmra.mxu0 %v1653
  %v1750 = vpop.f32.mrf.mxu0
  %v1751 = vadd.f32 %v1658, %v1750
  %v1752 = vpop.f32.mrf.mxu0
  %v1753 = vpop.f32.mrf.mxu0
  %v1754 = vpop.f32.mrf.mxu0
  %1755 = vdwg.mxu0
  %v1756 = vmax.f32 %v1751, 0.0
  %v1757 = vld [vmem:[%s15] sm:$0xf]
  %v1758 = vld [vmem:[%s15 + $0x4] sm:$0xf]
  %v1759 = vpack.c.bf16 %v1756, %v1756
  %v1762 = vunpack.c.l.b16 %v1757
  %v1763 = vunpack.c.l.b16 %v1758
  %v1764 = vpack.c.b16 %v1763, %v1762
  %v1766 = vsel %vm1160, %v1764, 0
  %v1769 = vsel %vm1164, %v1759, 0
  %1771 = vmatprep.subr.bf16.mxu0 0
  %1772 = vmatpush1.bf16.msra.mxu0 0
  %1773 = vmatprep.subr.bf16.mxu0 0
  %1774 = vmatpush1.bf16.msra.mxu0 0
  %1775 = vmatprep.subr.bf16.mxu0 0
  %1776 = vmatpush1.bf16.msra.mxu0 0
  %1777 = vmatprep.subr.bf16.mxu0 0
  %1778 = vmatpush1.bf16.msra.mxu0 0
  %1779 = vmatprep.subr.bf16.mxu0 0
  %1780 = vmatpush1.bf16.msra.mxu0 0
  %1781 = vmatprep.subr.bf16.mxu0 0
  %1782 = vmatpush1.bf16.msra.mxu0 0
  %1783 = vmatprep.subr.bf16.mxu0 0
  %1784 = vmatpush1.bf16.msra.mxu0 0
  %1785 = vmatprep.subr.bf16.mxu0 0
  %1786 = vmatpush1.bf16.msra.mxu0 %v1769
  %1787 = vmatprep.subr.bf16.mxu0 0
  %1788 = vmatpush2.bf16.msra.mxu0 0
  %1789 = vmatprep.subr.bf16.mxu0 0
  %1790 = vmatpush2.bf16.msra.mxu0 0
  %1791 = vmatprep.subr.bf16.mxu0 0
  %1792 = vmatpush2.bf16.msra.mxu0 0
  %1793 = vmatprep.subr.bf16.mxu0 0
  %1794 = vmatpush2.bf16.msra.mxu0 0
  %1795 = vmatprep.subr.bf16.mxu0 0
  %1796 = vmatpush2.bf16.msra.mxu0 0
  %1797 = vmatprep.subr.bf16.mxu0 0
  %1798 = vmatpush2.bf16.msra.mxu0 0
  %1799 = vmatprep.subr.bf16.mxu0 0
  %1800 = vmatpush2.bf16.msra.mxu0 0
  %1801 = vmatprep.subr.bf16.mxu0 0
  %1802 = vmatpush2.bf16.msra.mxu0 0
  %1803 = vmatprep.mubr.bf16.mxu0 0
  %1804 = vmatmul.mubr.bf16.gmra.mxu0 %v1766
  %v1805 = vpop.f32.mrf.mxu0
  %v1806 = vadd.f32 0.0, %v1805
  %v1807 = vpop.f32.mrf.mxu0
  %v1808 = vpop.f32.mrf.mxu0
  %v1809 = vadd.f32 0.0, %v1808
  %v1810 = vpop.f32.mrf.mxu0
  %1811 = vdwg.mxu0
  %v1814 = vrot.slane %v1806, 7
  %v1815 = vrot.slane %v1809, 7
  %v1816 = vsel %vm65, %v1814, %v1815
  %v1819 = vsel %vm65, 0.0, %v1814
  %v1820 = vsel %vm629, %v1819, 0.0
  %v1821 = vsel %vm630, %v1816, 0.0
  %v1824 = vrot.slane %v936, 7
  %v1825 = vrot.slane %v937, 7
  %v1826 = vsel %vm65, %v1824, %v1825
  %v1829 = vsel %vm65, 0.0, %v1824
  %v1830 = vsel %vm629, %v1829, 0.0
  %v1831 = vsel %vm630, %v1826, 0.0
  %v1832 = vrot.slane %v1806, 1
  %v1833 = vrot.slane %v1809, 1
  %v1834 = vsel %vm115, %v1832, %v1833
  %v1837 = vsel %vm115, %v1833, 0.0
  %v1838 = vsel %vm649, %v1834, 0.0
  %v1839 = vsel %vm650, %v1837, 0.0
  %v1840 = vrot.slane %v936, 1
  %v1841 = vrot.slane %v937, 1
  %v1842 = vsel %vm115, %v1840, %v1841
  %v1845 = vsel %vm115, %v1841, 0.0
  %v1846 = vsel %vm649, %v1842, 0.0
  %v1847 = vsel %vm650, %v1845, 0.0
  %1850 = vrot.lane.b32.xlu0 %v1830, 32
  %v1851 = vpop.permute.xlu0 %1850
  %1852 = vrot.lane.b32.xlu0 %v1831, 32
  %v1853 = vpop.permute.xlu0 %1852
  %1856 = vrot.lane.b32.xlu0 %v1806, 96
  %v1857 = vpop.permute.xlu0 %1856
  %1858 = vrot.lane.b32.xlu0 %v1809, 96
  %v1859 = vpop.permute.xlu0 %1858
  %1864 = vrot.lane.b32.xlu0 %v1838, 64
  %v1865 = vpop.permute.xlu0 %1864
  %1866 = vrot.lane.b32.xlu0 %v1839, 64
  %v1867 = vpop.permute.xlu0 %1866
  %1872 = vrot.lane.b32.xlu0 %v1846, 96
  %v1873 = vpop.permute.xlu0 %1872
  %1874 = vrot.lane.b32.xlu0 %v1847, 96
  %v1875 = vpop.permute.xlu0 %1874
  %v1878 = vsel %vm564, %v1820, %v1851
  %v1879 = vsel %vm564, %v1821, %v1853
  %v1880 = vsel %vm1295, %v1878, %v1857
  %v1881 = vsel %vm1295, %v1879, %v1859
  %v1882 = vsel %vm168, %v936, %v1865
  %v1883 = vsel %vm168, %v937, %v1867
  %v1884 = vsel %vm1295, %v1882, %v1873
  %v1885 = vsel %vm1295, %v1883, %v1875
  %v1886 = vld [vmem:[%s4] sm:$0xf]
  %v1887 = vld [vmem:[%s4 + $0x4] sm:$0xf]
  %v1888 = vld [vmem:[%s4 + $0x8] sm:$0xf]
  %v1889 = vld [vmem:[%s4 + $0xc] sm:$0xf]
  %v1890 = vld [vmem:[%s4 + $0x10] sm:$0xf]
  %v1891 = vld [vmem:[%s4 + $0x14] sm:$0xf]
  %v1892 = vld [vmem:[%s4 + $0x18] sm:$0xf]
  %v1893 = vld [vmem:[%s4 + $0x1c] sm:$0xf]
  %v1894 = vld [vmem:[%s4 + $0x20] sm:$0xf]
  %v1895 = vld [vmem:[%s4 + $0x24] sm:$0xf]
  %v1896 = vld [vmem:[%s4 + $0x28] sm:$0xf]
  %v1897 = vld [vmem:[%s4 + $0x2c] sm:$0xf]
  %v1898 = vld [vmem:[%s4 + $0x30] sm:$0xf]
  %v1899 = vld [vmem:[%s4 + $0x34] sm:$0xf]
  %v1900 = vld [vmem:[%s4 + $0x38] sm:$0xf]
  %v1901 = vld [vmem:[%s4 + $0x3c] sm:$0xf]
  %v1902 = vld [vmem:[%s4 + $0x40] sm:$0xf]
  %v1903 = vld [vmem:[%s4 + $0x44] sm:$0xf]
  %v1904 = vld [vmem:[%s4 + $0x48] sm:$0xf]
  %v1905 = vld [vmem:[%s4 + $0x4c] sm:$0xf]
  %v1906 = vld [vmem:[%s4 + $0x50] sm:$0xf]
  %v1907 = vld [vmem:[%s4 + $0x54] sm:$0xf]
  %v1908 = vld [vmem:[%s4 + $0x58] sm:$0xf]
  %v1909 = vld [vmem:[%s4 + $0x5c] sm:$0xf]
  %v1910 = vld [vmem:[%s4 + $0x60] sm:$0xf]
  %v1911 = vld [vmem:[%s4 + $0x64] sm:$0xf]
  %v1912 = vld [vmem:[%s4 + $0x68] sm:$0xf]
  %v1913 = vld [vmem:[%s4 + $0x6c] sm:$0xf]
  %v1914 = vld [vmem:[%s4 + $0x70] sm:$0xf]
  %v1915 = vld [vmem:[%s4 + $0x74] sm:$0xf]
  %v1916 = vld [vmem:[%s4 + $0x78] sm:$0xf]
  %v1917 = vld [vmem:[%s4 + $0x7c] sm:$0xf]
  %v1918 = vld [vmem:[%s4 + $0x80] sm:$0xf]
  %v1919 = vld [vmem:[%s4 + $0x84] sm:$0xf]
  %v1920 = vld [vmem:[%s4 + $0x88] sm:$0xf]
  %v1921 = vld [vmem:[%s4 + $0x8c] sm:$0xf]
  %v1922 = vld [vmem:[%s4 + $0x90] sm:$0x1]
  %v1923 = vunpack.c.l.bf16 %v1922
  %v1924 = vpack.c.bf16 %v1881, %v1880
  %v1925 = vpack.c.bf16 %v1885, %v1884
  %v1926 = vpack.c.bf16 %v1875, %v1873
  %v1927 = vlaneseq
  %v1928 = vshrl.u32 %v1927, 7
  %v1929 = vsub.s32 0, %v1928
  %v1930 = vrot.slane %v1923, %v1929
  %v1967 = vunpack.c.l.b16 %v1886
  %v1968 = vunpack.c.l.b16 %v1887
  %v1969 = vunpack.c.l.b16 %v1888
  %v1970 = vunpack.c.l.b16 %v1889
  %v1971 = vunpack.c.l.b16 %v1890
  %v1972 = vunpack.c.l.b16 %v1891
  %v1973 = vunpack.c.l.b16 %v1892
  %v1974 = vunpack.c.l.b16 %v1893
  %v1975 = vunpack.c.l.b16 %v1894
  %v1976 = vunpack.c.l.b16 %v1895
  %v1977 = vunpack.c.l.b16 %v1896
  %v1978 = vunpack.c.l.b16 %v1897
  %v1979 = vunpack.c.l.b16 %v1898
  %v1980 = vunpack.c.l.b16 %v1899
  %v1981 = vunpack.c.l.b16 %v1900
  %v1982 = vunpack.c.l.b16 %v1901
  %v1983 = vunpack.c.l.b16 %v1902
  %v1984 = vunpack.c.l.b16 %v1903
  %v1985 = vunpack.c.l.b16 %v1904
  %v1986 = vunpack.c.l.b16 %v1905
  %v1987 = vunpack.c.l.b16 %v1906
  %v1988 = vunpack.c.l.b16 %v1907
  %v1989 = vunpack.c.l.b16 %v1908
  %v1990 = vunpack.c.l.b16 %v1909
  %v1991 = vunpack.c.l.b16 %v1910
  %v1992 = vunpack.c.l.b16 %v1911
  %v1993 = vunpack.c.l.b16 %v1912
  %v1994 = vunpack.c.l.b16 %v1913
  %v1995 = vunpack.c.l.b16 %v1914
  %v1996 = vunpack.c.l.b16 %v1915
  %v1997 = vunpack.c.l.b16 %v1916
  %v1998 = vunpack.c.l.b16 %v1917
  %v1999 = vunpack.c.l.b16 %v1918
  %v2000 = vunpack.c.l.b16 %v1919
  %v2001 = vunpack.c.l.b16 %v1920
  %v2002 = vunpack.c.l.b16 %v1921
  %v2003 = vpack.c.b16 %v1968, %v1967
  %v2004 = vpack.c.b16 %v1970, %v1969
  %v2005 = vpack.c.b16 %v1972, %v1971
  %v2006 = vpack.c.b16 %v1974, %v1973
  %v2007 = vpack.c.b16 %v1976, %v1975
  %v2008 = vpack.c.b16 %v1978, %v1977
  %v2009 = vpack.c.b16 %v1980, %v1979
  %v2010 = vpack.c.b16 %v1982, %v1981
  %v2011 = vpack.c.b16 %v1984, %v1983
  %v2012 = vpack.c.b16 %v1986, %v1985
  %v2013 = vpack.c.b16 %v1988, %v1987
  %v2014 = vpack.c.b16 %v1990, %v1989
  %v2015 = vpack.c.b16 %v1992, %v1991
  %v2016 = vpack.c.b16 %v1994, %v1993
  %v2017 = vpack.c.b16 %v1996, %v1995
  %v2018 = vpack.c.b16 %v1998, %v1997
  %v2019 = vpack.c.b16 %v2000, %v1999
  %v2020 = vpack.c.b16 %v2002, %v2001
  %v2040 = vsel %vm564, %v1926, 0
  %2042 = vmatprep.subr.bf16.mxu0 0
  %2043 = vmatpush1.bf16.msra.mxu0 %v2010
  %2044 = vmatprep.subr.bf16.mxu0 0
  %2045 = vmatpush1.bf16.msra.mxu0 %v2009
  %2046 = vmatprep.subr.bf16.mxu0 0
  %2047 = vmatpush1.bf16.msra.mxu0 %v2008
  %2048 = vmatprep.subr.bf16.mxu0 0
  %2049 = vmatpush1.bf16.msra.mxu0 %v2007
  %2050 = vmatprep.subr.bf16.mxu0 0
  %2051 = vmatpush1.bf16.msra.mxu0 %v2006
  %2052 = vmatprep.subr.bf16.mxu0 0
  %2053 = vmatpush1.bf16.msra.mxu0 %v2005
  %2054 = vmatprep.subr.bf16.mxu0 0
  %2055 = vmatpush1.bf16.msra.mxu0 %v2004
  %2056 = vmatprep.subr.bf16.mxu0 0
  %2057 = vmatpush1.bf16.msra.mxu0 %v2003
  %2058 = vmatprep.subr.bf16.mxu0 0
  %2059 = vmatpush2.bf16.msra.mxu0 %v2018
  %2060 = vmatprep.subr.bf16.mxu0 0
  %2061 = vmatpush2.bf16.msra.mxu0 %v2017
  %2062 = vmatprep.subr.bf16.mxu0 0
  %2063 = vmatpush2.bf16.msra.mxu0 %v2016
  %2064 = vmatprep.subr.bf16.mxu0 0
  %2065 = vmatpush2.bf16.msra.mxu0 %v2015
  %2066 = vmatprep.subr.bf16.mxu0 0
  %2067 = vmatpush2.bf16.msra.mxu0 %v2014
  %2068 = vmatprep.subr.bf16.mxu0 0
  %2069 = vmatpush2.bf16.msra.mxu0 %v2013
  %2070 = vmatprep.subr.bf16.mxu0 0
  %2071 = vmatpush2.bf16.msra.mxu0 %v2012
  %2072 = vmatprep.subr.bf16.mxu0 0
  %2073 = vmatpush2.bf16.msra.mxu0 %v2011
  %2074 = vmatprep.mubr.bf16.mxu0 %v1925
  %2075 = vmatmul.mubr.bf16.gmra.mxu0 %v1924
  %v2076 = vpop.f32.mrf.mxu0
  %v2077 = vadd.f32 %v1930, %v2076
  %v2078 = vpop.f32.mrf.mxu0
  %v2079 = vpop.f32.mrf.mxu0
  %v2080 = vadd.f32 %v1930, %v2079
  %v2081 = vpop.f32.mrf.mxu0
  %2082 = vdwg.mxu0
  %2083 = vmatprep.subr.bf16.mxu0 0
  %2084 = vmatpush1.bf16.msra.mxu0 0
  %2085 = vmatprep.subr.bf16.mxu0 0
  %2086 = vmatpush1.bf16.msra.mxu0 0
  %2087 = vmatprep.subr.bf16.mxu0 0
  %2088 = vmatpush1.bf16.msra.mxu0 0
  %2089 = vmatprep.subr.bf16.mxu0 0
  %2090 = vmatpush1.bf16.msra.mxu0 0
  %2091 = vmatprep.subr.bf16.mxu0 0
  %2092 = vmatpush1.bf16.msra.mxu0 0
  %2093 = vmatprep.subr.bf16.mxu0 0
  %2094 = vmatpush1.bf16.msra.mxu0 0
  %2095 = vmatprep.subr.bf16.mxu0 0
  %2096 = vmatpush1.bf16.msra.mxu0 %v2020
  %2097 = vmatprep.subr.bf16.mxu0 0
  %2098 = vmatpush1.bf16.msra.mxu0 %v2019
  %2099 = vmatprep.subr.bf16.mxu0 0
  %2100 = vmatpush2.bf16.msra.mxu0 0
  %2101 = vmatprep.subr.bf16.mxu0 0
  %2102 = vmatpush2.bf16.msra.mxu0 0
  %2103 = vmatprep.subr.bf16.mxu0 0
  %2104 = vmatpush2.bf16.msra.mxu0 0
  %2105 = vmatprep.subr.bf16.mxu0 0
  %2106 = vmatpush2.bf16.msra.mxu0 0
  %2107 = vmatprep.subr.bf16.mxu0 0
  %2108 = vmatpush2.bf16.msra.mxu0 0
  %2109 = vmatprep.subr.bf16.mxu0 0
  %2110 = vmatpush2.bf16.msra.mxu0 0
  %2111 = vmatprep.subr.bf16.mxu0 0
  %2112 = vmatpush2.bf16.msra.mxu0 0
  %2113 = vmatprep.subr.bf16.mxu0 0
  %2114 = vmatpush2.bf16.msra.mxu0 0
  %2115 = vmatprep.mubr.bf16.mxu0 0
  %2116 = vmatmul.mubr.bf16.gmra.mxu0 %v2040
  %v2117 = vpop.f32.mrf.mxu0
  %v2118 = vadd.f32 %v2077, %v2117
  %v2119 = vpop.f32.mrf.mxu0
  %v2120 = vpop.f32.mrf.mxu0
  %v2121 = vadd.f32 %v2080, %v2120
  %v2122 = vpop.f32.mrf.mxu0
  %2123 = vdwg.mxu0
  %v2124 = vmax.f32 %v2118, 0.0
  %v2125 = vmax.f32 %v2121, 0.0
  %v2126 = vld [vmem:[%s14] sm:$0xf]
  %v2127 = vld [vmem:[%s14 + $0x4] sm:$0xf]
  %v2128 = vld [vmem:[%s14 + $0x8] sm:$0xf]
  %v2129 = vld [vmem:[%s14 + $0xc] sm:$0xf]
  %v2130 = vpack.c.bf16 %v2125, %v2124
  %v2135 = vunpack.c.l.b16 %v2126
  %v2136 = vunpack.c.l.b16 %v2127
  %v2137 = vunpack.c.l.b16 %v2128
  %v2138 = vunpack.c.l.b16 %v2129
  %v2139 = vpack.c.b16 %v2136, %v2135
  %v2140 = vpack.c.b16 %v2138, %v2137
  %v2142 = vsel %vm940, %v2139, 0
  %v2145 = vsel %vm940, %v2140, 0
  %2147 = vmatprep.subr.bf16.mxu0 0
  %2148 = vmatpush1.bf16.msra.mxu0 0
  %2149 = vmatprep.subr.bf16.mxu0 0
  %2150 = vmatpush1.bf16.msra.mxu0 0
  %2151 = vmatprep.subr.bf16.mxu0 0
  %2152 = vmatpush1.bf16.msra.mxu0 0
  %2153 = vmatprep.subr.bf16.mxu0 0
  %2154 = vmatpush1.bf16.msra.mxu0 0
  %2155 = vmatprep.subr.bf16.mxu0 0
  %2156 = vmatpush1.bf16.msra.mxu0 0
  %2157 = vmatprep.subr.bf16.mxu0 0
  %2158 = vmatpush1.bf16.msra.mxu0 0
  %2159 = vmatprep.subr.bf16.mxu0 0
  %2160 = vmatpush1.bf16.msra.mxu0 0
  %2161 = vmatprep.subr.bf16.mxu0 0
  %2162 = vmatpush1.bf16.msra.mxu0 %v2130
  %2163 = vmatprep.subr.bf16.mxu0 0
  %2164 = vmatpush2.bf16.msra.mxu0 0
  %2165 = vmatprep.subr.bf16.mxu0 0
  %2166 = vmatpush2.bf16.msra.mxu0 0
  %2167 = vmatprep.subr.bf16.mxu0 0
  %2168 = vmatpush2.bf16.msra.mxu0 0
  %2169 = vmatprep.subr.bf16.mxu0 0
  %2170 = vmatpush2.bf16.msra.mxu0 0
  %2171 = vmatprep.subr.bf16.mxu0 0
  %2172 = vmatpush2.bf16.msra.mxu0 0
  %2173 = vmatprep.subr.bf16.mxu0 0
  %2174 = vmatpush2.bf16.msra.mxu0 0
  %2175 = vmatprep.subr.bf16.mxu0 0
  %2176 = vmatpush2.bf16.msra.mxu0 0
  %2177 = vmatprep.subr.bf16.mxu0 0
  %2178 = vmatpush2.bf16.msra.mxu0 0
  %2179 = vmatprep.mubr.bf16.mxu0 0
  %2180 = vmatmul.mubr.bf16.gmra.mxu0 %v2142
  %v2181 = vpop.f32.mrf.mxu0
  %v2182 = vadd.f32 0.0, %v2181
  %v2183 = vpop.f32.mrf.mxu0
  %v2184 = vpop.f32.mrf.mxu0
  %v2185 = vadd.f32 0.0, %v2184
  %v2186 = vpop.f32.mrf.mxu0
  %2187 = vmatprep.mubr.bf16.mxu0 0
  %2188 = vmatmul.mubr.bf16.gmra.mxu0 %v2145
  %v2189 = vpop.f32.mrf.mxu0
  %v2190 = vadd.f32 0.0, %v2189
  %v2191 = vpop.f32.mrf.mxu0
  %v2192 = vpop.f32.mrf.mxu0
  %v2193 = vadd.f32 0.0, %v2192
  %v2194 = vpop.f32.mrf.mxu0
  %2195 = vdwg.mxu0
  %v2200 = vrot.slane %v2182, 7
  %v2201 = vrot.slane %v2185, 7
  %v2202 = vsel %vm65, %v2200, %v2201
  %v2203 = vrot.slane %v2190, 7
  %v2204 = vsel %vm65, %v2201, %v2203
  %v2205 = vrot.slane %v2193, 7
  %v2206 = vsel %vm65, %v2203, %v2205
  %v2211 = vsel %vm65, 0.0, %v2200
  %v2212 = vsel %vm107, %v2211, 0.0
  %v2213 = vsel %vm108, %v2202, 0.0
  %v2214 = vsel %vm109, %v2204, 0.0
  %v2215 = vsel %vm110, %v2206, 0.0
  %v2220 = vrot.slane %v551, 7
  %v2221 = vrot.slane %v552, 7
  %v2222 = vsel %vm65, %v2220, %v2221
  %v2223 = vrot.slane %v553, 7
  %v2224 = vsel %vm65, %v2221, %v2223
  %v2225 = vrot.slane %v554, 7
  %v2226 = vsel %vm65, %v2223, %v2225
  %v2231 = vsel %vm65, 0.0, %v2220
  %v2232 = vsel %vm107, %v2231, 0.0
  %v2233 = vsel %vm108, %v2222, 0.0
  %v2234 = vsel %vm109, %v2224, 0.0
  %v2235 = vsel %vm110, %v2226, 0.0
  %v2236 = vrot.slane %v2182, 1
  %v2237 = vrot.slane %v2185, 1
  %v2238 = vsel %vm115, %v2236, %v2237
  %v2239 = vrot.slane %v2190, 1
  %v2240 = vsel %vm115, %v2237, %v2239
  %v2241 = vrot.slane %v2193, 1
  %v2242 = vsel %vm115, %v2239, %v2241
  %v2247 = vsel %vm115, %v2241, 0.0
  %v2248 = vsel %vm148, %v2238, 0.0
  %v2249 = vsel %vm149, %v2240, 0.0
  %v2250 = vsel %vm150, %v2242, 0.0
  %v2251 = vsel %vm151, %v2247, 0.0
  %v2252 = vrot.slane %v551, 1
  %v2253 = vrot.slane %v552, 1
  %v2254 = vsel %vm115, %v2252, %v2253
  %v2255 = vrot.slane %v553, 1
  %v2256 = vsel %vm115, %v2253, %v2255
  %v2257 = vrot.slane %v554, 1
  %v2258 = vsel %vm115, %v2255, %v2257
  %v2263 = vsel %vm115, %v2257, 0.0
  %v2264 = vsel %vm148, %v2254, 0.0
  %v2265 = vsel %vm149, %v2256, 0.0
  %v2266 = vsel %vm150, %v2258, 0.0
  %v2267 = vsel %vm151, %v2263, 0.0
  %2272 = vrot.lane.b32.xlu0 %v2232, 64
  %v2273 = vpop.permute.xlu0 %2272
  %2274 = vrot.lane.b32.xlu0 %v2233, 64
  %v2275 = vpop.permute.xlu0 %2274
  %2276 = vrot.lane.b32.xlu0 %v2234, 64
  %v2277 = vpop.permute.xlu0 %2276
  %2278 = vrot.lane.b32.xlu0 %v2235, 64
  %v2279 = vpop.permute.xlu0 %2278
  %2284 = vrot.lane.b32.xlu0 %v2182, 64
  %v2285 = vpop.permute.xlu0 %2284
  %2286 = vrot.lane.b32.xlu0 %v2185, 64
  %v2287 = vpop.permute.xlu0 %2286
  %2288 = vrot.lane.b32.xlu0 %v2190, 64
  %v2289 = vpop.permute.xlu0 %2288
  %2290 = vrot.lane.b32.xlu0 %v2193, 64
  %v2291 = vpop.permute.xlu0 %2290
  %2300 = vrot.lane.b32.xlu0 %v2264, 64
  %v2301 = vpop.permute.xlu0 %2300
  %2302 = vrot.lane.b32.xlu0 %v2265, 64
  %v2303 = vpop.permute.xlu0 %2302
  %2304 = vrot.lane.b32.xlu0 %v2266, 64
  %v2305 = vpop.permute.xlu0 %2304
  %2306 = vrot.lane.b32.xlu0 %v2267, 64
  %v2307 = vpop.permute.xlu0 %2306
  %v2312 = vsel %vm168, %v2212, %v2273
  %v2313 = vsel %vm168, %v2213, %v2275
  %v2314 = vsel %vm168, %v2214, %v2277
  %v2315 = vsel %vm168, %v2215, %v2279
  %v2316 = vsel %vm168, %v2273, %v2285
  %v2317 = vsel %vm168, %v2275, %v2287
  %v2318 = vsel %vm168, %v2277, %v2289
  %v2319 = vsel %vm168, %v2279, %v2291
  %v2320 = vsel %vm168, %v2248, %v2301
  %v2321 = vsel %vm168, %v2249, %v2303
  %v2322 = vsel %vm168, %v2250, %v2305
  %v2323 = vsel %vm168, %v2251, %v2307
  %v2324 = vld [vmem:[%s2] sm:$0xf]
  %v2325 = vld [vmem:[%s2 + $0x4] sm:$0xf]
  %v2326 = vld [vmem:[%s2 + $0x8] sm:$0xf]
  %v2327 = vld [vmem:[%s2 + $0xc] sm:$0xf]
  %v2328 = vld [vmem:[%s2 + $0x10] sm:$0xf]
  %v2329 = vld [vmem:[%s2 + $0x14] sm:$0xf]
  %v2330 = vld [vmem:[%s2 + $0x18] sm:$0xf]
  %v2331 = vld [vmem:[%s2 + $0x1c] sm:$0xf]
  %v2332 = vld [vmem:[%s2 + $0x20] sm:$0xf]
  %v2333 = vld [vmem:[%s2 + $0x24] sm:$0xf]
  %v2334 = vld [vmem:[%s2 + $0x28] sm:$0xf]
  %v2335 = vld [vmem:[%s2 + $0x2c] sm:$0xf]
  %v2336 = vld [vmem:[%s2 + $0x30] sm:$0xf]
  %v2337 = vld [vmem:[%s2 + $0x34] sm:$0xf]
  %v2338 = vld [vmem:[%s2 + $0x38] sm:$0xf]
  %v2339 = vld [vmem:[%s2 + $0x3c] sm:$0xf]
  %v2340 = vld [vmem:[%s2 + $0x40] sm:$0xf]
  %v2341 = vld [vmem:[%s2 + $0x44] sm:$0xf]
  %v2342 = vld [vmem:[%s2 + $0x48] sm:$0xf]
  %v2343 = vld [vmem:[%s2 + $0x4c] sm:$0xf]
  %v2344 = vld [vmem:[%s2 + $0x50] sm:$0xf]
  %v2345 = vld [vmem:[%s2 + $0x54] sm:$0xf]
  %v2346 = vld [vmem:[%s2 + $0x58] sm:$0xf]
  %v2347 = vld [vmem:[%s2 + $0x5c] sm:$0xf]
  %v2348 = vld [vmem:[%s2 + $0x60] sm:$0xf]
  %v2349 = vld [vmem:[%s2 + $0x64] sm:$0xf]
  %v2350 = vld [vmem:[%s2 + $0x68] sm:$0xf]
  %v2351 = vld [vmem:[%s2 + $0x6c] sm:$0xf]
  %v2352 = vld [vmem:[%s2 + $0x70] sm:$0xf]
  %v2353 = vld [vmem:[%s2 + $0x74] sm:$0xf]
  %v2354 = vld [vmem:[%s2 + $0x78] sm:$0xf]
  %v2355 = vld [vmem:[%s2 + $0x7c] sm:$0xf]
  %v2356 = vld [vmem:[%s2 + $0x80] sm:$0xf]
  %v2357 = vld [vmem:[%s2 + $0x84] sm:$0xf]
  %v2358 = vld [vmem:[%s2 + $0x88] sm:$0xf]
  %v2359 = vld [vmem:[%s2 + $0x8c] sm:$0xf]
  %v2360 = vld [vmem:[%s2 + $0x90] sm:$0xf]
  %v2361 = vld [vmem:[%s2 + $0x94] sm:$0xf]
  %v2362 = vld [vmem:[%s2 + $0x98] sm:$0xf]
  %v2363 = vld [vmem:[%s2 + $0x9c] sm:$0xf]
  %v2364 = vld [vmem:[%s2 + $0xa0] sm:$0xf]
  %v2365 = vld [vmem:[%s2 + $0xa4] sm:$0xf]
  %v2366 = vld [vmem:[%s2 + $0xa8] sm:$0xf]
  %v2367 = vld [vmem:[%s2 + $0xac] sm:$0xf]
  %v2368 = vld [vmem:[%s2 + $0xb0] sm:$0xf]
  %v2369 = vld [vmem:[%s2 + $0xb4] sm:$0xf]
  %v2370 = vld [vmem:[%s2 + $0xb8] sm:$0xf]
  %v2371 = vld [vmem:[%s2 + $0xbc] sm:$0xf]
  %v2372 = vld [vmem:[%s2 + $0xc0] sm:$0xf]
  %v2373 = vld [vmem:[%s2 + $0xc4] sm:$0xf]
  %v2374 = vld [vmem:[%s2 + $0xc8] sm:$0xf]
  %v2375 = vld [vmem:[%s2 + $0xcc] sm:$0xf]
  %v2376 = vld [vmem:[%s2 + $0xd0] sm:$0xf]
  %v2377 = vld [vmem:[%s2 + $0xd4] sm:$0xf]
  %v2378 = vld [vmem:[%s2 + $0xd8] sm:$0xf]
  %v2379 = vld [vmem:[%s2 + $0xdc] sm:$0xf]
  %v2380 = vld [vmem:[%s2 + $0xe0] sm:$0xf]
  %v2381 = vld [vmem:[%s2 + $0xe4] sm:$0xf]
  %v2382 = vld [vmem:[%s2 + $0xe8] sm:$0xf]
  %v2383 = vld [vmem:[%s2 + $0xec] sm:$0xf]
  %v2384 = vld [vmem:[%s2 + $0xf0] sm:$0xf]
  %v2385 = vld [vmem:[%s2 + $0xf4] sm:$0xf]
  %v2386 = vld [vmem:[%s2 + $0xf8] sm:$0xf]
  %v2387 = vld [vmem:[%s2 + $0xfc] sm:$0xf]
  %v2388 = vld [vmem:[%s2 + $0x100] sm:$0xf]
  %v2389 = vld [vmem:[%s2 + $0x104] sm:$0xf]
  %v2390 = vld [vmem:[%s2 + $0x108] sm:$0xf]
  %v2391 = vld [vmem:[%s2 + $0x10c] sm:$0xf]
  %v2392 = vld [vmem:[%s2 + $0x110] sm:$0xf]
  %v2393 = vld [vmem:[%s2 + $0x114] sm:$0xf]
  %v2394 = vld [vmem:[%s2 + $0x118] sm:$0xf]
  %v2395 = vld [vmem:[%s2 + $0x11c] sm:$0xf]
  %v2396 = vld [vmem:[%s2 + $0x120] sm:$0x1]
  %v2397 = vunpack.c.l.bf16 %v2396
  %v2398 = vpack.c.bf16 %v2313, %v2312
  %v2399 = vpack.c.bf16 %v2317, %v2316
  %v2400 = vpack.c.bf16 %v2321, %v2320
  %v2401 = vpack.c.bf16 %v2303, %v2301
  %v2402 = vpack.c.bf16 %v2315, %v2314
  %v2403 = vpack.c.bf16 %v2319, %v2318
  %v2404 = vpack.c.bf16 %v2323, %v2322
  %v2405 = vpack.c.bf16 %v2307, %v2305
  %v2406 = vlaneseq
  %v2407 = vshrl.u32 %v2406, 7
  %v2408 = vsub.s32 0, %v2407
  %v2409 = vrot.slane %v2397, %v2408
  %v2482 = vunpack.c.l.b16 %v2324
  %v2483 = vunpack.c.l.b16 %v2325
  %v2484 = vunpack.c.l.b16 %v2326
  %v2485 = vunpack.c.l.b16 %v2327
  %v2486 = vunpack.c.l.b16 %v2328
  %v2487 = vunpack.c.l.b16 %v2329
  %v2488 = vunpack.c.l.b16 %v2330
  %v2489 = vunpack.c.l.b16 %v2331
  %v2490 = vunpack.c.l.b16 %v2332
  %v2491 = vunpack.c.l.b16 %v2333
  %v2492 = vunpack.c.l.b16 %v2334
  %v2493 = vunpack.c.l.b16 %v2335
  %v2494 = vunpack.c.l.b16 %v2336
  %v2495 = vunpack.c.l.b16 %v2337
  %v2496 = vunpack.c.l.b16 %v2338
  %v2497 = vunpack.c.l.b16 %v2339
  %v2498 = vunpack.c.l.b16 %v2340
  %v2499 = vunpack.c.l.b16 %v2341
  %v2500 = vunpack.c.l.b16 %v2342
  %v2501 = vunpack.c.l.b16 %v2343
  %v2502 = vunpack.c.l.b16 %v2344
  %v2503 = vunpack.c.l.b16 %v2345
  %v2504 = vunpack.c.l.b16 %v2346
  %v2505 = vunpack.c.l.b16 %v2347
  %v2506 = vunpack.c.l.b16 %v2348
  %v2507 = vunpack.c.l.b16 %v2349
  %v2508 = vunpack.c.l.b16 %v2350
  %v2509 = vunpack.c.l.b16 %v2351
  %v2510 = vunpack.c.l.b16 %v2352
  %v2511 = vunpack.c.l.b16 %v2353
  %v2512 = vunpack.c.l.b16 %v2354
  %v2513 = vunpack.c.l.b16 %v2355
  %v2514 = vunpack.c.l.b16 %v2356
  %v2515 = vunpack.c.l.b16 %v2357
  %v2516 = vunpack.c.l.b16 %v2358
  %v2517 = vunpack.c.l.b16 %v2359
  %v2518 = vunpack.c.l.b16 %v2360
  %v2519 = vunpack.c.l.b16 %v2361
  %v2520 = vunpack.c.l.b16 %v2362
  %v2521 = vunpack.c.l.b16 %v2363
  %v2522 = vunpack.c.l.b16 %v2364
  %v2523 = vunpack.c.l.b16 %v2365
  %v2524 = vunpack.c.l.b16 %v2366
  %v2525 = vunpack.c.l.b16 %v2367
  %v2526 = vunpack.c.l.b16 %v2368
  %v2527 = vunpack.c.l.b16 %v2369
  %v2528 = vunpack.c.l.b16 %v2370
  %v2529 = vunpack.c.l.b16 %v2371
  %v2530 = vunpack.c.l.b16 %v2372
  %v2531 = vunpack.c.l.b16 %v2373
  %v2532 = vunpack.c.l.b16 %v2374
  %v2533 = vunpack.c.l.b16 %v2375
  %v2534 = vunpack.c.l.b16 %v2376
  %v2535 = vunpack.c.l.b16 %v2377
  %v2536 = vunpack.c.l.b16 %v2378
  %v2537 = vunpack.c.l.b16 %v2379
  %v2538 = vunpack.c.l.b16 %v2380
  %v2539 = vunpack.c.l.b16 %v2381
  %v2540 = vunpack.c.l.b16 %v2382
  %v2541 = vunpack.c.l.b16 %v2383
  %v2542 = vunpack.c.l.b16 %v2384
  %v2543 = vunpack.c.l.b16 %v2385
  %v2544 = vunpack.c.l.b16 %v2386
  %v2545 = vunpack.c.l.b16 %v2387
  %v2546 = vunpack.c.l.b16 %v2388
  %v2547 = vunpack.c.l.b16 %v2389
  %v2548 = vunpack.c.l.b16 %v2390
  %v2549 = vunpack.c.l.b16 %v2391
  %v2550 = vunpack.c.l.b16 %v2392
  %v2551 = vunpack.c.l.b16 %v2393
  %v2552 = vunpack.c.l.b16 %v2394
  %v2553 = vunpack.c.l.b16 %v2395
  %v2554 = vpack.c.b16 %v2483, %v2482
  %v2555 = vpack.c.b16 %v2485, %v2484
  %v2556 = vpack.c.b16 %v2487, %v2486
  %v2557 = vpack.c.b16 %v2489, %v2488
  %v2558 = vpack.c.b16 %v2491, %v2490
  %v2559 = vpack.c.b16 %v2493, %v2492
  %v2560 = vpack.c.b16 %v2495, %v2494
  %v2561 = vpack.c.b16 %v2497, %v2496
  %v2562 = vpack.c.b16 %v2499, %v2498
  %v2563 = vpack.c.b16 %v2501, %v2500
  %v2564 = vpack.c.b16 %v2503, %v2502
  %v2565 = vpack.c.b16 %v2505, %v2504
  %v2566 = vpack.c.b16 %v2507, %v2506
  %v2567 = vpack.c.b16 %v2509, %v2508
  %v2568 = vpack.c.b16 %v2511, %v2510
  %v2569 = vpack.c.b16 %v2513, %v2512
  %v2570 = vpack.c.b16 %v2515, %v2514
  %v2571 = vpack.c.b16 %v2517, %v2516
  %v2572 = vpack.c.b16 %v2519, %v2518
  %v2573 = vpack.c.b16 %v2521, %v2520
  %v2574 = vpack.c.b16 %v2523, %v2522
  %v2575 = vpack.c.b16 %v2525, %v2524
  %v2576 = vpack.c.b16 %v2527, %v2526
  %v2577 = vpack.c.b16 %v2529, %v2528
  %v2578 = vpack.c.b16 %v2531, %v2530
  %v2579 = vpack.c.b16 %v2533, %v2532
  %v2580 = vpack.c.b16 %v2535, %v2534
  %v2581 = vpack.c.b16 %v2537, %v2536
  %v2582 = vpack.c.b16 %v2539, %v2538
  %v2583 = vpack.c.b16 %v2541, %v2540
  %v2584 = vpack.c.b16 %v2543, %v2542
  %v2585 = vpack.c.b16 %v2545, %v2544
  %v2586 = vpack.c.b16 %v2547, %v2546
  %v2587 = vpack.c.b16 %v2549, %v2548
  %v2588 = vpack.c.b16 %v2551, %v2550
  %v2589 = vpack.c.b16 %v2553, %v2552
  %v2627 = vsel %vm168, %v2401, 0
  %v2630 = vsel %vm168, %v2405, 0
  %2632 = vmatprep.subr.bf16.mxu0 0
  %2633 = vmatpush1.bf16.msra.mxu0 %v2561
  %2634 = vmatprep.subr.bf16.mxu0 0
  %2635 = vmatpush1.bf16.msra.mxu0 %v2560
  %2636 = vmatprep.subr.bf16.mxu0 0
  %2637 = vmatpush1.bf16.msra.mxu0 %v2559
  %2638 = vmatprep.subr.bf16.mxu0 0
  %2639 = vmatpush1.bf16.msra.mxu0 %v2558
  %2640 = vmatprep.subr.bf16.mxu0 0
  %2641 = vmatpush1.bf16.msra.mxu0 %v2557
  %2642 = vmatprep.subr.bf16.mxu0 0
  %2643 = vmatpush1.bf16.msra.mxu0 %v2556
  %2644 = vmatprep.subr.bf16.mxu0 0
  %2645 = vmatpush1.bf16.msra.mxu0 %v2555
  %2646 = vmatprep.subr.bf16.mxu0 0
  %2647 = vmatpush1.bf16.msra.mxu0 %v2554
  %2648 = vmatprep.subr.bf16.mxu0 0
  %2649 = vmatpush2.bf16.msra.mxu0 %v2569
  %2650 = vmatprep.subr.bf16.mxu0 0
  %2651 = vmatpush2.bf16.msra.mxu0 %v2568
  %2652 = vmatprep.subr.bf16.mxu0 0
  %2653 = vmatpush2.bf16.msra.mxu0 %v2567
  %2654 = vmatprep.subr.bf16.mxu0 0
  %2655 = vmatpush2.bf16.msra.mxu0 %v2566
  %2656 = vmatprep.subr.bf16.mxu0 0
  %2657 = vmatpush2.bf16.msra.mxu0 %v2565
  %2658 = vmatprep.subr.bf16.mxu0 0
  %2659 = vmatpush2.bf16.msra.mxu0 %v2564
  %2660 = vmatprep.subr.bf16.mxu0 0
  %2661 = vmatpush2.bf16.msra.mxu0 %v2563
  %2662 = vmatprep.subr.bf16.mxu0 0
  %2663 = vmatpush2.bf16.msra.mxu0 %v2562
  %2664 = vmatprep.mubr.bf16.mxu0 %v2399
  %2665 = vmatmul.mubr.bf16.gmra.mxu0 %v2398
  %v2666 = vpop.f32.mrf.mxu0
  %v2667 = vadd.f32 %v2409, %v2666
  %v2668 = vpop.f32.mrf.mxu0
  %v2669 = vpop.f32.mrf.mxu0
  %v2670 = vadd.f32 %v2409, %v2669
  %v2671 = vpop.f32.mrf.mxu0
  %2672 = vmatprep.mubr.bf16.mxu0 %v2403
  %2673 = vmatmul.mubr.bf16.gmra.mxu0 %v2402
  %v2674 = vpop.f32.mrf.mxu0
  %v2675 = vadd.f32 %v2409, %v2674
  %v2676 = vpop.f32.mrf.mxu0
  %v2677 = vpop.f32.mrf.mxu0
  %v2678 = vadd.f32 %v2409, %v2677
  %v2679 = vpop.f32.mrf.mxu0
  %2680 = vdwg.mxu0
  %2681 = vmatprep.subr.bf16.mxu0 0
  %2682 = vmatpush1.bf16.msra.mxu0 %v2577
  %2683 = vmatprep.subr.bf16.mxu0 0
  %2684 = vmatpush1.bf16.msra.mxu0 %v2576
  %2685 = vmatprep.subr.bf16.mxu0 0
  %2686 = vmatpush1.bf16.msra.mxu0 %v2575
  %2687 = vmatprep.subr.bf16.mxu0 0
  %2688 = vmatpush1.bf16.msra.mxu0 %v2574
  %2689 = vmatprep.subr.bf16.mxu0 0
  %2690 = vmatpush1.bf16.msra.mxu0 %v2573
  %2691 = vmatprep.subr.bf16.mxu0 0
  %2692 = vmatpush1.bf16.msra.mxu0 %v2572
  %2693 = vmatprep.subr.bf16.mxu0 0
  %2694 = vmatpush1.bf16.msra.mxu0 %v2571
  %2695 = vmatprep.subr.bf16.mxu0 0
  %2696 = vmatpush1.bf16.msra.mxu0 %v2570
  %2697 = vmatprep.subr.bf16.mxu0 0
  %2698 = vmatpush2.bf16.msra.mxu0 %v2585
  %2699 = vmatprep.subr.bf16.mxu0 0
  %2700 = vmatpush2.bf16.msra.mxu0 %v2584
  %2701 = vmatprep.subr.bf16.mxu0 0
  %2702 = vmatpush2.bf16.msra.mxu0 %v2583
  %2703 = vmatprep.subr.bf16.mxu0 0
  %2704 = vmatpush2.bf16.msra.mxu0 %v2582
  %2705 = vmatprep.subr.bf16.mxu0 0
  %2706 = vmatpush2.bf16.msra.mxu0 %v2581
  %2707 = vmatprep.subr.bf16.mxu0 0
  %2708 = vmatpush2.bf16.msra.mxu0 %v2580
  %2709 = vmatprep.subr.bf16.mxu0 0
  %2710 = vmatpush2.bf16.msra.mxu0 %v2579
  %2711 = vmatprep.subr.bf16.mxu0 0
  %2712 = vmatpush2.bf16.msra.mxu0 %v2578
  %2713 = vmatprep.mubr.bf16.mxu0 %v2400
  %2714 = vmatmul.mubr.bf16.gmra.mxu0 %v557
  %v2715 = vpop.f32.mrf.mxu0
  %v2716 = vadd.f32 %v2667, %v2715
  %v2717 = vpop.f32.mrf.mxu0
  %v2718 = vpop.f32.mrf.mxu0
  %v2719 = vadd.f32 %v2670, %v2718
  %v2720 = vpop.f32.mrf.mxu0
  %2721 = vmatprep.mubr.bf16.mxu0 %v2404
  %2722 = vmatmul.mubr.bf16.gmra.mxu0 %v558
  %v2723 = vpop.f32.mrf.mxu0
  %v2724 = vadd.f32 %v2675, %v2723
  %v2725 = vpop.f32.mrf.mxu0
  %v2726 = vpop.f32.mrf.mxu0
  %v2727 = vadd.f32 %v2678, %v2726
  %v2728 = vpop.f32.mrf.mxu0
  %2729 = vdwg.mxu0
  %2730 = vmatprep.subr.bf16.mxu0 0
  %2731 = vmatpush1.bf16.msra.mxu0 0
  %2732 = vmatprep.subr.bf16.mxu0 0
  %2733 = vmatpush1.bf16.msra.mxu0 0
  %2734 = vmatprep.subr.bf16.mxu0 0
  %2735 = vmatpush1.bf16.msra.mxu0 0
  %2736 = vmatprep.subr.bf16.mxu0 0
  %2737 = vmatpush1.bf16.msra.mxu0 0
  %2738 = vmatprep.subr.bf16.mxu0 0
  %2739 = vmatpush1.bf16.msra.mxu0 %v2589
  %2740 = vmatprep.subr.bf16.mxu0 0
  %2741 = vmatpush1.bf16.msra.mxu0 %v2588
  %2742 = vmatprep.subr.bf16.mxu0 0
  %2743 = vmatpush1.bf16.msra.mxu0 %v2587
  %2744 = vmatprep.subr.bf16.mxu0 0
  %2745 = vmatpush1.bf16.msra.mxu0 %v2586
  %2746 = vmatprep.subr.bf16.mxu0 0
  %2747 = vmatpush2.bf16.msra.mxu0 0
  %2748 = vmatprep.subr.bf16.mxu0 0
  %2749 = vmatpush2.bf16.msra.mxu0 0
  %2750 = vmatprep.subr.bf16.mxu0 0
  %2751 = vmatpush2.bf16.msra.mxu0 0
  %2752 = vmatprep.subr.bf16.mxu0 0
  %2753 = vmatpush2.bf16.msra.mxu0 0
  %2754 = vmatprep.subr.bf16.mxu0 0
  %2755 = vmatpush2.bf16.msra.mxu0 0
  %2756 = vmatprep.subr.bf16.mxu0 0
  %2757 = vmatpush2.bf16.msra.mxu0 0
  %2758 = vmatprep.subr.bf16.mxu0 0
  %2759 = vmatpush2.bf16.msra.mxu0 0
  %2760 = vmatprep.subr.bf16.mxu0 0
  %2761 = vmatpush2.bf16.msra.mxu0 0
  %2762 = vmatprep.mubr.bf16.mxu0 0
  %2763 = vmatmul.mubr.bf16.gmra.mxu0 %v2627
  %v2764 = vpop.f32.mrf.mxu0
  %v2765 = vadd.f32 %v2716, %v2764
  %v2766 = vpop.f32.mrf.mxu0
  %v2767 = vpop.f32.mrf.mxu0
  %v2768 = vadd.f32 %v2719, %v2767
  %v2769 = vpop.f32.mrf.mxu0
  %2770 = vmatprep.mubr.bf16.mxu0 0
  %2771 = vmatmul.mubr.bf16.gmra.mxu0 %v2630
  %v2772 = vpop.f32.mrf.mxu0
  %v2773 = vadd.f32 %v2724, %v2772
  %v2774 = vpop.f32.mrf.mxu0
  %v2775 = vpop.f32.mrf.mxu0
  %v2776 = vadd.f32 %v2727, %v2775
  %v2777 = vpop.f32.mrf.mxu0
  %2778 = vdwg.mxu0
  %v2779 = vmax.f32 %v2765, 0.0
  %v2780 = vmax.f32 %v2768, 0.0
  %v2781 = vmax.f32 %v2773, 0.0
  %v2782 = vmax.f32 %v2776, 0.0
  %v2783 = vadd.f32 %v2779, %v334
  %v2784 = vadd.f32 %v2780, %v335
  %v2785 = vadd.f32 %v2781, %v336
  %v2786 = vadd.f32 %v2782, %v337
  %2787 = vst.msk [vmem:[%s17] sm:$0xff] %vm168, %v2783
  %2788 = vst.msk [vmem:[%s17 + $0x8] sm:$0xff] %vm168, %v2784
  %2789 = vst.msk [vmem:[%s17 + $0x10] sm:$0xff] %vm168, %v2785
  %2790 = vst.msk [vmem:[%s17 + $0x18] sm:$0xff] %vm168, %v2786
  // Predicated region
  $region70: #{rsu5_forward.1} parent=0 // pred_check
    _
  $region71: #{rsu5_forward.1} parent=0 // pred_check_branch
    %2792 = sbr.rel (0) target = $region73
  $region72: #{rsu5_forward.1} parent=0 // pred_region
    _
  $region73: #{rsu5_forward.1} parent=0 // pred_fallthru
    _
  // Predicated region
  $region74: #{rsu5_forward.1} parent=0 // pred_check
    _
  $region75: #{rsu5_forward.1} parent=0 // pred_check_branch
    %2794 = sbr.rel (0) target = $region77
  $region76: #{rsu5_forward.1} parent=0 // pred_region
    _
  $region77: #{rsu5_forward.1} parent=0 // pred_fallthru
    _

</llo_original>
